<compile_context>
chip_gen: v7x
topology: tpu7x:2x2x1
jax: 0.10.0
libtpu: 0.0.40
codegen_flags: <defaults>
</compile_context>

<pallas_src>
import jax
import jax.numpy as jnp
from jax import lax
from jax.experimental import pallas as pl
from jax.experimental.pallas import tpu as pltpu


# ----------------------------- hyperparameters ------------------------------
B = 2                      # batch
ENC_VOCAB = 12
DEC_VOCAB = 12
EMB = 32                   # encoder_emb_size
HID = 32                   # encoder_hidden_size == decoder_hidden_size
SRC_LEN = 8                # source_length
ENC_LEN = 8                # encoder_length (== source_length)
DEC_LEN = 8                # decoder_length
MLP_LAYERS = 2
MLP_HID = 32

# packed-layout constants
VPAD = 16                  # vocab rows padded to a sublane multiple (one-hot K)
LANES = 128                # lane width of the packed slabs (== 4*HID)
NEG = -1e30                # bias value for padded vocab columns

# --- packed weight-slab row offsets (every section start is a multiple of 8) ---
R_ENC_T   = 0                      # (VPAD, 4H)  enc_emb @ W_ih + b  (rows >=12 zero)
R_DEC_T   = R_ENC_T + VPAD         # 16  (VPAD, 4H)
R_ENC_WHH = R_DEC_T + VPAD         # 32  (HID, 4H)
R_DEC_WHH = R_ENC_WHH + HID        # 64  (HID, 4H)
R_MLP_W0  = R_DEC_WHH + HID        # 96  (HID, 128)    cols 0:MLP_HID valid
R_MLP_W1  = R_MLP_W0 + HID         # 128 (MLP_HID, 128)
R_WO      = R_MLP_W1 + MLP_HID     # 160 (2H, 128)     cols 0:HID valid
R_OUT_W   = R_WO + 2 * HID         # 224 (HID, 128)    cols 0:DEC_VOCAB valid
R_BIAS    = R_OUT_W + HID          # 256 [mlp_b0 | mlp_b1 | att_bo | reg_w]
R_OUT_B   = R_BIAS + 1             # 257 out_b, cols >= DEC_VOCAB = NEG
R_REG_B   = R_OUT_B + 1            # 258 reg_b at lane 0
N_W_ROWS  = 264                    # padded to a multiple of 8

# --- packed output-slab rows ---
OUT_LOGP  = 0                      # rows [0, B*DEC_LEN): log-probs (padded vocab)
OUT_PV    = B * DEC_LEN            # rows [16, 18): predict_value at lane 0
OUT_SYM   = OUT_PV + B             # rows [18, 20): argmax symbols, lanes 0..Ld-1
OUT_ROWS  = 24                     # padded to a multiple of 8

_VMEM_SPEC = pl.BlockSpec(memory_space=pltpu.MemorySpace.VMEM)


# ------------------------------ fused kernel --------------------------------
def _nao_fused_kernel(ids_ref, w_ref, out_ref):
    f32 = jnp.float32
    H, Le, Ld, Bx = HID, ENC_LEN, DEC_LEN, B
    eps2 = 1e-24  # F.normalize eps=1e-12, applied to the squared norm

    # ---- embeddings folded into the LSTM input projections --------------------
    # gates_x = onehot @ (emb_table @ W_ih + b); padded vocab rows are zero and
    # never selected (ids < 12), so the result is exact.
    ids = ids_ref[...]                                               # (32, 1) int32
    iota = lax.broadcasted_iota(jnp.int32, (ids.shape[0], VPAD), 1)
    onehot = (ids == iota).astype(f32)                               # (32, VPAD)
    egx = jnp.dot(onehot[0:Le * Bx, :],
                  w_ref[R_ENC_T:R_ENC_T + VPAD, :],
                  preferred_element_type=f32)                        # (Le*B, 4H)
    dgx = jnp.dot(onehot[Le * Bx:(Le + Ld) * Bx, :],
                  w_ref[R_DEC_T:R_DEC_T + VPAD, :],
                  preferred_element_type=f32)                        # (Ld*B, 4H)

    def lstm_steps(gates_x, h0, c0, whh, L):
        # Statically unrolled.  Per step: one MXU matmul (accumulate-into form),
        # ONE full-width sigmoid over the whole (B, 4H) gate vreg and two tanh
        # (3 EUP pushes/step).  States stay in vregs — no scratch stores.
        hs = []
        h, c = h0, c0
        for t in range(L):
            g = jnp.dot(h, whh, preferred_element_type=f32) \
                + gates_x[t * Bx:(t + 1) * Bx, :]                    # (B, 4H)
            sg = jax.nn.sigmoid(g)
            i, f, o = sg[:, 0:H], sg[:, H:2 * H], sg[:, 3 * H:4 * H]
            c = f * c + i * jnp.tanh(g[:, 2 * H:3 * H])
            h = o * jnp.tanh(c)
            hs.append(h)
        return hs

    # ---------------- Encoder ----------------
    zeros = jnp.zeros((Bx, H), f32)
    enc_whh = w_ref[R_ENC_WHH:R_ENC_WHH + H, :]                      # (H, 4H)
    enc_hs = lstm_steps(egx, zeros, zeros, enc_whh, Le)

    enc_norm = []                      # per-batch (Le, H), L2-normalized along H
    arch_rows = []
    for b in range(Bx):
        seq = jnp.concatenate([h[b:b + 1, :] for h in enc_hs], axis=0)   # (Le, H)
        ss = jnp.sum(seq * seq, axis=-1, keepdims=True)
        nrm = seq * lax.rsqrt(jnp.maximum(ss, eps2))                     # F.normalize
        enc_norm.append(nrm)
        mrow = jnp.mean(nrm, axis=0, keepdims=True)                      # (1, H)
        ms = jnp.sum(mrow * mrow, axis=-1, keepdims=True)
        arch_rows.append(mrow * lax.rsqrt(jnp.maximum(ms, eps2)))
    arch_emb = jnp.concatenate(arch_rows, axis=0)                        # (B, H)

    # bias rows (one 3-row read, sliced in vregs)
    brows = w_ref[R_BIAS:R_BIAS + 3, :]                                  # (3, 128)
    mlp_b0 = brows[0:1, 0:MLP_HID]
    mlp_b1 = brows[0:1, MLP_HID:2 * MLP_HID]
    att_bo = brows[0:1, 2 * MLP_HID:2 * MLP_HID + H]
    reg_w = brows[0:1, 2 * MLP_HID + H:2 * MLP_HID + H + MLP_HID]
    out_b = brows[1:2, :]                                                # (1, 128)
    reg_b = brows[2:3, 0:1]                                              # (1, 1)

    # MLP head + regressor + sigmoid -> predict_value
    h1 = jnp.maximum(
        jnp.dot(arch_emb, w_ref[R_MLP_W0:R_MLP_W0 + H, :],
                preferred_element_type=f32)[:, 0:MLP_HID] + mlp_b0, 0.0)
    h2 = jnp.maximum(
        jnp.dot(h1, w_ref[R_MLP_W1:R_MLP_W1 + MLP_HID, :],
                preferred_element_type=f32)[:, 0:MLP_HID] + mlp_b1, 0.0)
    pv = jax.nn.sigmoid(jnp.sum(h2 * reg_w, axis=-1, keepdims=True) + reg_b)  # (B,1)

    # -------- Decoder (teacher forcing; hidden = (arch_emb, arch_emb)) --------
    dec_whh = w_ref[R_DEC_WHH:R_DEC_WHH + H, :]
    dec_hs = lstm_steps(dgx, arch_emb, arch_emb, dec_whh, Ld)

    # attention as explicit per-batch 2-D MXU dots (B is tiny and static)
    mix_rows, q_rows = [], []
    for b in range(Bx):
        q_b = jnp.concatenate([h[b:b + 1, :] for h in dec_hs], axis=0)   # (Ld, H)
        k_b = enc_norm[b]                                                # (Le, H)
        s = lax.dot_general(q_b, k_b, (((1,), (1,)), ((), ())),
                            preferred_element_type=f32)                  # (Ld, Le)
        s = s - jnp.max(s, axis=-1, keepdims=True)
        p = jnp.exp(s)
        p = p * pl.reciprocal(jnp.sum(p, axis=-1, keepdims=True), approx=True)
        mix_rows.append(jnp.dot(p, k_b, preferred_element_type=f32))     # (Ld, H)
        q_rows.append(q_b)
    mix2 = jnp.concatenate(mix_rows, axis=0)                             # (B*Ld, H)
    q2 = jnp.concatenate(q_rows, axis=0)                                 # (B*Ld, H)

    # linear_out([mix, rnn_out]) as ONE matmul on the lane-concatenated input
    att_in = jnp.concatenate([mix2, q2], axis=-1)                        # (B*Ld, 2H)
    comb = jnp.tanh(
        jnp.dot(att_in, w_ref[R_WO:R_WO + 2 * H, :],
                preferred_element_type=f32)[:, 0:H] + att_bo)            # (B*Ld, H)

    # vocab projection on 128 padded lanes (padded cols: weight 0, bias -1e30)
    logits = jnp.dot(comb, w_ref[R_OUT_W:R_OUT_W + H, :],
                     preferred_element_type=f32) + out_b                 # (B*Ld, 128)
    lsh = logits - jnp.max(logits, axis=-1, keepdims=True)
    logp = lsh - jnp.log(jnp.sum(jnp.exp(lsh), axis=-1, keepdims=True))  # (B*Ld, 128)
    # TODO(synk): full-vocab argmax (reference constrains range per decode step).
    sym = jnp.argmax(logp.reshape(Bx, Ld, LANES), axis=-1).astype(f32)   # (B, Ld)

    # -------- single lane-dense output slab: [logp | pv | sym | pad] --------
    pv_rows = jnp.broadcast_to(pv, (Bx, LANES))                          # (B, 128)
    sym_rows = jnp.concatenate(
        [sym, jnp.zeros((Bx, LANES - Ld), f32)], axis=-1)                # (B, 128)
    pad_rows = jnp.zeros((OUT_ROWS - OUT_SYM - Bx, LANES), f32)
    out_ref[...] = jnp.concatenate([logp, pv_rows, sym_rows, pad_rows], axis=0)


def _cost_estimate():
    lstm_flops = 2 * (SRC_LEN + DEC_LEN) * B * (VPAD + HID) * 4 * HID
    head_flops = (2 * B * (HID * MLP_HID + MLP_HID * MLP_HID + MLP_HID)
                  + 2 * B * DEC_LEN * (2 * ENC_LEN * HID + 2 * HID * HID
                                       + HID * LANES))
    transcendentals = ((SRC_LEN + DEC_LEN) * B * 6 * HID
                       + B * DEC_LEN * (ENC_LEN + 2 * LANES) + 4 * B)
    bytes_accessed = 4 * (N_W_ROWS * LANES + (SRC_LEN + DEC_LEN) * B
                          + OUT_ROWS * LANES)
    return pl.CostEstimate(flops=lstm_flops + head_flops,
                           transcendentals=transcendentals,
                           bytes_accessed=bytes_accessed)


# ------------------------------- parameters ---------------------------------
def init_params(key):
    ks = list(jax.random.split(key, 20))
    r = lambda k, s, sc=0.1: (jax.random.normal(k, s, jnp.float32) * sc)
    return {
        # encoder
        'enc_emb':  r(ks[0], (ENC_VOCAB, EMB)),
        'enc_wih':  r(ks[1], (EMB, 4 * HID)),          # torch weight_ih^T
        'enc_whh':  r(ks[2], (HID, 4 * HID)),          # torch weight_hh^T
        'enc_b':    r(ks[3], (1, 4 * HID)),            # b_ih + b_hh
        'mlp_w0':   r(ks[4], (HID, MLP_HID)),
        'mlp_b0':   r(ks[5], (1, MLP_HID)),
        'mlp_w1':   r(ks[6], (MLP_HID, MLP_HID)),
        'mlp_b1':   r(ks[7], (1, MLP_HID)),
        'reg_w':    r(ks[8], (MLP_HID, 1)),
        'reg_b':    r(ks[9], (1, 1)),
        # decoder
        'dec_emb':  r(ks[10], (DEC_VOCAB, HID)),
        'dec_wih':  r(ks[11], (HID, 4 * HID)),
        'dec_whh':  r(ks[12], (HID, 4 * HID)),
        'dec_b':    r(ks[13], (1, 4 * HID)),
        'att_wo_mix': r(ks[14], (HID, HID)),           # linear_out weight, mix half
        'att_wo_q':   r(ks[15], (HID, HID)),           # linear_out weight, rnn half
        'att_bo':     r(ks[16], (1, HID)),
        'out_w':      r(ks[17], (HID, DEC_VOCAB)),
        'out_b':      r(ks[18], (1, DEC_VOCAB)),
    }


def pack_params(p):
    """Pack all weights/biases into one lane-padded (N_W_ROWS, 128) f32 slab."""
    f32 = jnp.float32

    def pad2(x, rows, cols=LANES):
        x = x.astype(f32)
        return jnp.pad(x, ((0, rows - x.shape[0]), (0, cols - x.shape[1])))

    # fold embeddings into the LSTM input projections: T = emb @ W_ih + b
    enc_t = p['enc_emb'] @ p['enc_wih'] + p['enc_b']                  # (V, 4H)
    dec_t = p['dec_emb'] @ p['dec_wih'] + p['dec_b']                  # (V, 4H)
    wo_cat = jnp.concatenate([p['att_wo_mix'], p['att_wo_q']], axis=0)  # (2H, H)
    bias_row = jnp.concatenate(
        [p['mlp_b0'], p['mlp_b1'], p['att_bo'],
         p['reg_w'].reshape(1, MLP_HID)], axis=1)                     # (1, 128)
    out_b_row = jnp.concatenate(
        [p['out_b'], jnp.full((1, LANES - DEC_VOCAB), NEG, f32)], axis=1)

    sections = [
        pad2(enc_t, VPAD), pad2(dec_t, VPAD),
        pad2(p['enc_whh'], HID), pad2(p['dec_whh'], HID),
        pad2(p['mlp_w0'], HID), pad2(p['mlp_w1'], MLP_HID),
        pad2(wo_cat, 2 * HID), pad2(p['out_w'], HID),
        bias_row, out_b_row, pad2(p['reg_b'], 1),
    ]
    slab = jnp.concatenate(sections, axis=0)                          # (259, 128)
    return jnp.pad(slab, ((0, N_W_ROWS - slab.shape[0]), (0, 0)))


# ------------------------------- NAO forward --------------------------------
@jax.jit
def nao_forward(w_packed, input_variable, target_variable):
    # Tiny id relayout to time-major-flattened ids; everything else is in-kernel.
    enc_ids = jnp.transpose(input_variable).reshape(SRC_LEN * B, 1)
    dec_ids = jnp.transpose(target_variable).reshape(DEC_LEN * B, 1)
    ids = jnp.concatenate([enc_ids, dec_ids], axis=0).astype(jnp.int32)   # (32, 1)

    slab = pl.pallas_call(
        _nao_fused_kernel,
        out_shape=jax.ShapeDtypeStruct((OUT_ROWS, LANES), jnp.float32),
        in_specs=[_VMEM_SPEC, _VMEM_SPEC],
        out_specs=_VMEM_SPEC,
        cost_estimate=_cost_estimate(),
    )(ids, w_packed)

    logp = slab[OUT_LOGP:OUT_LOGP + B * DEC_LEN,
                0:DEC_VOCAB].reshape(B, DEC_LEN, DEC_VOCAB)
    predict_value = slab[OUT_PV:OUT_PV + B, 0:1]
    arch = slab[OUT_SYM:OUT_SYM + B, 0:DEC_LEN].astype(jnp.int32)[..., None]
    return predict_value, logp, arch


# ----------------------------------- main ------------------------------------
if __name__ == "__main__":
    key = jax.random.PRNGKey(0)
    pkey, ikey, tkey = jax.random.split(key, 3)

    params = init_params(pkey)
    w_packed = pack_params(params)

    input_variable = jax.random.randint(ikey, (B, SRC_LEN), 0, ENC_VOCAB, jnp.int32)
    target_variable = jax.random.randint(tkey, (B, DEC_LEN), 0, DEC_VOCAB, jnp.int32)

    predict_value, decoder_outputs, arch = nao_forward(
        w_packed, input_variable, target_variable)
    jax.block_until_ready((predict_value, decoder_outputs, arch))

    assert predict_value.shape == (B, 1)
    assert decoder_outputs.shape == (B, DEC_LEN, DEC_VOCAB)
    assert arch.shape == (B, DEC_LEN, 1)
    assert bool(jnp.all(jnp.isfinite(predict_value)))
    assert bool(jnp.all(jnp.isfinite(decoder_outputs)))
    assert bool(jnp.all((arch >= 0) & (arch < DEC_VOCAB)))
    print("KERNEL_OK")
</pallas_src>

<mosaic_0001>
module attributes {stable_mosaic.version = 11 : i64} {
  func.func @_nao_fused_kernel(%arg0: memref<32x1xi32, #tpu.memory_space<vmem>>, %arg1: memref<264x128xf32, #tpu.memory_space<vmem>>, %arg2: memref<24x128xf32, #tpu.memory_space<vmem>>) attributes {dimension_semantics = [], scalar_prefetch = 0 : i64, scratch_operands = 0 : i64, tpu.core_type = #tpu.core_type<tc>} {
    %c0 = arith.constant 0 : index
    %c0_0 = arith.constant 0 : index
    %0 = vector.load %arg0[%c0, %c0_0] : memref<32x1xi32, #tpu.memory_space<vmem>>, vector<32x1xi32>
    %1 = tpu.iota {dimensions = array<i32: 1>} : vector<32x16xi32>
    %2 = vector.broadcast %0 : vector<32x1xi32> to vector<32x16xi32>
    %3 = arith.cmpi eq, %2, %1 : vector<32x16xi32>
    %4 = arith.extui %3 : vector<32x16xi1> to vector<32x16xi32>
    %5 = arith.sitofp %4 : vector<32x16xi32> to vector<32x16xf32>
    %6 = vector.extract_strided_slice %5 {offsets = [0, 0], sizes = [16, 16], strides = [1, 1]} : vector<32x16xf32> to vector<16x16xf32>
    %c0_1 = arith.constant 0 : index
    %c0_2 = arith.constant 0 : index
    %7 = vector.load %arg1[%c0_1, %c0_2] : memref<264x128xf32, #tpu.memory_space<vmem>>, vector<16x128xf32>
    %cst = arith.constant dense<0.000000e+00> : vector<16x128xf32>
    %8 = tpu.matmul %6, %7, %cst {dimension_numbers = #tpu.dot_dimension_numbers<[1], [0], [0], [1], [0, 0, 1, 1], [], []>} : vector<16x16xf32>, vector<16x128xf32>, vector<16x128xf32> -> vector<16x128xf32>
    %9 = vector.extract_strided_slice %5 {offsets = [16, 0], sizes = [16, 16], strides = [1, 1]} : vector<32x16xf32> to vector<16x16xf32>
    %c16 = arith.constant 16 : index
    %c0_3 = arith.constant 0 : index
    %10 = vector.load %arg1[%c16, %c0_3] : memref<264x128xf32, #tpu.memory_space<vmem>>, vector<16x128xf32>
    %cst_4 = arith.constant dense<0.000000e+00> : vector<16x128xf32>
    %11 = tpu.matmul %9, %10, %cst_4 {dimension_numbers = #tpu.dot_dimension_numbers<[1], [0], [0], [1], [0, 0, 1, 1], [], []>} : vector<16x16xf32>, vector<16x128xf32>, vector<16x128xf32> -> vector<16x128xf32>
    %cst_5 = arith.constant 0.000000e+00 : f32
    %12 = vector.broadcast %cst_5 : f32 to vector<2x32xf32>
    %c32 = arith.constant 32 : index
    %c0_6 = arith.constant 0 : index
    %13 = vector.load %arg1[%c32, %c0_6] : memref<264x128xf32, #tpu.memory_space<vmem>>, vector<32x128xf32>
    %cst_7 = arith.constant dense<0.000000e+00> : vector<2x128xf32>
    %14 = tpu.matmul %12, %13, %cst_7 {dimension_numbers = #tpu.dot_dimension_numbers<[1], [0], [0], [1], [0, 0, 1, 1], [], []>} : vector<2x32xf32>, vector<32x128xf32>, vector<2x128xf32> -> vector<2x128xf32>
    %15 = vector.extract_strided_slice %8 {offsets = [0, 0], sizes = [2, 128], strides = [1, 1]} : vector<16x128xf32> to vector<2x128xf32>
    %16 = arith.addf %14, %15 : vector<2x128xf32>
    %17 = arith.negf %16 : vector<2x128xf32>
    %18 = math.exp %17 : vector<2x128xf32>
    %cst_8 = arith.constant 1.000000e+00 : f32
    %19 = vector.broadcast %cst_8 : f32 to vector<2x128xf32>
    %20 = arith.addf %19, %18 : vector<2x128xf32>
    %21 = arith.divf %19, %20 : vector<2x128xf32>
    %22 = vector.extract_strided_slice %21 {offsets = [0, 0], sizes = [2, 32], strides = [1, 1]} : vector<2x128xf32> to vector<2x32xf32>
    %23 = vector.extract_strided_slice %21 {offsets = [0, 32], sizes = [2, 32], strides = [1, 1]} : vector<2x128xf32> to vector<2x32xf32>
    %24 = vector.extract_strided_slice %21 {offsets = [0, 96], sizes = [2, 32], strides = [1, 1]} : vector<2x128xf32> to vector<2x32xf32>
    %25 = arith.mulf %23, %12 : vector<2x32xf32>
    %26 = vector.extract_strided_slice %16 {offsets = [0, 64], sizes = [2, 32], strides = [1, 1]} : vector<2x128xf32> to vector<2x32xf32>
    %27 = math.tanh %26 : vector<2x32xf32>
    %28 = arith.mulf %22, %27 : vector<2x32xf32>
    %29 = arith.addf %25, %28 : vector<2x32xf32>
    %30 = math.tanh %29 : vector<2x32xf32>
    %31 = arith.mulf %24, %30 : vector<2x32xf32>
    %cst_9 = arith.constant dense<0.000000e+00> : vector<2x128xf32>
    %32 = tpu.matmul %31, %13, %cst_9 {dimension_numbers = #tpu.dot_dimension_numbers<[1], [0], [0], [1], [0, 0, 1, 1], [], []>} : vector<2x32xf32>, vector<32x128xf32>, vector<2x128xf32> -> vector<2x128xf32>
    %33 = vector.extract_strided_slice %8 {offsets = [2, 0], sizes = [2, 128], strides = [1, 1]} : vector<16x128xf32> to vector<2x128xf32>
    %34 = arith.addf %32, %33 : vector<2x128xf32>
    %35 = arith.negf %34 : vector<2x128xf32>
    %36 = math.exp %35 : vector<2x128xf32>
    %cst_10 = arith.constant 1.000000e+00 : f32
    %37 = vector.broadcast %cst_10 : f32 to vector<2x128xf32>
    %38 = arith.addf %37, %36 : vector<2x128xf32>
    %39 = arith.divf %37, %38 : vector<2x128xf32>
    %40 = vector.extract_strided_slice %39 {offsets = [0, 0], sizes = [2, 32], strides = [1, 1]} : vector<2x128xf32> to vector<2x32xf32>
    %41 = vector.extract_strided_slice %39 {offsets = [0, 32], sizes = [2, 32], strides = [1, 1]} : vector<2x128xf32> to vector<2x32xf32>
    %42 = vector.extract_strided_slice %39 {offsets = [0, 96], sizes = [2, 32], strides = [1, 1]} : vector<2x128xf32> to vector<2x32xf32>
    %43 = arith.mulf %41, %29 : vector<2x32xf32>
    %44 = vector.extract_strided_slice %34 {offsets = [0, 64], sizes = [2, 32], strides = [1, 1]} : vector<2x128xf32> to vector<2x32xf32>
    %45 = math.tanh %44 : vector<2x32xf32>
    %46 = arith.mulf %40, %45 : vector<2x32xf32>
    %47 = arith.addf %43, %46 : vector<2x32xf32>
    %48 = math.tanh %47 : vector<2x32xf32>
    %49 = arith.mulf %42, %48 : vector<2x32xf32>
    %cst_11 = arith.constant dense<0.000000e+00> : vector<2x128xf32>
    %50 = tpu.matmul %49, %13, %cst_11 {dimension_numbers = #tpu.dot_dimension_numbers<[1], [0], [0], [1], [0, 0, 1, 1], [], []>} : vector<2x32xf32>, vector<32x128xf32>, vector<2x128xf32> -> vector<2x128xf32>
    %51 = vector.extract_strided_slice %8 {offsets = [4, 0], sizes = [2, 128], strides = [1, 1]} : vector<16x128xf32> to vector<2x128xf32>
    %52 = arith.addf %50, %51 : vector<2x128xf32>
    %53 = arith.negf %52 : vector<2x128xf32>
    %54 = math.exp %53 : vector<2x128xf32>
    %cst_12 = arith.constant 1.000000e+00 : f32
    %55 = vector.broadcast %cst_12 : f32 to vector<2x128xf32>
    %56 = arith.addf %55, %54 : vector<2x128xf32>
    %57 = arith.divf %55, %56 : vector<2x128xf32>
    %58 = vector.extract_strided_slice %57 {offsets = [0, 0], sizes = [2, 32], strides = [1, 1]} : vector<2x128xf32> to vector<2x32xf32>
    %59 = vector.extract_strided_slice %57 {offsets = [0, 32], sizes = [2, 32], strides = [1, 1]} : vector<2x128xf32> to vector<2x32xf32>
    %60 = vector.extract_strided_slice %57 {offsets = [0, 96], sizes = [2, 32], strides = [1, 1]} : vector<2x128xf32> to vector<2x32xf32>
    %61 = arith.mulf %59, %47 : vector<2x32xf32>
    %62 = vector.extract_strided_slice %52 {offsets = [0, 64], sizes = [2, 32], strides = [1, 1]} : vector<2x128xf32> to vector<2x32xf32>
    %63 = math.tanh %62 : vector<2x32xf32>
    %64 = arith.mulf %58, %63 : vector<2x32xf32>
    %65 = arith.addf %61, %64 : vector<2x32xf32>
    %66 = math.tanh %65 : vector<2x32xf32>
    %67 = arith.mulf %60, %66 : vector<2x32xf32>
    %cst_13 = arith.constant dense<0.000000e+00> : vector<2x128xf32>
    %68 = tpu.matmul %67, %13, %cst_13 {dimension_numbers = #tpu.dot_dimension_numbers<[1], [0], [0], [1], [0, 0, 1, 1], [], []>} : vector<2x32xf32>, vector<32x128xf32>, vector<2x128xf32> -> vector<2x128xf32>
    %69 = vector.extract_strided_slice %8 {offsets = [6, 0], sizes = [2, 128], strides = [1, 1]} : vector<16x128xf32> to vector<2x128xf32>
    %70 = arith.addf %68, %69 : vector<2x128xf32>
    %71 = arith.negf %70 : vector<2x128xf32>
    %72 = math.exp %71 : vector<2x128xf32>
    %cst_14 = arith.constant 1.000000e+00 : f32
    %73 = vector.broadcast %cst_14 : f32 to vector<2x128xf32>
    %74 = arith.addf %73, %72 : vector<2x128xf32>
    %75 = arith.divf %73, %74 : vector<2x128xf32>
    %76 = vector.extract_strided_slice %75 {offsets = [0, 0], sizes = [2, 32], strides = [1, 1]} : vector<2x128xf32> to vector<2x32xf32>
    %77 = vector.extract_strided_slice %75 {offsets = [0, 32], sizes = [2, 32], strides = [1, 1]} : vector<2x128xf32> to vector<2x32xf32>
    %78 = vector.extract_strided_slice %75 {offsets = [0, 96], sizes = [2, 32], strides = [1, 1]} : vector<2x128xf32> to vector<2x32xf32>
    %79 = arith.mulf %77, %65 : vector<2x32xf32>
    %80 = vector.extract_strided_slice %70 {offsets = [0, 64], sizes = [2, 32], strides = [1, 1]} : vector<2x128xf32> to vector<2x32xf32>
    %81 = math.tanh %80 : vector<2x32xf32>
    %82 = arith.mulf %76, %81 : vector<2x32xf32>
    %83 = arith.addf %79, %82 : vector<2x32xf32>
    %84 = math.tanh %83 : vector<2x32xf32>
    %85 = arith.mulf %78, %84 : vector<2x32xf32>
    %cst_15 = arith.constant dense<0.000000e+00> : vector<2x128xf32>
    %86 = tpu.matmul %85, %13, %cst_15 {dimension_numbers = #tpu.dot_dimension_numbers<[1], [0], [0], [1], [0, 0, 1, 1], [], []>} : vector<2x32xf32>, vector<32x128xf32>, vector<2x128xf32> -> vector<2x128xf32>
    %87 = vector.extract_strided_slice %8 {offsets = [8, 0], sizes = [2, 128], strides = [1, 1]} : vector<16x128xf32> to vector<2x128xf32>
    %88 = arith.addf %86, %87 : vector<2x128xf32>
    %89 = arith.negf %88 : vector<2x128xf32>
    %90 = math.exp %89 : vector<2x128xf32>
    %cst_16 = arith.constant 1.000000e+00 : f32
    %91 = vector.broadcast %cst_16 : f32 to vector<2x128xf32>
    %92 = arith.addf %91, %90 : vector<2x128xf32>
    %93 = arith.divf %91, %92 : vector<2x128xf32>
    %94 = vector.extract_strided_slice %93 {offsets = [0, 0], sizes = [2, 32], strides = [1, 1]} : vector<2x128xf32> to vector<2x32xf32>
    %95 = vector.extract_strided_slice %93 {offsets = [0, 32], sizes = [2, 32], strides = [1, 1]} : vector<2x128xf32> to vector<2x32xf32>
    %96 = vector.extract_strided_slice %93 {offsets = [0, 96], sizes = [2, 32], strides = [1, 1]} : vector<2x128xf32> to vector<2x32xf32>
    %97 = arith.mulf %95, %83 : vector<2x32xf32>
    %98 = vector.extract_strided_slice %88 {offsets = [0, 64], sizes = [2, 32], strides = [1, 1]} : vector<2x128xf32> to vector<2x32xf32>
    %99 = math.tanh %98 : vector<2x32xf32>
    %100 = arith.mulf %94, %99 : vector<2x32xf32>
    %101 = arith.addf %97, %100 : vector<2x32xf32>
    %102 = math.tanh %101 : vector<2x32xf32>
    %103 = arith.mulf %96, %102 : vector<2x32xf32>
    %cst_17 = arith.constant dense<0.000000e+00> : vector<2x128xf32>
    %104 = tpu.matmul %103, %13, %cst_17 {dimension_numbers = #tpu.dot_dimension_numbers<[1], [0], [0], [1], [0, 0, 1, 1], [], []>} : vector<2x32xf32>, vector<32x128xf32>, vector<2x128xf32> -> vector<2x128xf32>
    %105 = vector.extract_strided_slice %8 {offsets = [10, 0], sizes = [2, 128], strides = [1, 1]} : vector<16x128xf32> to vector<2x128xf32>
    %106 = arith.addf %104, %105 : vector<2x128xf32>
    %107 = arith.negf %106 : vector<2x128xf32>
    %108 = math.exp %107 : vector<2x128xf32>
    %cst_18 = arith.constant 1.000000e+00 : f32
    %109 = vector.broadcast %cst_18 : f32 to vector<2x128xf32>
    %110 = arith.addf %109, %108 : vector<2x128xf32>
    %111 = arith.divf %109, %110 : vector<2x128xf32>
    %112 = vector.extract_strided_slice %111 {offsets = [0, 0], sizes = [2, 32], strides = [1, 1]} : vector<2x128xf32> to vector<2x32xf32>
    %113 = vector.extract_strided_slice %111 {offsets = [0, 32], sizes = [2, 32], strides = [1, 1]} : vector<2x128xf32> to vector<2x32xf32>
    %114 = vector.extract_strided_slice %111 {offsets = [0, 96], sizes = [2, 32], strides = [1, 1]} : vector<2x128xf32> to vector<2x32xf32>
    %115 = arith.mulf %113, %101 : vector<2x32xf32>
    %116 = vector.extract_strided_slice %106 {offsets = [0, 64], sizes = [2, 32], strides = [1, 1]} : vector<2x128xf32> to vector<2x32xf32>
    %117 = math.tanh %116 : vector<2x32xf32>
    %118 = arith.mulf %112, %117 : vector<2x32xf32>
    %119 = arith.addf %115, %118 : vector<2x32xf32>
    %120 = math.tanh %119 : vector<2x32xf32>
    %121 = arith.mulf %114, %120 : vector<2x32xf32>
    %cst_19 = arith.constant dense<0.000000e+00> : vector<2x128xf32>
    %122 = tpu.matmul %121, %13, %cst_19 {dimension_numbers = #tpu.dot_dimension_numbers<[1], [0], [0], [1], [0, 0, 1, 1], [], []>} : vector<2x32xf32>, vector<32x128xf32>, vector<2x128xf32> -> vector<2x128xf32>
    %123 = vector.extract_strided_slice %8 {offsets = [12, 0], sizes = [2, 128], strides = [1, 1]} : vector<16x128xf32> to vector<2x128xf32>
    %124 = arith.addf %122, %123 : vector<2x128xf32>
    %125 = arith.negf %124 : vector<2x128xf32>
    %126 = math.exp %125 : vector<2x128xf32>
    %cst_20 = arith.constant 1.000000e+00 : f32
    %127 = vector.broadcast %cst_20 : f32 to vector<2x128xf32>
    %128 = arith.addf %127, %126 : vector<2x128xf32>
    %129 = arith.divf %127, %128 : vector<2x128xf32>
    %130 = vector.extract_strided_slice %129 {offsets = [0, 0], sizes = [2, 32], strides = [1, 1]} : vector<2x128xf32> to vector<2x32xf32>
    %131 = vector.extract_strided_slice %129 {offsets = [0, 32], sizes = [2, 32], strides = [1, 1]} : vector<2x128xf32> to vector<2x32xf32>
    %132 = vector.extract_strided_slice %129 {offsets = [0, 96], sizes = [2, 32], strides = [1, 1]} : vector<2x128xf32> to vector<2x32xf32>
    %133 = arith.mulf %131, %119 : vector<2x32xf32>
    %134 = vector.extract_strided_slice %124 {offsets = [0, 64], sizes = [2, 32], strides = [1, 1]} : vector<2x128xf32> to vector<2x32xf32>
    %135 = math.tanh %134 : vector<2x32xf32>
    %136 = arith.mulf %130, %135 : vector<2x32xf32>
    %137 = arith.addf %133, %136 : vector<2x32xf32>
    %138 = math.tanh %137 : vector<2x32xf32>
    %139 = arith.mulf %132, %138 : vector<2x32xf32>
    %cst_21 = arith.constant dense<0.000000e+00> : vector<2x128xf32>
    %140 = tpu.matmul %139, %13, %cst_21 {dimension_numbers = #tpu.dot_dimension_numbers<[1], [0], [0], [1], [0, 0, 1, 1], [], []>} : vector<2x32xf32>, vector<32x128xf32>, vector<2x128xf32> -> vector<2x128xf32>
    %141 = vector.extract_strided_slice %8 {offsets = [14, 0], sizes = [2, 128], strides = [1, 1]} : vector<16x128xf32> to vector<2x128xf32>
    %142 = arith.addf %140, %141 : vector<2x128xf32>
    %143 = arith.negf %142 : vector<2x128xf32>
    %144 = math.exp %143 : vector<2x128xf32>
    %cst_22 = arith.constant 1.000000e+00 : f32
    %145 = vector.broadcast %cst_22 : f32 to vector<2x128xf32>
    %146 = arith.addf %145, %144 : vector<2x128xf32>
    %147 = arith.divf %145, %146 : vector<2x128xf32>
    %148 = vector.extract_strided_slice %147 {offsets = [0, 0], sizes = [2, 32], strides = [1, 1]} : vector<2x128xf32> to vector<2x32xf32>
    %149 = vector.extract_strided_slice %147 {offsets = [0, 32], sizes = [2, 32], strides = [1, 1]} : vector<2x128xf32> to vector<2x32xf32>
    %150 = vector.extract_strided_slice %147 {offsets = [0, 96], sizes = [2, 32], strides = [1, 1]} : vector<2x128xf32> to vector<2x32xf32>
    %151 = arith.mulf %149, %137 : vector<2x32xf32>
    %152 = vector.extract_strided_slice %142 {offsets = [0, 64], sizes = [2, 32], strides = [1, 1]} : vector<2x128xf32> to vector<2x32xf32>
    %153 = math.tanh %152 : vector<2x32xf32>
    %154 = arith.mulf %148, %153 : vector<2x32xf32>
    %155 = arith.addf %151, %154 : vector<2x32xf32>
    %156 = math.tanh %155 : vector<2x32xf32>
    %157 = arith.mulf %150, %156 : vector<2x32xf32>
    %158 = vector.extract_strided_slice %31 {offsets = [0, 0], sizes = [1, 32], strides = [1, 1]} : vector<2x32xf32> to vector<1x32xf32>
    %159 = vector.extract_strided_slice %49 {offsets = [0, 0], sizes = [1, 32], strides = [1, 1]} : vector<2x32xf32> to vector<1x32xf32>
    %160 = vector.extract_strided_slice %67 {offsets = [0, 0], sizes = [1, 32], strides = [1, 1]} : vector<2x32xf32> to vector<1x32xf32>
    %161 = vector.extract_strided_slice %85 {offsets = [0, 0], sizes = [1, 32], strides = [1, 1]} : vector<2x32xf32> to vector<1x32xf32>
    %162 = vector.extract_strided_slice %103 {offsets = [0, 0], sizes = [1, 32], strides = [1, 1]} : vector<2x32xf32> to vector<1x32xf32>
    %163 = vector.extract_strided_slice %121 {offsets = [0, 0], sizes = [1, 32], strides = [1, 1]} : vector<2x32xf32> to vector<1x32xf32>
    %164 = vector.extract_strided_slice %139 {offsets = [0, 0], sizes = [1, 32], strides = [1, 1]} : vector<2x32xf32> to vector<1x32xf32>
    %165 = vector.extract_strided_slice %157 {offsets = [0, 0], sizes = [1, 32], strides = [1, 1]} : vector<2x32xf32> to vector<1x32xf32>
    %166 = tpu.concatenate %158, %159, %160, %161, %162, %163, %164, %165 in 0 : vector<1x32xf32>, vector<1x32xf32>, vector<1x32xf32>, vector<1x32xf32>, vector<1x32xf32>, vector<1x32xf32>, vector<1x32xf32>, vector<1x32xf32> -> vector<8x32xf32>
    %167 = arith.mulf %166, %166 : vector<8x32xf32>
    %cst_23 = arith.constant dense<0.000000e+00> : vector<8xf32>
    %168 = vector.multi_reduction <add>, %167, %cst_23 [1] : vector<8x32xf32> to vector<8xf32>
    %169 = vector.shape_cast %168 : vector<8xf32> to vector<8x1xf32>
    %cst_24 = arith.constant 1.000000e-24 : f32
    %170 = vector.broadcast %cst_24 : f32 to vector<8x1xf32>
    %171 = arith.maximumf %169, %170 : vector<8x1xf32>
    %172 = math.rsqrt %171 : vector<8x1xf32>
    %173 = vector.broadcast %172 : vector<8x1xf32> to vector<8x32xf32>
    %174 = arith.mulf %166, %173 : vector<8x32xf32>
    %cst_25 = arith.constant dense<0.000000e+00> : vector<32xf32>
    %175 = vector.multi_reduction <add>, %174, %cst_25 [0] : vector<8x32xf32> to vector<32xf32>
    %176 = vector.shape_cast %175 : vector<32xf32> to vector<1x32xf32>
    %cst_26 = arith.constant 8.000000e+00 : f32
    %177 = vector.broadcast %cst_26 : f32 to vector<1x32xf32>
    %178 = arith.divf %176, %177 : vector<1x32xf32>
    %179 = arith.mulf %178, %178 : vector<1x32xf32>
    %cst_27 = arith.constant dense<0.000000e+00> : vector<1xf32>
    %180 = vector.multi_reduction <add>, %179, %cst_27 [1] : vector<1x32xf32> to vector<1xf32>
    %181 = vector.shape_cast %180 : vector<1xf32> to vector<1x1xf32>
    %cst_28 = arith.constant 1.000000e-24 : f32
    %182 = vector.broadcast %cst_28 : f32 to vector<1x1xf32>
    %183 = arith.maximumf %181, %182 : vector<1x1xf32>
    %184 = math.rsqrt %183 : vector<1x1xf32>
    %185 = vector.broadcast %184 : vector<1x1xf32> to vector<1x32xf32>
    %186 = arith.mulf %178, %185 : vector<1x32xf32>
    %187 = vector.extract_strided_slice %31 {offsets = [1, 0], sizes = [1, 32], strides = [1, 1]} : vector<2x32xf32> to vector<1x32xf32>
    %188 = vector.extract_strided_slice %49 {offsets = [1, 0], sizes = [1, 32], strides = [1, 1]} : vector<2x32xf32> to vector<1x32xf32>
    %189 = vector.extract_strided_slice %67 {offsets = [1, 0], sizes = [1, 32], strides = [1, 1]} : vector<2x32xf32> to vector<1x32xf32>
    %190 = vector.extract_strided_slice %85 {offsets = [1, 0], sizes = [1, 32], strides = [1, 1]} : vector<2x32xf32> to vector<1x32xf32>
    %191 = vector.extract_strided_slice %103 {offsets = [1, 0], sizes = [1, 32], strides = [1, 1]} : vector<2x32xf32> to vector<1x32xf32>
    %192 = vector.extract_strided_slice %121 {offsets = [1, 0], sizes = [1, 32], strides = [1, 1]} : vector<2x32xf32> to vector<1x32xf32>
    %193 = vector.extract_strided_slice %139 {offsets = [1, 0], sizes = [1, 32], strides = [1, 1]} : vector<2x32xf32> to vector<1x32xf32>
    %194 = vector.extract_strided_slice %157 {offsets = [1, 0], sizes = [1, 32], strides = [1, 1]} : vector<2x32xf32> to vector<1x32xf32>
    %195 = tpu.concatenate %187, %188, %189, %190, %191, %192, %193, %194 in 0 : vector<1x32xf32>, vector<1x32xf32>, vector<1x32xf32>, vector<1x32xf32>, vector<1x32xf32>, vector<1x32xf32>, vector<1x32xf32>, vector<1x32xf32> -> vector<8x32xf32>
    %196 = arith.mulf %195, %195 : vector<8x32xf32>
    %cst_29 = arith.constant dense<0.000000e+00> : vector<8xf32>
    %197 = vector.multi_reduction <add>, %196, %cst_29 [1] : vector<8x32xf32> to vector<8xf32>
    %198 = vector.shape_cast %197 : vector<8xf32> to vector<8x1xf32>
    %cst_30 = arith.constant 1.000000e-24 : f32
    %199 = vector.broadcast %cst_30 : f32 to vector<8x1xf32>
    %200 = arith.maximumf %198, %199 : vector<8x1xf32>
    %201 = math.rsqrt %200 : vector<8x1xf32>
    %202 = vector.broadcast %201 : vector<8x1xf32> to vector<8x32xf32>
    %203 = arith.mulf %195, %202 : vector<8x32xf32>
    %cst_31 = arith.constant dense<0.000000e+00> : vector<32xf32>
    %204 = vector.multi_reduction <add>, %203, %cst_31 [0] : vector<8x32xf32> to vector<32xf32>
    %205 = vector.shape_cast %204 : vector<32xf32> to vector<1x32xf32>
    %cst_32 = arith.constant 8.000000e+00 : f32
    %206 = vector.broadcast %cst_32 : f32 to vector<1x32xf32>
    %207 = arith.divf %205, %206 : vector<1x32xf32>
    %208 = arith.mulf %207, %207 : vector<1x32xf32>
    %cst_33 = arith.constant dense<0.000000e+00> : vector<1xf32>
    %209 = vector.multi_reduction <add>, %208, %cst_33 [1] : vector<1x32xf32> to vector<1xf32>
    %210 = vector.shape_cast %209 : vector<1xf32> to vector<1x1xf32>
    %cst_34 = arith.constant 1.000000e-24 : f32
    %211 = vector.broadcast %cst_34 : f32 to vector<1x1xf32>
    %212 = arith.maximumf %210, %211 : vector<1x1xf32>
    %213 = math.rsqrt %212 : vector<1x1xf32>
    %214 = vector.broadcast %213 : vector<1x1xf32> to vector<1x32xf32>
    %215 = arith.mulf %207, %214 : vector<1x32xf32>
    %216 = tpu.concatenate %186, %215 in 0 : vector<1x32xf32>, vector<1x32xf32> -> vector<2x32xf32>
    %c256 = arith.constant 256 : index
    %c0_35 = arith.constant 0 : index
    %217 = vector.load %arg1[%c256, %c0_35] : memref<264x128xf32, #tpu.memory_space<vmem>>, vector<3x128xf32>
    %218 = vector.extract_strided_slice %217 {offsets = [0, 0], sizes = [1, 32], strides = [1, 1]} : vector<3x128xf32> to vector<1x32xf32>
    %219 = vector.extract_strided_slice %217 {offsets = [0, 32], sizes = [1, 32], strides = [1, 1]} : vector<3x128xf32> to vector<1x32xf32>
    %220 = vector.extract_strided_slice %217 {offsets = [0, 64], sizes = [1, 32], strides = [1, 1]} : vector<3x128xf32> to vector<1x32xf32>
    %221 = vector.extract_strided_slice %217 {offsets = [0, 96], sizes = [1, 32], strides = [1, 1]} : vector<3x128xf32> to vector<1x32xf32>
    %222 = vector.extract_strided_slice %217 {offsets = [1, 0], sizes = [1, 128], strides = [1, 1]} : vector<3x128xf32> to vector<1x128xf32>
    %223 = vector.extract_strided_slice %217 {offsets = [2, 0], sizes = [1, 1], strides = [1, 1]} : vector<3x128xf32> to vector<1x1xf32>
    %c96 = arith.constant 96 : index
    %c0_36 = arith.constant 0 : index
    %224 = vector.load %arg1[%c96, %c0_36] : memref<264x128xf32, #tpu.memory_space<vmem>>, vector<32x128xf32>
    %cst_37 = arith.constant dense<0.000000e+00> : vector<2x128xf32>
    %225 = tpu.matmul %216, %224, %cst_37 {dimension_numbers = #tpu.dot_dimension_numbers<[1], [0], [0], [1], [0, 0, 1, 1], [], []>} : vector<2x32xf32>, vector<32x128xf32>, vector<2x128xf32> -> vector<2x128xf32>
    %226 = vector.extract_strided_slice %225 {offsets = [0, 0], sizes = [2, 32], strides = [1, 1]} : vector<2x128xf32> to vector<2x32xf32>
    %227 = vector.broadcast %218 : vector<1x32xf32> to vector<2x32xf32>
    %228 = arith.addf %226, %227 : vector<2x32xf32>
    %cst_38 = arith.constant 0.000000e+00 : f32
    %229 = vector.broadcast %cst_38 : f32 to vector<2x32xf32>
    %230 = arith.maximumf %228, %229 : vector<2x32xf32>
    %c128 = arith.constant 128 : index
    %c0_39 = arith.constant 0 : index
    %231 = vector.load %arg1[%c128, %c0_39] : memref<264x128xf32, #tpu.memory_space<vmem>>, vector<32x128xf32>
    %cst_40 = arith.constant dense<0.000000e+00> : vector<2x128xf32>
    %232 = tpu.matmul %230, %231, %cst_40 {dimension_numbers = #tpu.dot_dimension_numbers<[1], [0], [0], [1], [0, 0, 1, 1], [], []>} : vector<2x32xf32>, vector<32x128xf32>, vector<2x128xf32> -> vector<2x128xf32>
    %233 = vector.extract_strided_slice %232 {offsets = [0, 0], sizes = [2, 32], strides = [1, 1]} : vector<2x128xf32> to vector<2x32xf32>
    %234 = vector.broadcast %219 : vector<1x32xf32> to vector<2x32xf32>
    %235 = arith.addf %233, %234 : vector<2x32xf32>
    %cst_41 = arith.constant 0.000000e+00 : f32
    %236 = vector.broadcast %cst_41 : f32 to vector<2x32xf32>
    %237 = arith.maximumf %235, %236 : vector<2x32xf32>
    %238 = vector.broadcast %221 : vector<1x32xf32> to vector<2x32xf32>
    %239 = arith.mulf %237, %238 : vector<2x32xf32>
    %cst_42 = arith.constant dense<0.000000e+00> : vector<2xf32>
    %240 = vector.multi_reduction <add>, %239, %cst_42 [1] : vector<2x32xf32> to vector<2xf32>
    %241 = vector.shape_cast %240 : vector<2xf32> to vector<2x1xf32>
    %242 = vector.broadcast %223 : vector<1x1xf32> to vector<2x1xf32>
    %243 = arith.addf %241, %242 : vector<2x1xf32>
    %244 = arith.negf %243 : vector<2x1xf32>
    %245 = math.exp %244 : vector<2x1xf32>
    %cst_43 = arith.constant 1.000000e+00 : f32
    %246 = vector.broadcast %cst_43 : f32 to vector<2x1xf32>
    %247 = arith.addf %246, %245 : vector<2x1xf32>
    %248 = arith.divf %246, %247 : vector<2x1xf32>
    %c64 = arith.constant 64 : index
    %c0_44 = arith.constant 0 : index
    %249 = vector.load %arg1[%c64, %c0_44] : memref<264x128xf32, #tpu.memory_space<vmem>>, vector<32x128xf32>
    %cst_45 = arith.constant dense<0.000000e+00> : vector<2x128xf32>
    %250 = tpu.matmul %216, %249, %cst_45 {dimension_numbers = #tpu.dot_dimension_numbers<[1], [0], [0], [1], [0, 0, 1, 1], [], []>} : vector<2x32xf32>, vector<32x128xf32>, vector<2x128xf32> -> vector<2x128xf32>
    %251 = vector.extract_strided_slice %11 {offsets = [0, 0], sizes = [2, 128], strides = [1, 1]} : vector<16x128xf32> to vector<2x128xf32>
    %252 = arith.addf %250, %251 : vector<2x128xf32>
    %253 = arith.negf %252 : vector<2x128xf32>
    %254 = math.exp %253 : vector<2x128xf32>
    %cst_46 = arith.constant 1.000000e+00 : f32
    %255 = vector.broadcast %cst_46 : f32 to vector<2x128xf32>
    %256 = arith.addf %255, %254 : vector<2x128xf32>
    %257 = arith.divf %255, %256 : vector<2x128xf32>
    %258 = vector.extract_strided_slice %257 {offsets = [0, 0], sizes = [2, 32], strides = [1, 1]} : vector<2x128xf32> to vector<2x32xf32>
    %259 = vector.extract_strided_slice %257 {offsets = [0, 32], sizes = [2, 32], strides = [1, 1]} : vector<2x128xf32> to vector<2x32xf32>
    %260 = vector.extract_strided_slice %257 {offsets = [0, 96], sizes = [2, 32], strides = [1, 1]} : vector<2x128xf32> to vector<2x32xf32>
    %261 = arith.mulf %259, %216 : vector<2x32xf32>
    %262 = vector.extract_strided_slice %252 {offsets = [0, 64], sizes = [2, 32], strides = [1, 1]} : vector<2x128xf32> to vector<2x32xf32>
    %263 = math.tanh %262 : vector<2x32xf32>
    %264 = arith.mulf %258, %263 : vector<2x32xf32>
    %265 = arith.addf %261, %264 : vector<2x32xf32>
    %266 = math.tanh %265 : vector<2x32xf32>
    %267 = arith.mulf %260, %266 : vector<2x32xf32>
    %cst_47 = arith.constant dense<0.000000e+00> : vector<2x128xf32>
    %268 = tpu.matmul %267, %249, %cst_47 {dimension_numbers = #tpu.dot_dimension_numbers<[1], [0], [0], [1], [0, 0, 1, 1], [], []>} : vector<2x32xf32>, vector<32x128xf32>, vector<2x128xf32> -> vector<2x128xf32>
    %269 = vector.extract_strided_slice %11 {offsets = [2, 0], sizes = [2, 128], strides = [1, 1]} : vector<16x128xf32> to vector<2x128xf32>
    %270 = arith.addf %268, %269 : vector<2x128xf32>
    %271 = arith.negf %270 : vector<2x128xf32>
    %272 = math.exp %271 : vector<2x128xf32>
    %cst_48 = arith.constant 1.000000e+00 : f32
    %273 = vector.broadcast %cst_48 : f32 to vector<2x128xf32>
    %274 = arith.addf %273, %272 : vector<2x128xf32>
    %275 = arith.divf %273, %274 : vector<2x128xf32>
    %276 = vector.extract_strided_slice %275 {offsets = [0, 0], sizes = [2, 32], strides = [1, 1]} : vector<2x128xf32> to vector<2x32xf32>
    %277 = vector.extract_strided_slice %275 {offsets = [0, 32], sizes = [2, 32], strides = [1, 1]} : vector<2x128xf32> to vector<2x32xf32>
    %278 = vector.extract_strided_slice %275 {offsets = [0, 96], sizes = [2, 32], strides = [1, 1]} : vector<2x128xf32> to vector<2x32xf32>
    %279 = arith.mulf %277, %265 : vector<2x32xf32>
    %280 = vector.extract_strided_slice %270 {offsets = [0, 64], sizes = [2, 32], strides = [1, 1]} : vector<2x128xf32> to vector<2x32xf32>
    %281 = math.tanh %280 : vector<2x32xf32>
    %282 = arith.mulf %276, %281 : vector<2x32xf32>
    %283 = arith.addf %279, %282 : vector<2x32xf32>
    %284 = math.tanh %283 : vector<2x32xf32>
    %285 = arith.mulf %278, %284 : vector<2x32xf32>
    %cst_49 = arith.constant dense<0.000000e+00> : vector<2x128xf32>
    %286 = tpu.matmul %285, %249, %cst_49 {dimension_numbers = #tpu.dot_dimension_numbers<[1], [0], [0], [1], [0, 0, 1, 1], [], []>} : vector<2x32xf32>, vector<32x128xf32>, vector<2x128xf32> -> vector<2x128xf32>
    %287 = vector.extract_strided_slice %11 {offsets = [4, 0], sizes = [2, 128], strides = [1, 1]} : vector<16x128xf32> to vector<2x128xf32>
    %288 = arith.addf %286, %287 : vector<2x128xf32>
    %289 = arith.negf %288 : vector<2x128xf32>
    %290 = math.exp %289 : vector<2x128xf32>
    %cst_50 = arith.constant 1.000000e+00 : f32
    %291 = vector.broadcast %cst_50 : f32 to vector<2x128xf32>
    %292 = arith.addf %291, %290 : vector<2x128xf32>
    %293 = arith.divf %291, %292 : vector<2x128xf32>
    %294 = vector.extract_strided_slice %293 {offsets = [0, 0], sizes = [2, 32], strides = [1, 1]} : vector<2x128xf32> to vector<2x32xf32>
    %295 = vector.extract_strided_slice %293 {offsets = [0, 32], sizes = [2, 32], strides = [1, 1]} : vector<2x128xf32> to vector<2x32xf32>
    %296 = vector.extract_strided_slice %293 {offsets = [0, 96], sizes = [2, 32], strides = [1, 1]} : vector<2x128xf32> to vector<2x32xf32>
    %297 = arith.mulf %295, %283 : vector<2x32xf32>
    %298 = vector.extract_strided_slice %288 {offsets = [0, 64], sizes = [2, 32], strides = [1, 1]} : vector<2x128xf32> to vector<2x32xf32>
    %299 = math.tanh %298 : vector<2x32xf32>
    %300 = arith.mulf %294, %299 : vector<2x32xf32>
    %301 = arith.addf %297, %300 : vector<2x32xf32>
    %302 = math.tanh %301 : vector<2x32xf32>
    %303 = arith.mulf %296, %302 : vector<2x32xf32>
    %cst_51 = arith.constant dense<0.000000e+00> : vector<2x128xf32>
    %304 = tpu.matmul %303, %249, %cst_51 {dimension_numbers = #tpu.dot_dimension_numbers<[1], [0], [0], [1], [0, 0, 1, 1], [], []>} : vector<2x32xf32>, vector<32x128xf32>, vector<2x128xf32> -> vector<2x128xf32>
    %305 = vector.extract_strided_slice %11 {offsets = [6, 0], sizes = [2, 128], strides = [1, 1]} : vector<16x128xf32> to vector<2x128xf32>
    %306 = arith.addf %304, %305 : vector<2x128xf32>
    %307 = arith.negf %306 : vector<2x128xf32>
    %308 = math.exp %307 : vector<2x128xf32>
    %cst_52 = arith.constant 1.000000e+00 : f32
    %309 = vector.broadcast %cst_52 : f32 to vector<2x128xf32>
    %310 = arith.addf %309, %308 : vector<2x128xf32>
    %311 = arith.divf %309, %310 : vector<2x128xf32>
    %312 = vector.extract_strided_slice %311 {offsets = [0, 0], sizes = [2, 32], strides = [1, 1]} : vector<2x128xf32> to vector<2x32xf32>
    %313 = vector.extract_strided_slice %311 {offsets = [0, 32], sizes = [2, 32], strides = [1, 1]} : vector<2x128xf32> to vector<2x32xf32>
    %314 = vector.extract_strided_slice %311 {offsets = [0, 96], sizes = [2, 32], strides = [1, 1]} : vector<2x128xf32> to vector<2x32xf32>
    %315 = arith.mulf %313, %301 : vector<2x32xf32>
    %316 = vector.extract_strided_slice %306 {offsets = [0, 64], sizes = [2, 32], strides = [1, 1]} : vector<2x128xf32> to vector<2x32xf32>
    %317 = math.tanh %316 : vector<2x32xf32>
    %318 = arith.mulf %312, %317 : vector<2x32xf32>
    %319 = arith.addf %315, %318 : vector<2x32xf32>
    %320 = math.tanh %319 : vector<2x32xf32>
    %321 = arith.mulf %314, %320 : vector<2x32xf32>
    %cst_53 = arith.constant dense<0.000000e+00> : vector<2x128xf32>
    %322 = tpu.matmul %321, %249, %cst_53 {dimension_numbers = #tpu.dot_dimension_numbers<[1], [0], [0], [1], [0, 0, 1, 1], [], []>} : vector<2x32xf32>, vector<32x128xf32>, vector<2x128xf32> -> vector<2x128xf32>
    %323 = vector.extract_strided_slice %11 {offsets = [8, 0], sizes = [2, 128], strides = [1, 1]} : vector<16x128xf32> to vector<2x128xf32>
    %324 = arith.addf %322, %323 : vector<2x128xf32>
    %325 = arith.negf %324 : vector<2x128xf32>
    %326 = math.exp %325 : vector<2x128xf32>
    %cst_54 = arith.constant 1.000000e+00 : f32
    %327 = vector.broadcast %cst_54 : f32 to vector<2x128xf32>
    %328 = arith.addf %327, %326 : vector<2x128xf32>
    %329 = arith.divf %327, %328 : vector<2x128xf32>
    %330 = vector.extract_strided_slice %329 {offsets = [0, 0], sizes = [2, 32], strides = [1, 1]} : vector<2x128xf32> to vector<2x32xf32>
    %331 = vector.extract_strided_slice %329 {offsets = [0, 32], sizes = [2, 32], strides = [1, 1]} : vector<2x128xf32> to vector<2x32xf32>
    %332 = vector.extract_strided_slice %329 {offsets = [0, 96], sizes = [2, 32], strides = [1, 1]} : vector<2x128xf32> to vector<2x32xf32>
    %333 = arith.mulf %331, %319 : vector<2x32xf32>
    %334 = vector.extract_strided_slice %324 {offsets = [0, 64], sizes = [2, 32], strides = [1, 1]} : vector<2x128xf32> to vector<2x32xf32>
    %335 = math.tanh %334 : vector<2x32xf32>
    %336 = arith.mulf %330, %335 : vector<2x32xf32>
    %337 = arith.addf %333, %336 : vector<2x32xf32>
    %338 = math.tanh %337 : vector<2x32xf32>
    %339 = arith.mulf %332, %338 : vector<2x32xf32>
    %cst_55 = arith.constant dense<0.000000e+00> : vector<2x128xf32>
    %340 = tpu.matmul %339, %249, %cst_55 {dimension_numbers = #tpu.dot_dimension_numbers<[1], [0], [0], [1], [0, 0, 1, 1], [], []>} : vector<2x32xf32>, vector<32x128xf32>, vector<2x128xf32> -> vector<2x128xf32>
    %341 = vector.extract_strided_slice %11 {offsets = [10, 0], sizes = [2, 128], strides = [1, 1]} : vector<16x128xf32> to vector<2x128xf32>
    %342 = arith.addf %340, %341 : vector<2x128xf32>
    %343 = arith.negf %342 : vector<2x128xf32>
    %344 = math.exp %343 : vector<2x128xf32>
    %cst_56 = arith.constant 1.000000e+00 : f32
    %345 = vector.broadcast %cst_56 : f32 to vector<2x128xf32>
    %346 = arith.addf %345, %344 : vector<2x128xf32>
    %347 = arith.divf %345, %346 : vector<2x128xf32>
    %348 = vector.extract_strided_slice %347 {offsets = [0, 0], sizes = [2, 32], strides = [1, 1]} : vector<2x128xf32> to vector<2x32xf32>
    %349 = vector.extract_strided_slice %347 {offsets = [0, 32], sizes = [2, 32], strides = [1, 1]} : vector<2x128xf32> to vector<2x32xf32>
    %350 = vector.extract_strided_slice %347 {offsets = [0, 96], sizes = [2, 32], strides = [1, 1]} : vector<2x128xf32> to vector<2x32xf32>
    %351 = arith.mulf %349, %337 : vector<2x32xf32>
    %352 = vector.extract_strided_slice %342 {offsets = [0, 64], sizes = [2, 32], strides = [1, 1]} : vector<2x128xf32> to vector<2x32xf32>
    %353 = math.tanh %352 : vector<2x32xf32>
    %354 = arith.mulf %348, %353 : vector<2x32xf32>
    %355 = arith.addf %351, %354 : vector<2x32xf32>
    %356 = math.tanh %355 : vector<2x32xf32>
    %357 = arith.mulf %350, %356 : vector<2x32xf32>
    %cst_57 = arith.constant dense<0.000000e+00> : vector<2x128xf32>
    %358 = tpu.matmul %357, %249, %cst_57 {dimension_numbers = #tpu.dot_dimension_numbers<[1], [0], [0], [1], [0, 0, 1, 1], [], []>} : vector<2x32xf32>, vector<32x128xf32>, vector<2x128xf32> -> vector<2x128xf32>
    %359 = vector.extract_strided_slice %11 {offsets = [12, 0], sizes = [2, 128], strides = [1, 1]} : vector<16x128xf32> to vector<2x128xf32>
    %360 = arith.addf %358, %359 : vector<2x128xf32>
    %361 = arith.negf %360 : vector<2x128xf32>
    %362 = math.exp %361 : vector<2x128xf32>
    %cst_58 = arith.constant 1.000000e+00 : f32
    %363 = vector.broadcast %cst_58 : f32 to vector<2x128xf32>
    %364 = arith.addf %363, %362 : vector<2x128xf32>
    %365 = arith.divf %363, %364 : vector<2x128xf32>
    %366 = vector.extract_strided_slice %365 {offsets = [0, 0], sizes = [2, 32], strides = [1, 1]} : vector<2x128xf32> to vector<2x32xf32>
    %367 = vector.extract_strided_slice %365 {offsets = [0, 32], sizes = [2, 32], strides = [1, 1]} : vector<2x128xf32> to vector<2x32xf32>
    %368 = vector.extract_strided_slice %365 {offsets = [0, 96], sizes = [2, 32], strides = [1, 1]} : vector<2x128xf32> to vector<2x32xf32>
    %369 = arith.mulf %367, %355 : vector<2x32xf32>
    %370 = vector.extract_strided_slice %360 {offsets = [0, 64], sizes = [2, 32], strides = [1, 1]} : vector<2x128xf32> to vector<2x32xf32>
    %371 = math.tanh %370 : vector<2x32xf32>
    %372 = arith.mulf %366, %371 : vector<2x32xf32>
    %373 = arith.addf %369, %372 : vector<2x32xf32>
    %374 = math.tanh %373 : vector<2x32xf32>
    %375 = arith.mulf %368, %374 : vector<2x32xf32>
    %cst_59 = arith.constant dense<0.000000e+00> : vector<2x128xf32>
    %376 = tpu.matmul %375, %249, %cst_59 {dimension_numbers = #tpu.dot_dimension_numbers<[1], [0], [0], [1], [0, 0, 1, 1], [], []>} : vector<2x32xf32>, vector<32x128xf32>, vector<2x128xf32> -> vector<2x128xf32>
    %377 = vector.extract_strided_slice %11 {offsets = [14, 0], sizes = [2, 128], strides = [1, 1]} : vector<16x128xf32> to vector<2x128xf32>
    %378 = arith.addf %376, %377 : vector<2x128xf32>
    %379 = arith.negf %378 : vector<2x128xf32>
    %380 = math.exp %379 : vector<2x128xf32>
    %cst_60 = arith.constant 1.000000e+00 : f32
    %381 = vector.broadcast %cst_60 : f32 to vector<2x128xf32>
    %382 = arith.addf %381, %380 : vector<2x128xf32>
    %383 = arith.divf %381, %382 : vector<2x128xf32>
    %384 = vector.extract_strided_slice %383 {offsets = [0, 0], sizes = [2, 32], strides = [1, 1]} : vector<2x128xf32> to vector<2x32xf32>
    %385 = vector.extract_strided_slice %383 {offsets = [0, 32], sizes = [2, 32], strides = [1, 1]} : vector<2x128xf32> to vector<2x32xf32>
    %386 = vector.extract_strided_slice %383 {offsets = [0, 96], sizes = [2, 32], strides = [1, 1]} : vector<2x128xf32> to vector<2x32xf32>
    %387 = arith.mulf %385, %373 : vector<2x32xf32>
    %388 = vector.extract_strided_slice %378 {offsets = [0, 64], sizes = [2, 32], strides = [1, 1]} : vector<2x128xf32> to vector<2x32xf32>
    %389 = math.tanh %388 : vector<2x32xf32>
    %390 = arith.mulf %384, %389 : vector<2x32xf32>
    %391 = arith.addf %387, %390 : vector<2x32xf32>
    %392 = math.tanh %391 : vector<2x32xf32>
    %393 = arith.mulf %386, %392 : vector<2x32xf32>
    %394 = vector.extract_strided_slice %267 {offsets = [0, 0], sizes = [1, 32], strides = [1, 1]} : vector<2x32xf32> to vector<1x32xf32>
    %395 = vector.extract_strided_slice %285 {offsets = [0, 0], sizes = [1, 32], strides = [1, 1]} : vector<2x32xf32> to vector<1x32xf32>
    %396 = vector.extract_strided_slice %303 {offsets = [0, 0], sizes = [1, 32], strides = [1, 1]} : vector<2x32xf32> to vector<1x32xf32>
    %397 = vector.extract_strided_slice %321 {offsets = [0, 0], sizes = [1, 32], strides = [1, 1]} : vector<2x32xf32> to vector<1x32xf32>
    %398 = vector.extract_strided_slice %339 {offsets = [0, 0], sizes = [1, 32], strides = [1, 1]} : vector<2x32xf32> to vector<1x32xf32>
    %399 = vector.extract_strided_slice %357 {offsets = [0, 0], sizes = [1, 32], strides = [1, 1]} : vector<2x32xf32> to vector<1x32xf32>
    %400 = vector.extract_strided_slice %375 {offsets = [0, 0], sizes = [1, 32], strides = [1, 1]} : vector<2x32xf32> to vector<1x32xf32>
    %401 = vector.extract_strided_slice %393 {offsets = [0, 0], sizes = [1, 32], strides = [1, 1]} : vector<2x32xf32> to vector<1x32xf32>
    %402 = tpu.concatenate %394, %395, %396, %397, %398, %399, %400, %401 in 0 : vector<1x32xf32>, vector<1x32xf32>, vector<1x32xf32>, vector<1x32xf32>, vector<1x32xf32>, vector<1x32xf32>, vector<1x32xf32>, vector<1x32xf32> -> vector<8x32xf32>
    %cst_61 = arith.constant dense<0.000000e+00> : vector<8x8xf32>
    %403 = tpu.matmul %402, %174, %cst_61 {dimension_numbers = #tpu.dot_dimension_numbers<[1], [1], [0], [0], [0, 0, 1, 0], [], []>} : vector<8x32xf32>, vector<8x32xf32>, vector<8x8xf32> -> vector<8x8xf32>
    %cst_62 = arith.constant dense<0xFF800000> : vector<8xf32>
    %404 = vector.multi_reduction <maximumf>, %403, %cst_62 [1] : vector<8x8xf32> to vector<8xf32>
    %405 = vector.shape_cast %404 : vector<8xf32> to vector<8x1xf32>
    %406 = vector.broadcast %405 : vector<8x1xf32> to vector<8x8xf32>
    %407 = arith.subf %403, %406 : vector<8x8xf32>
    %408 = math.exp %407 : vector<8x8xf32>
    %cst_63 = arith.constant dense<0.000000e+00> : vector<8xf32>
    %409 = vector.multi_reduction <add>, %408, %cst_63 [1] : vector<8x8xf32> to vector<8xf32>
    %410 = vector.shape_cast %409 : vector<8xf32> to vector<8x1xf32>
    %411 = tpu.reciprocal %410 {approx = true} : vector<8x1xf32> -> vector<8x1xf32>
    %412 = vector.broadcast %411 : vector<8x1xf32> to vector<8x8xf32>
    %413 = arith.mulf %408, %412 : vector<8x8xf32>
    %cst_64 = arith.constant dense<0.000000e+00> : vector<8x32xf32>
    %414 = tpu.matmul %413, %174, %cst_64 {dimension_numbers = #tpu.dot_dimension_numbers<[1], [0], [0], [1], [0, 0, 1, 1], [], []>} : vector<8x8xf32>, vector<8x32xf32>, vector<8x32xf32> -> vector<8x32xf32>
    %415 = vector.extract_strided_slice %267 {offsets = [1, 0], sizes = [1, 32], strides = [1, 1]} : vector<2x32xf32> to vector<1x32xf32>
    %416 = vector.extract_strided_slice %285 {offsets = [1, 0], sizes = [1, 32], strides = [1, 1]} : vector<2x32xf32> to vector<1x32xf32>
    %417 = vector.extract_strided_slice %303 {offsets = [1, 0], sizes = [1, 32], strides = [1, 1]} : vector<2x32xf32> to vector<1x32xf32>
    %418 = vector.extract_strided_slice %321 {offsets = [1, 0], sizes = [1, 32], strides = [1, 1]} : vector<2x32xf32> to vector<1x32xf32>
    %419 = vector.extract_strided_slice %339 {offsets = [1, 0], sizes = [1, 32], strides = [1, 1]} : vector<2x32xf32> to vector<1x32xf32>
    %420 = vector.extract_strided_slice %357 {offsets = [1, 0], sizes = [1, 32], strides = [1, 1]} : vector<2x32xf32> to vector<1x32xf32>
    %421 = vector.extract_strided_slice %375 {offsets = [1, 0], sizes = [1, 32], strides = [1, 1]} : vector<2x32xf32> to vector<1x32xf32>
    %422 = vector.extract_strided_slice %393 {offsets = [1, 0], sizes = [1, 32], strides = [1, 1]} : vector<2x32xf32> to vector<1x32xf32>
    %423 = tpu.concatenate %415, %416, %417, %418, %419, %420, %421, %422 in 0 : vector<1x32xf32>, vector<1x32xf32>, vector<1x32xf32>, vector<1x32xf32>, vector<1x32xf32>, vector<1x32xf32>, vector<1x32xf32>, vector<1x32xf32> -> vector<8x32xf32>
    %cst_65 = arith.constant dense<0.000000e+00> : vector<8x8xf32>
    %424 = tpu.matmul %423, %203, %cst_65 {dimension_numbers = #tpu.dot_dimension_numbers<[1], [1], [0], [0], [0, 0, 1, 0], [], []>} : vector<8x32xf32>, vector<8x32xf32>, vector<8x8xf32> -> vector<8x8xf32>
    %cst_66 = arith.constant dense<0xFF800000> : vector<8xf32>
    %425 = vector.multi_reduction <maximumf>, %424, %cst_66 [1] : vector<8x8xf32> to vector<8xf32>
    %426 = vector.shape_cast %425 : vector<8xf32> to vector<8x1xf32>
    %427 = vector.broadcast %426 : vector<8x1xf32> to vector<8x8xf32>
    %428 = arith.subf %424, %427 : vector<8x8xf32>
    %429 = math.exp %428 : vector<8x8xf32>
    %cst_67 = arith.constant dense<0.000000e+00> : vector<8xf32>
    %430 = vector.multi_reduction <add>, %429, %cst_67 [1] : vector<8x8xf32> to vector<8xf32>
    %431 = vector.shape_cast %430 : vector<8xf32> to vector<8x1xf32>
    %432 = tpu.reciprocal %431 {approx = true} : vector<8x1xf32> -> vector<8x1xf32>
    %433 = vector.broadcast %432 : vector<8x1xf32> to vector<8x8xf32>
    %434 = arith.mulf %429, %433 : vector<8x8xf32>
    %cst_68 = arith.constant dense<0.000000e+00> : vector<8x32xf32>
    %435 = tpu.matmul %434, %203, %cst_68 {dimension_numbers = #tpu.dot_dimension_numbers<[1], [0], [0], [1], [0, 0, 1, 1], [], []>} : vector<8x8xf32>, vector<8x32xf32>, vector<8x32xf32> -> vector<8x32xf32>
    %436 = tpu.concatenate %414, %435 in 0 : vector<8x32xf32>, vector<8x32xf32> -> vector<16x32xf32>
    %437 = tpu.concatenate %402, %423 in 0 : vector<8x32xf32>, vector<8x32xf32> -> vector<16x32xf32>
    %438 = tpu.concatenate %436, %437 in 1 : vector<16x32xf32>, vector<16x32xf32> -> vector<16x64xf32>
    %c160 = arith.constant 160 : index
    %c0_69 = arith.constant 0 : index
    %439 = vector.load %arg1[%c160, %c0_69] : memref<264x128xf32, #tpu.memory_space<vmem>>, vector<64x128xf32>
    %cst_70 = arith.constant dense<0.000000e+00> : vector<16x128xf32>
    %440 = tpu.matmul %438, %439, %cst_70 {dimension_numbers = #tpu.dot_dimension_numbers<[1], [0], [0], [1], [0, 0, 1, 1], [], []>} : vector<16x64xf32>, vector<64x128xf32>, vector<16x128xf32> -> vector<16x128xf32>
    %441 = vector.extract_strided_slice %440 {offsets = [0, 0], sizes = [16, 32], strides = [1, 1]} : vector<16x128xf32> to vector<16x32xf32>
    %442 = vector.broadcast %220 : vector<1x32xf32> to vector<16x32xf32>
    %443 = arith.addf %441, %442 : vector<16x32xf32>
    %444 = math.tanh %443 : vector<16x32xf32>
    %c224 = arith.constant 224 : index
    %c0_71 = arith.constant 0 : index
    %445 = vector.load %arg1[%c224, %c0_71] : memref<264x128xf32, #tpu.memory_space<vmem>>, vector<32x128xf32>
    %cst_72 = arith.constant dense<0.000000e+00> : vector<16x128xf32>
    %446 = tpu.matmul %444, %445, %cst_72 {dimension_numbers = #tpu.dot_dimension_numbers<[1], [0], [0], [1], [0, 0, 1, 1], [], []>} : vector<16x32xf32>, vector<32x128xf32>, vector<16x128xf32> -> vector<16x128xf32>
    %447 = vector.broadcast %222 : vector<1x128xf32> to vector<16x128xf32>
    %448 = arith.addf %446, %447 : vector<16x128xf32>
    %cst_73 = arith.constant dense<0xFF800000> : vector<16xf32>
    %449 = vector.multi_reduction <maximumf>, %448, %cst_73 [1] : vector<16x128xf32> to vector<16xf32>
    %450 = vector.shape_cast %449 : vector<16xf32> to vector<16x1xf32>
    %451 = vector.broadcast %450 : vector<16x1xf32> to vector<16x128xf32>
    %452 = arith.subf %448, %451 : vector<16x128xf32>
    %453 = math.exp %452 : vector<16x128xf32>
    %cst_74 = arith.constant dense<0.000000e+00> : vector<16xf32>
    %454 = vector.multi_reduction <add>, %453, %cst_74 [1] : vector<16x128xf32> to vector<16xf32>
    %455 = vector.shape_cast %454 : vector<16xf32> to vector<16x1xf32>
    %456 = math.log %455 : vector<16x1xf32>
    %457 = vector.broadcast %456 : vector<16x1xf32> to vector<16x128xf32>
    %458 = arith.subf %452, %457 : vector<16x128xf32>
    %459 = vector.shape_cast %458 : vector<16x128xf32> to vector<2x8x128xf32>
    %460 = tpu.reduce_index %459 {axis = 2 : i32, kind = #tpu.reduction_kind<arg_max>} : vector<2x8x128xf32> -> vector<2x8xi32>
    %461 = arith.sitofp %460 : vector<2x8xi32> to vector<2x8xf32>
    %462 = vector.shape_cast %248 : vector<2x1xf32> to vector<2x1xf32>
    %463 = vector.broadcast %462 : vector<2x1xf32> to vector<2x128xf32>
    %cst_75 = arith.constant 0.000000e+00 : f32
    %464 = vector.broadcast %cst_75 : f32 to vector<2x120xf32>
    %465 = tpu.concatenate %461, %464 in 1 : vector<2x8xf32>, vector<2x120xf32> -> vector<2x128xf32>
    %cst_76 = arith.constant 0.000000e+00 : f32
    %466 = vector.broadcast %cst_76 : f32 to vector<4x128xf32>
    %467 = tpu.concatenate %458, %463, %465, %466 in 0 : vector<16x128xf32>, vector<2x128xf32>, vector<2x128xf32>, vector<4x128xf32> -> vector<24x128xf32>
    %c0_77 = arith.constant 0 : index
    %c0_78 = arith.constant 0 : index
    %468 = vector.load %arg2[%c0_77, %c0_78] : memref<24x128xf32, #tpu.memory_space<vmem>>, vector<24x128xf32>
    tpu.vector_store %arg2[%c0_77, %c0_78], %467 {strides = array<i32>} : memref<24x128xf32, #tpu.memory_space<vmem>>, vector<24x128xf32>,
    return
  }
}

</mosaic_0001>

<llo_original>
// kernel: nao_forward.1
$region0: #{nao_forward.1}
  #allocation0 [shape = 'u32[]', space=smem, size = 0x4, offset = 0x4, fixed_abs, tag = 'smem constant byte address 0x4 - core index']
  #allocation1 [shape = 'u32[144,128]{1,0:T(1,128)}', space=vmem, size = 0x12000, scoped, tag = 'internal scratch']
  %s0 = inlined_call_operand.vmem [shape: s32[32,1], index: 0, kind: input, shape index: {}]
  %s1 = inlined_call_operand.hbm [shape: f32[264,128], index: 1, kind: input, shape index: {}]
  %s2 = inlined_call_operand.vmem [shape: f32[24,128], index: 2, kind: output, shape index: {}]
  %s3 = sld [smem:[#allocation0]]
  $region22: #{nao_forward.1} parent=0
    _
  %s5 = ssub.s32 1, %s3
  %s6 = scalar_select 0, %s5, %s3
  $region1: #{nao_forward.1} parent=0
    #allocation2 [shape = 'u8[135168]{0}', space=vmem, size = 0x21000, scoped, tag = 'input window, operand 1, single buffered']
    #allocation3 [shape = 's32[1]{0}', space=sflag, size = 0x4, scoped, tag = 'scoped memory for nao_forward.1']
    %7 = vsyncpa [#allocation3], 0
    // Predicated region
    $region2: #{nao_forward.1} parent=1 // pred_check
      _
    $region3: #{nao_forward.1} parent=1 // pred_check_branch
      %9 = sbr.rel (0) target = $region5
    $region4: #{nao_forward.1} parent=1 // pred_region
      _
    $region5: #{nao_forward.1} parent=1 // pred_fallthru
      _
    // Predicated region
    $region6: #{nao_forward.1} parent=1 // pred_check
      _
    $region7: #{nao_forward.1} parent=1 // pred_check_branch
      %11 = sbr.rel (0) target = $region9
    $region8: #{nao_forward.1} parent=1 // pred_region
      %s13 = ssub.s32 4224, 4224
      %14 = vsyncadd [#allocation3], %s13
      %s15 = sshll.u32 [#allocation2], 4
      %s16 = int_to_ptr.vmem [resolvable:$true] %s15
      %21 = dma.hbm_to_vmem [thread:$0]  %s1, 4224, %s16, [#allocation3], 128, 128, 8
    $region9: #{nao_forward.1} parent=1 // pred_fallthru
      _
    // Predicated region
    $region10: #{nao_forward.1} parent=1 // pred_check
      _
    $region11: #{nao_forward.1} parent=1 // pred_check_branch
      %23 = sbr.rel (0) target = $region13
    $region12: #{nao_forward.1} parent=1 // pred_region
      %24 = dma.done [#allocation3], 4224
    $region13: #{nao_forward.1} parent=1 // pred_fallthru
      _
    %v25 = vld [vmem:[%s0] sm:$0xff]
    %v26 = vld [vmem:[%s0 + $0x8] sm:$0xff]
    %v27 = vld [vmem:[%s0 + $0x10] sm:$0xff]
    %v28 = vld [vmem:[%s0 + $0x18] sm:$0xff]
    %v29 = vlaneseq
    %v30 = vand.u32 %v29, 127
    %31 = vset.pattern.permute.xlu0 0
    %32 = vperm.xlu0 %31, %v25
    %v33 = vpop.permute.xlu0 %32
    %34 = vset.pattern.permute.xlu0 0
    %35 = vperm.xlu0 %34, %v26
    %v36 = vpop.permute.xlu0 %35
    %37 = vset.pattern.permute.xlu0 0
    %38 = vperm.xlu0 %37, %v27
    %v39 = vpop.permute.xlu0 %38
    %40 = vset.pattern.permute.xlu0 0
    %41 = vperm.xlu0 %40, %v28
    %v42 = vpop.permute.xlu0 %41
    %vm43 = vcmp.eq.s32.totalorder %v33, %v30
    %vm44 = vcmp.eq.s32.totalorder %v36, %v30
    %vm45 = vcmp.eq.s32.totalorder %v39, %v30
    %vm46 = vcmp.eq.s32.totalorder %v42, %v30
    %v47 = vsel %vm43, 1, 0
    %v48 = vsel %vm44, 1, 0
    %v49 = vsel %vm45, 1, 0
    %v50 = vsel %vm46, 1, 0
    %v51 = vcvt.s32.f32 %v47
    %v52 = vcvt.s32.f32 %v48
    %v53 = vcvt.s32.f32 %v49
    %v54 = vcvt.s32.f32 %v50
    %v55 = vld [vmem:[#allocation2] sm:$0xff]
    %v56 = vld [vmem:[#allocation2 + $0x8] sm:$0xff]
    %vm57 = vcmask 130048
    %v59 = vsel %vm57, %v51, 0
    %v62 = vsel %vm57, %v52, 0
    %64 = vmatprep.subr.mxu0 0.0
    %65 = vmatpush1.msra.mxu0 %v55
    %66 = vmatprep.subr.mxu0 0.0
    %67 = vmatpush1.msra.mxu0 %v56
    %68 = vmatprep.subr.mxu0 0.0
    %69 = vmatpush1.msra.mxu0 0.0
    %70 = vmatprep.subr.mxu0 0.0
    %71 = vmatpush1.msra.mxu0 0.0
    %72 = vmatprep.subr.mxu0 0.0
    %73 = vmatpush1.msra.mxu0 0.0
    %74 = vmatprep.subr.mxu0 0.0
    %75 = vmatpush1.msra.mxu0 0.0
    %76 = vmatprep.subr.mxu0 0.0
    %77 = vmatpush1.msra.mxu0 0.0
    %78 = vmatprep.subr.mxu0 0.0
    %79 = vmatpush1.msra.mxu0 0.0
    %80 = vmatprep.subr.mxu0 0.0
    %81 = vmatpush1.msra.mxu0 0.0
    %82 = vmatprep.subr.mxu0 0.0
    %83 = vmatpush1.msra.mxu0 0.0
    %84 = vmatprep.subr.mxu0 0.0
    %85 = vmatpush1.msra.mxu0 0.0
    %86 = vmatprep.subr.mxu0 0.0
    %87 = vmatpush1.msra.mxu0 0.0
    %88 = vmatprep.subr.mxu0 0.0
    %89 = vmatpush1.msra.mxu0 0.0
    %90 = vmatprep.subr.mxu0 0.0
    %91 = vmatpush1.msra.mxu0 0.0
    %92 = vmatprep.subr.mxu0 0.0
    %93 = vmatpush1.msra.mxu0 0.0
    %94 = vmatprep.subr.mxu0 0.0
    %95 = vmatpush1.msra.mxu0 0.0
    %96 = vmatprep.subr.mxu0 0.0
    %97 = vmatpush1.msra.mxu0 0.0
    %98 = vmatprep.subr.mxu0 0.0
    %99 = vmatpush1.msra.mxu0 0.0
    %100 = vmatprep.subr.mxu0 0.0
    %101 = vmatpush1.msra.mxu0 0.0
    %102 = vmatprep.subr.mxu0 0.0
    %103 = vmatpush1.msra.mxu0 0.0
    %104 = vmatprep.subr.mxu0 0.0
    %105 = vmatpush1.msra.mxu0 0.0
    %106 = vmatprep.subr.mxu0 0.0
    %107 = vmatpush1.msra.mxu0 0.0
    %108 = vmatprep.subr.mxu0 0.0
    %109 = vmatpush1.msra.mxu0 0.0
    %110 = vmatprep.subr.mxu0 0.0
    %111 = vmatpush1.msra.mxu0 0.0
    %112 = vmatprep.subr.mxu0 0.0
    %113 = vmatpush1.msra.mxu0 0.0
    %114 = vmatprep.subr.mxu0 0.0
    %115 = vmatpush1.msra.mxu0 0.0
    %116 = vmatprep.subr.mxu0 0.0
    %117 = vmatpush1.msra.mxu0 0.0
    %118 = vmatprep.subr.mxu0 0.0
    %119 = vmatpush1.msra.mxu0 0.0
    %120 = vmatprep.subr.mxu0 0.0
    %121 = vmatpush1.msra.mxu0 0.0
    %122 = vmatprep.subr.mxu0 0.0
    %123 = vmatpush1.msra.mxu0 0.0
    %124 = vmatprep.subr.mxu0 0.0
    %125 = vmatpush1.msra.mxu0 0.0
    %126 = vmatprep.subr.mxu0 0.0
    %127 = vmatpush1.msra.mxu0 0.0
    %128 = vmatprep.mubr.f32.mxu0 0.0
    %129 = vmatmul.mubr.f32.gmra.mrb[0].mxu0 %v59
    %v130 = vpop.f32.mrb[0].mxu0
    %v131 = vadd.f32 0.0, %v130
    %v132 = vpop.f32.mrb[0].mxu0
    %133 = vmatprep.mubr.f32.mxu0 0.0
    %134 = vmatmul.mubr.f32.gmra.mrb[0].mxu0 %v62
    %v135 = vpop.f32.mrb[0].mxu0
    %v136 = vadd.f32 0.0, %v135
    %v137 = vpop.f32.mrb[0].mxu0
    %138 = vdwg.mxu0
    %v139 = vld [vmem:[#allocation2 + $0x10] sm:$0xff]
    %v140 = vld [vmem:[#allocation2 + $0x18] sm:$0xff]
    %v142 = vsel %vm57, %v53, 0
    %v145 = vsel %vm57, %v54, 0
    %147 = vmatprep.subr.mxu0 0.0
    %148 = vmatpush1.msra.mxu0 %v139
    %149 = vmatprep.subr.mxu0 0.0
    %150 = vmatpush1.msra.mxu0 %v140
    %151 = vmatprep.subr.mxu0 0.0
    %152 = vmatpush1.msra.mxu0 0.0
    %153 = vmatprep.subr.mxu0 0.0
    %154 = vmatpush1.msra.mxu0 0.0
    %155 = vmatprep.subr.mxu0 0.0
    %156 = vmatpush1.msra.mxu0 0.0
    %157 = vmatprep.subr.mxu0 0.0
    %158 = vmatpush1.msra.mxu0 0.0
    %159 = vmatprep.subr.mxu0 0.0
    %160 = vmatpush1.msra.mxu0 0.0
    %161 = vmatprep.subr.mxu0 0.0
    %162 = vmatpush1.msra.mxu0 0.0
    %163 = vmatprep.subr.mxu0 0.0
    %164 = vmatpush1.msra.mxu0 0.0
    %165 = vmatprep.subr.mxu0 0.0
    %166 = vmatpush1.msra.mxu0 0.0
    %167 = vmatprep.subr.mxu0 0.0
    %168 = vmatpush1.msra.mxu0 0.0
    %169 = vmatprep.subr.mxu0 0.0
    %170 = vmatpush1.msra.mxu0 0.0
    %171 = vmatprep.subr.mxu0 0.0
    %172 = vmatpush1.msra.mxu0 0.0
    %173 = vmatprep.subr.mxu0 0.0
    %174 = vmatpush1.msra.mxu0 0.0
    %175 = vmatprep.subr.mxu0 0.0
    %176 = vmatpush1.msra.mxu0 0.0
    %177 = vmatprep.subr.mxu0 0.0
    %178 = vmatpush1.msra.mxu0 0.0
    %179 = vmatprep.subr.mxu0 0.0
    %180 = vmatpush1.msra.mxu0 0.0
    %181 = vmatprep.subr.mxu0 0.0
    %182 = vmatpush1.msra.mxu0 0.0
    %183 = vmatprep.subr.mxu0 0.0
    %184 = vmatpush1.msra.mxu0 0.0
    %185 = vmatprep.subr.mxu0 0.0
    %186 = vmatpush1.msra.mxu0 0.0
    %187 = vmatprep.subr.mxu0 0.0
    %188 = vmatpush1.msra.mxu0 0.0
    %189 = vmatprep.subr.mxu0 0.0
    %190 = vmatpush1.msra.mxu0 0.0
    %191 = vmatprep.subr.mxu0 0.0
    %192 = vmatpush1.msra.mxu0 0.0
    %193 = vmatprep.subr.mxu0 0.0
    %194 = vmatpush1.msra.mxu0 0.0
    %195 = vmatprep.subr.mxu0 0.0
    %196 = vmatpush1.msra.mxu0 0.0
    %197 = vmatprep.subr.mxu0 0.0
    %198 = vmatpush1.msra.mxu0 0.0
    %199 = vmatprep.subr.mxu0 0.0
    %200 = vmatpush1.msra.mxu0 0.0
    %201 = vmatprep.subr.mxu0 0.0
    %202 = vmatpush1.msra.mxu0 0.0
    %203 = vmatprep.subr.mxu0 0.0
    %204 = vmatpush1.msra.mxu0 0.0
    %205 = vmatprep.subr.mxu0 0.0
    %206 = vmatpush1.msra.mxu0 0.0
    %207 = vmatprep.subr.mxu0 0.0
    %208 = vmatpush1.msra.mxu0 0.0
    %209 = vmatprep.subr.mxu0 0.0
    %210 = vmatpush1.msra.mxu0 0.0
    %211 = vmatprep.mubr.f32.mxu0 0.0
    %212 = vmatmul.mubr.f32.gmra.mrb[0].mxu0 %v142
    %v213 = vpop.f32.mrb[0].mxu0
    %v214 = vadd.f32 0.0, %v213
    %v215 = vpop.f32.mrb[0].mxu0
    %216 = vmatprep.mubr.f32.mxu0 0.0
    %217 = vmatmul.mubr.f32.gmra.mrb[0].mxu0 %v145
    %v218 = vpop.f32.mrb[0].mxu0
    %v219 = vadd.f32 0.0, %v218
    %v220 = vpop.f32.mrb[0].mxu0
    %221 = vdwg.mxu0
    %v222 = vld [vmem:[#allocation2 + $0x20] sm:$0xff]
    %v223 = vld [vmem:[#allocation2 + $0x28] sm:$0xff]
    %v224 = vld [vmem:[#allocation2 + $0x30] sm:$0xff]
    %v225 = vld [vmem:[#allocation2 + $0x38] sm:$0xff]
    %vm226 = vcmask 261120
    %v228 = vsel %vm226, 0.0, 0
    %230 = vmatprep.subr.mxu0 0.0
    %231 = vmatpush1.msra.mxu0 %v222
    %232 = vmatprep.subr.mxu0 0.0
    %233 = vmatpush1.msra.mxu0 %v223
    %234 = vmatprep.subr.mxu0 0.0
    %235 = vmatpush1.msra.mxu0 %v224
    %236 = vmatprep.subr.mxu0 0.0
    %237 = vmatpush1.msra.mxu0 %v225
    %238 = vmatprep.subr.mxu0 0.0
    %239 = vmatpush1.msra.mxu0 0.0
    %240 = vmatprep.subr.mxu0 0.0
    %241 = vmatpush1.msra.mxu0 0.0
    %242 = vmatprep.subr.mxu0 0.0
    %243 = vmatpush1.msra.mxu0 0.0
    %244 = vmatprep.subr.mxu0 0.0
    %245 = vmatpush1.msra.mxu0 0.0
    %246 = vmatprep.subr.mxu0 0.0
    %247 = vmatpush1.msra.mxu0 0.0
    %248 = vmatprep.subr.mxu0 0.0
    %249 = vmatpush1.msra.mxu0 0.0
    %250 = vmatprep.subr.mxu0 0.0
    %251 = vmatpush1.msra.mxu0 0.0
    %252 = vmatprep.subr.mxu0 0.0
    %253 = vmatpush1.msra.mxu0 0.0
    %254 = vmatprep.subr.mxu0 0.0
    %255 = vmatpush1.msra.mxu0 0.0
    %256 = vmatprep.subr.mxu0 0.0
    %257 = vmatpush1.msra.mxu0 0.0
    %258 = vmatprep.subr.mxu0 0.0
    %259 = vmatpush1.msra.mxu0 0.0
    %260 = vmatprep.subr.mxu0 0.0
    %261 = vmatpush1.msra.mxu0 0.0
    %262 = vmatprep.subr.mxu0 0.0
    %263 = vmatpush1.msra.mxu0 0.0
    %264 = vmatprep.subr.mxu0 0.0
    %265 = vmatpush1.msra.mxu0 0.0
    %266 = vmatprep.subr.mxu0 0.0
    %267 = vmatpush1.msra.mxu0 0.0
    %268 = vmatprep.subr.mxu0 0.0
    %269 = vmatpush1.msra.mxu0 0.0
    %270 = vmatprep.subr.mxu0 0.0
    %271 = vmatpush1.msra.mxu0 0.0
    %272 = vmatprep.subr.mxu0 0.0
    %273 = vmatpush1.msra.mxu0 0.0
    %274 = vmatprep.subr.mxu0 0.0
    %275 = vmatpush1.msra.mxu0 0.0
    %276 = vmatprep.subr.mxu0 0.0
    %277 = vmatpush1.msra.mxu0 0.0
    %278 = vmatprep.subr.mxu0 0.0
    %279 = vmatpush1.msra.mxu0 0.0
    %280 = vmatprep.subr.mxu0 0.0
    %281 = vmatpush1.msra.mxu0 0.0
    %282 = vmatprep.subr.mxu0 0.0
    %283 = vmatpush1.msra.mxu0 0.0
    %284 = vmatprep.subr.mxu0 0.0
    %285 = vmatpush1.msra.mxu0 0.0
    %286 = vmatprep.subr.mxu0 0.0
    %287 = vmatpush1.msra.mxu0 0.0
    %288 = vmatprep.subr.mxu0 0.0
    %289 = vmatpush1.msra.mxu0 0.0
    %290 = vmatprep.subr.mxu0 0.0
    %291 = vmatpush1.msra.mxu0 0.0
    %292 = vmatprep.subr.mxu0 0.0
    %293 = vmatpush1.msra.mxu0 0.0
    %294 = vmatprep.mubr.f32.mxu0 0.0
    %295 = vmatmul.mubr.f32.gmra.mrb[0].mxu0 %v228
    %v296 = vpop.f32.mrb[0].mxu0
    %v297 = vadd.f32 %v131, %v296
    %v298 = vpop.f32.mrb[0].mxu0
    %299 = vdwg.mxu0
    %v300 = vxor.u32 %v297, 2147483648
    %v301 = vmul.f32 %v300, 1.442695
    %v302 = vpow.pop %v301
    %v303 = vadd.f32 %v302, 1.0
    %v304 = vrcp.pop %v303
    %v305 = vmul.f32 1.0, %v304
    %v306 = vmul.f32 %v305, 0.0
    %v307 = vtanh.pop %v297
    %309 = vrot.lane.b32.xlu0 %v307, 64
    %v310 = vpop.permute.xlu0 %309
    %v312 = vmul.f32 %v305, %v310
    %314 = vrot.lane.b32.xlu0 %v312, 32
    %v315 = vpop.permute.xlu0 %314
    %v317 = vadd.f32 %v306, %v315
    %v318 = vtanh.pop %v317
    %320 = vrot.lane.b32.xlu0 %v318, 64
    %v321 = vpop.permute.xlu0 %320
    %v323 = vmul.f32 %v305, %v321
    %325 = vrot.lane.b32.xlu0 %v323, 32
    %v326 = vpop.permute.xlu0 %325
    %v328 = vrot.slane %v131, 2
    %v330 = vsel %vm226, %v326, 0
    %332 = vmatprep.subr.mxu0 0.0
    %333 = vmatpush1.msra.mxu0 %v222
    %334 = vmatprep.subr.mxu0 0.0
    %335 = vmatpush1.msra.mxu0 %v223
    %336 = vmatprep.subr.mxu0 0.0
    %337 = vmatpush1.msra.mxu0 %v224
    %338 = vmatprep.subr.mxu0 0.0
    %339 = vmatpush1.msra.mxu0 %v225
    %340 = vmatprep.subr.mxu0 0.0
    %341 = vmatpush1.msra.mxu0 0.0
    %342 = vmatprep.subr.mxu0 0.0
    %343 = vmatpush1.msra.mxu0 0.0
    %344 = vmatprep.subr.mxu0 0.0
    %345 = vmatpush1.msra.mxu0 0.0
    %346 = vmatprep.subr.mxu0 0.0
    %347 = vmatpush1.msra.mxu0 0.0
    %348 = vmatprep.subr.mxu0 0.0
    %349 = vmatpush1.msra.mxu0 0.0
    %350 = vmatprep.subr.mxu0 0.0
    %351 = vmatpush1.msra.mxu0 0.0
    %352 = vmatprep.subr.mxu0 0.0
    %353 = vmatpush1.msra.mxu0 0.0
    %354 = vmatprep.subr.mxu0 0.0
    %355 = vmatpush1.msra.mxu0 0.0
    %356 = vmatprep.subr.mxu0 0.0
    %357 = vmatpush1.msra.mxu0 0.0
    %358 = vmatprep.subr.mxu0 0.0
    %359 = vmatpush1.msra.mxu0 0.0
    %360 = vmatprep.subr.mxu0 0.0
    %361 = vmatpush1.msra.mxu0 0.0
    %362 = vmatprep.subr.mxu0 0.0
    %363 = vmatpush1.msra.mxu0 0.0
    %364 = vmatprep.subr.mxu0 0.0
    %365 = vmatpush1.msra.mxu0 0.0
    %366 = vmatprep.subr.mxu0 0.0
    %367 = vmatpush1.msra.mxu0 0.0
    %368 = vmatprep.subr.mxu0 0.0
    %369 = vmatpush1.msra.mxu0 0.0
    %370 = vmatprep.subr.mxu0 0.0
    %371 = vmatpush1.msra.mxu0 0.0
    %372 = vmatprep.subr.mxu0 0.0
    %373 = vmatpush1.msra.mxu0 0.0
    %374 = vmatprep.subr.mxu0 0.0
    %375 = vmatpush1.msra.mxu0 0.0
    %376 = vmatprep.subr.mxu0 0.0
    %377 = vmatpush1.msra.mxu0 0.0
    %378 = vmatprep.subr.mxu0 0.0
    %379 = vmatpush1.msra.mxu0 0.0
    %380 = vmatprep.subr.mxu0 0.0
    %381 = vmatpush1.msra.mxu0 0.0
    %382 = vmatprep.subr.mxu0 0.0
    %383 = vmatpush1.msra.mxu0 0.0
    %384 = vmatprep.subr.mxu0 0.0
    %385 = vmatpush1.msra.mxu0 0.0
    %386 = vmatprep.subr.mxu0 0.0
    %387 = vmatpush1.msra.mxu0 0.0
    %388 = vmatprep.subr.mxu0 0.0
    %389 = vmatpush1.msra.mxu0 0.0
    %390 = vmatprep.subr.mxu0 0.0
    %391 = vmatpush1.msra.mxu0 0.0
    %392 = vmatprep.subr.mxu0 0.0
    %393 = vmatpush1.msra.mxu0 0.0
    %394 = vmatprep.subr.mxu0 0.0
    %395 = vmatpush1.msra.mxu0 0.0
    %396 = vmatprep.mubr.f32.mxu0 0.0
    %397 = vmatmul.mubr.f32.gmra.mrb[0].mxu0 %v330
    %v398 = vpop.f32.mrb[0].mxu0
    %v399 = vadd.f32 %v328, %v398
    %v400 = vpop.f32.mrb[0].mxu0
    %401 = vdwg.mxu0
    %v402 = vxor.u32 %v399, 2147483648
    %v403 = vmul.f32 %v402, 1.442695
    %v404 = vpow.pop %v403
    %v405 = vadd.f32 %v404, 1.0
    %v406 = vrcp.pop %v405
    %v407 = vmul.f32 1.0, %v406
    %v408 = vmul.f32 %v407, %v317
    %v409 = vtanh.pop %v399
    %411 = vrot.lane.b32.xlu0 %v409, 64
    %v412 = vpop.permute.xlu0 %411
    %v414 = vmul.f32 %v407, %v412
    %416 = vrot.lane.b32.xlu0 %v414, 32
    %v417 = vpop.permute.xlu0 %416
    %v419 = vadd.f32 %v408, %v417
    %v420 = vtanh.pop %v419
    %422 = vrot.lane.b32.xlu0 %v420, 64
    %v423 = vpop.permute.xlu0 %422
    %v425 = vmul.f32 %v407, %v423
    %427 = vrot.lane.b32.xlu0 %v425, 32
    %v428 = vpop.permute.xlu0 %427
    %v429 = vrot.slane %v131, 4
    %v431 = vsel %vm226, %v428, 0
    %433 = vmatprep.subr.mxu0 0.0
    %434 = vmatpush1.msra.mxu0 %v222
    %435 = vmatprep.subr.mxu0 0.0
    %436 = vmatpush1.msra.mxu0 %v223
    %437 = vmatprep.subr.mxu0 0.0
    %438 = vmatpush1.msra.mxu0 %v224
    %439 = vmatprep.subr.mxu0 0.0
    %440 = vmatpush1.msra.mxu0 %v225
    %441 = vmatprep.subr.mxu0 0.0
    %442 = vmatpush1.msra.mxu0 0.0
    %443 = vmatprep.subr.mxu0 0.0
    %444 = vmatpush1.msra.mxu0 0.0
    %445 = vmatprep.subr.mxu0 0.0
    %446 = vmatpush1.msra.mxu0 0.0
    %447 = vmatprep.subr.mxu0 0.0
    %448 = vmatpush1.msra.mxu0 0.0
    %449 = vmatprep.subr.mxu0 0.0
    %450 = vmatpush1.msra.mxu0 0.0
    %451 = vmatprep.subr.mxu0 0.0
    %452 = vmatpush1.msra.mxu0 0.0
    %453 = vmatprep.subr.mxu0 0.0
    %454 = vmatpush1.msra.mxu0 0.0
    %455 = vmatprep.subr.mxu0 0.0
    %456 = vmatpush1.msra.mxu0 0.0
    %457 = vmatprep.subr.mxu0 0.0
    %458 = vmatpush1.msra.mxu0 0.0
    %459 = vmatprep.subr.mxu0 0.0
    %460 = vmatpush1.msra.mxu0 0.0
    %461 = vmatprep.subr.mxu0 0.0
    %462 = vmatpush1.msra.mxu0 0.0
    %463 = vmatprep.subr.mxu0 0.0
    %464 = vmatpush1.msra.mxu0 0.0
    %465 = vmatprep.subr.mxu0 0.0
    %466 = vmatpush1.msra.mxu0 0.0
    %467 = vmatprep.subr.mxu0 0.0
    %468 = vmatpush1.msra.mxu0 0.0
    %469 = vmatprep.subr.mxu0 0.0
    %470 = vmatpush1.msra.mxu0 0.0
    %471 = vmatprep.subr.mxu0 0.0
    %472 = vmatpush1.msra.mxu0 0.0
    %473 = vmatprep.subr.mxu0 0.0
    %474 = vmatpush1.msra.mxu0 0.0
    %475 = vmatprep.subr.mxu0 0.0
    %476 = vmatpush1.msra.mxu0 0.0
    %477 = vmatprep.subr.mxu0 0.0
    %478 = vmatpush1.msra.mxu0 0.0
    %479 = vmatprep.subr.mxu0 0.0
    %480 = vmatpush1.msra.mxu0 0.0
    %481 = vmatprep.subr.mxu0 0.0
    %482 = vmatpush1.msra.mxu0 0.0
    %483 = vmatprep.subr.mxu0 0.0
    %484 = vmatpush1.msra.mxu0 0.0
    %485 = vmatprep.subr.mxu0 0.0
    %486 = vmatpush1.msra.mxu0 0.0
    %487 = vmatprep.subr.mxu0 0.0
    %488 = vmatpush1.msra.mxu0 0.0
    %489 = vmatprep.subr.mxu0 0.0
    %490 = vmatpush1.msra.mxu0 0.0
    %491 = vmatprep.subr.mxu0 0.0
    %492 = vmatpush1.msra.mxu0 0.0
    %493 = vmatprep.subr.mxu0 0.0
    %494 = vmatpush1.msra.mxu0 0.0
    %495 = vmatprep.subr.mxu0 0.0
    %496 = vmatpush1.msra.mxu0 0.0
    %497 = vmatprep.mubr.f32.mxu0 0.0
    %498 = vmatmul.mubr.f32.gmra.mrb[0].mxu0 %v431
    %v499 = vpop.f32.mrb[0].mxu0
    %v500 = vadd.f32 %v429, %v499
    %v501 = vpop.f32.mrb[0].mxu0
    %502 = vdwg.mxu0
    %v503 = vxor.u32 %v500, 2147483648
    %v504 = vmul.f32 %v503, 1.442695
    %v505 = vpow.pop %v504
    %v506 = vadd.f32 %v505, 1.0
    %v507 = vrcp.pop %v506
    %v508 = vmul.f32 1.0, %v507
    %v509 = vmul.f32 %v508, %v419
    %v510 = vtanh.pop %v500
    %512 = vrot.lane.b32.xlu0 %v510, 64
    %v513 = vpop.permute.xlu0 %512
    %v515 = vmul.f32 %v508, %v513
    %517 = vrot.lane.b32.xlu0 %v515, 32
    %v518 = vpop.permute.xlu0 %517
    %v520 = vadd.f32 %v509, %v518
    %v521 = vtanh.pop %v520
    %523 = vrot.lane.b32.xlu0 %v521, 64
    %v524 = vpop.permute.xlu0 %523
    %v526 = vmul.f32 %v508, %v524
    %528 = vrot.lane.b32.xlu0 %v526, 32
    %v529 = vpop.permute.xlu0 %528
    %v530 = vrot.slane %v131, 6
    %v532 = vsel %vm226, %v529, 0
    %534 = vmatprep.subr.mxu0 0.0
    %535 = vmatpush1.msra.mxu0 %v222
    %536 = vmatprep.subr.mxu0 0.0
    %537 = vmatpush1.msra.mxu0 %v223
    %538 = vmatprep.subr.mxu0 0.0
    %539 = vmatpush1.msra.mxu0 %v224
    %540 = vmatprep.subr.mxu0 0.0
    %541 = vmatpush1.msra.mxu0 %v225
    %542 = vmatprep.subr.mxu0 0.0
    %543 = vmatpush1.msra.mxu0 0.0
    %544 = vmatprep.subr.mxu0 0.0
    %545 = vmatpush1.msra.mxu0 0.0
    %546 = vmatprep.subr.mxu0 0.0
    %547 = vmatpush1.msra.mxu0 0.0
    %548 = vmatprep.subr.mxu0 0.0
    %549 = vmatpush1.msra.mxu0 0.0
    %550 = vmatprep.subr.mxu0 0.0
    %551 = vmatpush1.msra.mxu0 0.0
    %552 = vmatprep.subr.mxu0 0.0
    %553 = vmatpush1.msra.mxu0 0.0
    %554 = vmatprep.subr.mxu0 0.0
    %555 = vmatpush1.msra.mxu0 0.0
    %556 = vmatprep.subr.mxu0 0.0
    %557 = vmatpush1.msra.mxu0 0.0
    %558 = vmatprep.subr.mxu0 0.0
    %559 = vmatpush1.msra.mxu0 0.0
    %560 = vmatprep.subr.mxu0 0.0
    %561 = vmatpush1.msra.mxu0 0.0
    %562 = vmatprep.subr.mxu0 0.0
    %563 = vmatpush1.msra.mxu0 0.0
    %564 = vmatprep.subr.mxu0 0.0
    %565 = vmatpush1.msra.mxu0 0.0
    %566 = vmatprep.subr.mxu0 0.0
    %567 = vmatpush1.msra.mxu0 0.0
    %568 = vmatprep.subr.mxu0 0.0
    %569 = vmatpush1.msra.mxu0 0.0
    %570 = vmatprep.subr.mxu0 0.0
    %571 = vmatpush1.msra.mxu0 0.0
    %572 = vmatprep.subr.mxu0 0.0
    %573 = vmatpush1.msra.mxu0 0.0
    %574 = vmatprep.subr.mxu0 0.0
    %575 = vmatpush1.msra.mxu0 0.0
    %576 = vmatprep.subr.mxu0 0.0
    %577 = vmatpush1.msra.mxu0 0.0
    %578 = vmatprep.subr.mxu0 0.0
    %579 = vmatpush1.msra.mxu0 0.0
    %580 = vmatprep.subr.mxu0 0.0
    %581 = vmatpush1.msra.mxu0 0.0
    %582 = vmatprep.subr.mxu0 0.0
    %583 = vmatpush1.msra.mxu0 0.0
    %584 = vmatprep.subr.mxu0 0.0
    %585 = vmatpush1.msra.mxu0 0.0
    %586 = vmatprep.subr.mxu0 0.0
    %587 = vmatpush1.msra.mxu0 0.0
    %588 = vmatprep.subr.mxu0 0.0
    %589 = vmatpush1.msra.mxu0 0.0
    %590 = vmatprep.subr.mxu0 0.0
    %591 = vmatpush1.msra.mxu0 0.0
    %592 = vmatprep.subr.mxu0 0.0
    %593 = vmatpush1.msra.mxu0 0.0
    %594 = vmatprep.subr.mxu0 0.0
    %595 = vmatpush1.msra.mxu0 0.0
    %596 = vmatprep.subr.mxu0 0.0
    %597 = vmatpush1.msra.mxu0 0.0
    %598 = vmatprep.mubr.f32.mxu0 0.0
    %599 = vmatmul.mubr.f32.gmra.mrb[0].mxu0 %v532
    %v600 = vpop.f32.mrb[0].mxu0
    %v601 = vadd.f32 %v530, %v600
    %v602 = vpop.f32.mrb[0].mxu0
    %603 = vdwg.mxu0
    %v604 = vxor.u32 %v601, 2147483648
    %v605 = vmul.f32 %v604, 1.442695
    %v606 = vpow.pop %v605
    %v607 = vadd.f32 %v606, 1.0
    %v608 = vrcp.pop %v607
    %v609 = vmul.f32 1.0, %v608
    %v610 = vmul.f32 %v609, %v520
    %v611 = vtanh.pop %v601
    %613 = vrot.lane.b32.xlu0 %v611, 64
    %v614 = vpop.permute.xlu0 %613
    %v616 = vmul.f32 %v609, %v614
    %618 = vrot.lane.b32.xlu0 %v616, 32
    %v619 = vpop.permute.xlu0 %618
    %v621 = vadd.f32 %v610, %v619
    %v622 = vtanh.pop %v621
    %624 = vrot.lane.b32.xlu0 %v622, 64
    %v625 = vpop.permute.xlu0 %624
    %v627 = vmul.f32 %v609, %v625
    %629 = vrot.lane.b32.xlu0 %v627, 32
    %v630 = vpop.permute.xlu0 %629
    %v631 = vsel %vm226, %v630, 0
    %633 = vmatprep.subr.mxu0 0.0
    %634 = vmatpush1.msra.mxu0 %v222
    %635 = vmatprep.subr.mxu0 0.0
    %636 = vmatpush1.msra.mxu0 %v223
    %637 = vmatprep.subr.mxu0 0.0
    %638 = vmatpush1.msra.mxu0 %v224
    %639 = vmatprep.subr.mxu0 0.0
    %640 = vmatpush1.msra.mxu0 %v225
    %641 = vmatprep.subr.mxu0 0.0
    %642 = vmatpush1.msra.mxu0 0.0
    %643 = vmatprep.subr.mxu0 0.0
    %644 = vmatpush1.msra.mxu0 0.0
    %645 = vmatprep.subr.mxu0 0.0
    %646 = vmatpush1.msra.mxu0 0.0
    %647 = vmatprep.subr.mxu0 0.0
    %648 = vmatpush1.msra.mxu0 0.0
    %649 = vmatprep.subr.mxu0 0.0
    %650 = vmatpush1.msra.mxu0 0.0
    %651 = vmatprep.subr.mxu0 0.0
    %652 = vmatpush1.msra.mxu0 0.0
    %653 = vmatprep.subr.mxu0 0.0
    %654 = vmatpush1.msra.mxu0 0.0
    %655 = vmatprep.subr.mxu0 0.0
    %656 = vmatpush1.msra.mxu0 0.0
    %657 = vmatprep.subr.mxu0 0.0
    %658 = vmatpush1.msra.mxu0 0.0
    %659 = vmatprep.subr.mxu0 0.0
    %660 = vmatpush1.msra.mxu0 0.0
    %661 = vmatprep.subr.mxu0 0.0
    %662 = vmatpush1.msra.mxu0 0.0
    %663 = vmatprep.subr.mxu0 0.0
    %664 = vmatpush1.msra.mxu0 0.0
    %665 = vmatprep.subr.mxu0 0.0
    %666 = vmatpush1.msra.mxu0 0.0
    %667 = vmatprep.subr.mxu0 0.0
    %668 = vmatpush1.msra.mxu0 0.0
    %669 = vmatprep.subr.mxu0 0.0
    %670 = vmatpush1.msra.mxu0 0.0
    %671 = vmatprep.subr.mxu0 0.0
    %672 = vmatpush1.msra.mxu0 0.0
    %673 = vmatprep.subr.mxu0 0.0
    %674 = vmatpush1.msra.mxu0 0.0
    %675 = vmatprep.subr.mxu0 0.0
    %676 = vmatpush1.msra.mxu0 0.0
    %677 = vmatprep.subr.mxu0 0.0
    %678 = vmatpush1.msra.mxu0 0.0
    %679 = vmatprep.subr.mxu0 0.0
    %680 = vmatpush1.msra.mxu0 0.0
    %681 = vmatprep.subr.mxu0 0.0
    %682 = vmatpush1.msra.mxu0 0.0
    %683 = vmatprep.subr.mxu0 0.0
    %684 = vmatpush1.msra.mxu0 0.0
    %685 = vmatprep.subr.mxu0 0.0
    %686 = vmatpush1.msra.mxu0 0.0
    %687 = vmatprep.subr.mxu0 0.0
    %688 = vmatpush1.msra.mxu0 0.0
    %689 = vmatprep.subr.mxu0 0.0
    %690 = vmatpush1.msra.mxu0 0.0
    %691 = vmatprep.subr.mxu0 0.0
    %692 = vmatpush1.msra.mxu0 0.0
    %693 = vmatprep.subr.mxu0 0.0
    %694 = vmatpush1.msra.mxu0 0.0
    %695 = vmatprep.subr.mxu0 0.0
    %696 = vmatpush1.msra.mxu0 0.0
    %697 = vmatprep.mubr.f32.mxu0 0.0
    %698 = vmatmul.mubr.f32.gmra.mrb[0].mxu0 %v631
    %v699 = vpop.f32.mrb[0].mxu0
    %v700 = vadd.f32 %v136, %v699
    %v701 = vpop.f32.mrb[0].mxu0
    %702 = vdwg.mxu0
    %v703 = vxor.u32 %v700, 2147483648
    %v704 = vmul.f32 %v703, 1.442695
    %v705 = vpow.pop %v704
    %v706 = vadd.f32 %v705, 1.0
    %v707 = vrcp.pop %v706
    %v708 = vmul.f32 1.0, %v707
    %v709 = vmul.f32 %v708, %v621
    %v710 = vtanh.pop %v700
    %712 = vrot.lane.b32.xlu0 %v710, 64
    %v713 = vpop.permute.xlu0 %712
    %v715 = vmul.f32 %v708, %v713
    %717 = vrot.lane.b32.xlu0 %v715, 32
    %v718 = vpop.permute.xlu0 %717
    %v720 = vadd.f32 %v709, %v718
    %v721 = vtanh.pop %v720
    %723 = vrot.lane.b32.xlu0 %v721, 64
    %v724 = vpop.permute.xlu0 %723
    %v726 = vmul.f32 %v708, %v724
    %728 = vrot.lane.b32.xlu0 %v726, 32
    %v729 = vpop.permute.xlu0 %728
    %v731 = vrot.slane %v136, 2
    %v733 = vsel %vm226, %v729, 0
    %735 = vmatprep.subr.mxu0 0.0
    %736 = vmatpush1.msra.mxu0 %v222
    %737 = vmatprep.subr.mxu0 0.0
    %738 = vmatpush1.msra.mxu0 %v223
    %739 = vmatprep.subr.mxu0 0.0
    %740 = vmatpush1.msra.mxu0 %v224
    %741 = vmatprep.subr.mxu0 0.0
    %742 = vmatpush1.msra.mxu0 %v225
    %743 = vmatprep.subr.mxu0 0.0
    %744 = vmatpush1.msra.mxu0 0.0
    %745 = vmatprep.subr.mxu0 0.0
    %746 = vmatpush1.msra.mxu0 0.0
    %747 = vmatprep.subr.mxu0 0.0
    %748 = vmatpush1.msra.mxu0 0.0
    %749 = vmatprep.subr.mxu0 0.0
    %750 = vmatpush1.msra.mxu0 0.0
    %751 = vmatprep.subr.mxu0 0.0
    %752 = vmatpush1.msra.mxu0 0.0
    %753 = vmatprep.subr.mxu0 0.0
    %754 = vmatpush1.msra.mxu0 0.0
    %755 = vmatprep.subr.mxu0 0.0
    %756 = vmatpush1.msra.mxu0 0.0
    %757 = vmatprep.subr.mxu0 0.0
    %758 = vmatpush1.msra.mxu0 0.0
    %759 = vmatprep.subr.mxu0 0.0
    %760 = vmatpush1.msra.mxu0 0.0
    %761 = vmatprep.subr.mxu0 0.0
    %762 = vmatpush1.msra.mxu0 0.0
    %763 = vmatprep.subr.mxu0 0.0
    %764 = vmatpush1.msra.mxu0 0.0
    %765 = vmatprep.subr.mxu0 0.0
    %766 = vmatpush1.msra.mxu0 0.0
    %767 = vmatprep.subr.mxu0 0.0
    %768 = vmatpush1.msra.mxu0 0.0
    %769 = vmatprep.subr.mxu0 0.0
    %770 = vmatpush1.msra.mxu0 0.0
    %771 = vmatprep.subr.mxu0 0.0
    %772 = vmatpush1.msra.mxu0 0.0
    %773 = vmatprep.subr.mxu0 0.0
    %774 = vmatpush1.msra.mxu0 0.0
    %775 = vmatprep.subr.mxu0 0.0
    %776 = vmatpush1.msra.mxu0 0.0
    %777 = vmatprep.subr.mxu0 0.0
    %778 = vmatpush1.msra.mxu0 0.0
    %779 = vmatprep.subr.mxu0 0.0
    %780 = vmatpush1.msra.mxu0 0.0
    %781 = vmatprep.subr.mxu0 0.0
    %782 = vmatpush1.msra.mxu0 0.0
    %783 = vmatprep.subr.mxu0 0.0
    %784 = vmatpush1.msra.mxu0 0.0
    %785 = vmatprep.subr.mxu0 0.0
    %786 = vmatpush1.msra.mxu0 0.0
    %787 = vmatprep.subr.mxu0 0.0
    %788 = vmatpush1.msra.mxu0 0.0
    %789 = vmatprep.subr.mxu0 0.0
    %790 = vmatpush1.msra.mxu0 0.0
    %791 = vmatprep.subr.mxu0 0.0
    %792 = vmatpush1.msra.mxu0 0.0
    %793 = vmatprep.subr.mxu0 0.0
    %794 = vmatpush1.msra.mxu0 0.0
    %795 = vmatprep.subr.mxu0 0.0
    %796 = vmatpush1.msra.mxu0 0.0
    %797 = vmatprep.subr.mxu0 0.0
    %798 = vmatpush1.msra.mxu0 0.0
    %799 = vmatprep.mubr.f32.mxu0 0.0
    %800 = vmatmul.mubr.f32.gmra.mrb[0].mxu0 %v733
    %v801 = vpop.f32.mrb[0].mxu0
    %v802 = vadd.f32 %v731, %v801
    %v803 = vpop.f32.mrb[0].mxu0
    %804 = vdwg.mxu0
    %v805 = vxor.u32 %v802, 2147483648
    %v806 = vmul.f32 %v805, 1.442695
    %v807 = vpow.pop %v806
    %v808 = vadd.f32 %v807, 1.0
    %v809 = vrcp.pop %v808
    %v810 = vmul.f32 1.0, %v809
    %v811 = vmul.f32 %v810, %v720
    %v812 = vtanh.pop %v802
    %814 = vrot.lane.b32.xlu0 %v812, 64
    %v815 = vpop.permute.xlu0 %814
    %v817 = vmul.f32 %v810, %v815
    %819 = vrot.lane.b32.xlu0 %v817, 32
    %v820 = vpop.permute.xlu0 %819
    %v822 = vadd.f32 %v811, %v820
    %v823 = vtanh.pop %v822
    %825 = vrot.lane.b32.xlu0 %v823, 64
    %v826 = vpop.permute.xlu0 %825
    %v828 = vmul.f32 %v810, %v826
    %830 = vrot.lane.b32.xlu0 %v828, 32
    %v831 = vpop.permute.xlu0 %830
    %v832 = vrot.slane %v136, 4
    %v834 = vsel %vm226, %v831, 0
    %836 = vmatprep.subr.mxu0 0.0
    %837 = vmatpush1.msra.mxu0 %v222
    %838 = vmatprep.subr.mxu0 0.0
    %839 = vmatpush1.msra.mxu0 %v223
    %840 = vmatprep.subr.mxu0 0.0
    %841 = vmatpush1.msra.mxu0 %v224
    %842 = vmatprep.subr.mxu0 0.0
    %843 = vmatpush1.msra.mxu0 %v225
    %844 = vmatprep.subr.mxu0 0.0
    %845 = vmatpush1.msra.mxu0 0.0
    %846 = vmatprep.subr.mxu0 0.0
    %847 = vmatpush1.msra.mxu0 0.0
    %848 = vmatprep.subr.mxu0 0.0
    %849 = vmatpush1.msra.mxu0 0.0
    %850 = vmatprep.subr.mxu0 0.0
    %851 = vmatpush1.msra.mxu0 0.0
    %852 = vmatprep.subr.mxu0 0.0
    %853 = vmatpush1.msra.mxu0 0.0
    %854 = vmatprep.subr.mxu0 0.0
    %855 = vmatpush1.msra.mxu0 0.0
    %856 = vmatprep.subr.mxu0 0.0
    %857 = vmatpush1.msra.mxu0 0.0
    %858 = vmatprep.subr.mxu0 0.0
    %859 = vmatpush1.msra.mxu0 0.0
    %860 = vmatprep.subr.mxu0 0.0
    %861 = vmatpush1.msra.mxu0 0.0
    %862 = vmatprep.subr.mxu0 0.0
    %863 = vmatpush1.msra.mxu0 0.0
    %864 = vmatprep.subr.mxu0 0.0
    %865 = vmatpush1.msra.mxu0 0.0
    %866 = vmatprep.subr.mxu0 0.0
    %867 = vmatpush1.msra.mxu0 0.0
    %868 = vmatprep.subr.mxu0 0.0
    %869 = vmatpush1.msra.mxu0 0.0
    %870 = vmatprep.subr.mxu0 0.0
    %871 = vmatpush1.msra.mxu0 0.0
    %872 = vmatprep.subr.mxu0 0.0
    %873 = vmatpush1.msra.mxu0 0.0
    %874 = vmatprep.subr.mxu0 0.0
    %875 = vmatpush1.msra.mxu0 0.0
    %876 = vmatprep.subr.mxu0 0.0
    %877 = vmatpush1.msra.mxu0 0.0
    %878 = vmatprep.subr.mxu0 0.0
    %879 = vmatpush1.msra.mxu0 0.0
    %880 = vmatprep.subr.mxu0 0.0
    %881 = vmatpush1.msra.mxu0 0.0
    %882 = vmatprep.subr.mxu0 0.0
    %883 = vmatpush1.msra.mxu0 0.0
    %884 = vmatprep.subr.mxu0 0.0
    %885 = vmatpush1.msra.mxu0 0.0
    %886 = vmatprep.subr.mxu0 0.0
    %887 = vmatpush1.msra.mxu0 0.0
    %888 = vmatprep.subr.mxu0 0.0
    %889 = vmatpush1.msra.mxu0 0.0
    %890 = vmatprep.subr.mxu0 0.0
    %891 = vmatpush1.msra.mxu0 0.0
    %892 = vmatprep.subr.mxu0 0.0
    %893 = vmatpush1.msra.mxu0 0.0
    %894 = vmatprep.subr.mxu0 0.0
    %895 = vmatpush1.msra.mxu0 0.0
    %896 = vmatprep.subr.mxu0 0.0
    %897 = vmatpush1.msra.mxu0 0.0
    %898 = vmatprep.subr.mxu0 0.0
    %899 = vmatpush1.msra.mxu0 0.0
    %900 = vmatprep.mubr.f32.mxu0 0.0
    %901 = vmatmul.mubr.f32.gmra.mrb[0].mxu0 %v834
    %v902 = vpop.f32.mrb[0].mxu0
    %v903 = vadd.f32 %v832, %v902
    %v904 = vpop.f32.mrb[0].mxu0
    %905 = vdwg.mxu0
    %v906 = vxor.u32 %v903, 2147483648
    %v907 = vmul.f32 %v906, 1.442695
    %v908 = vpow.pop %v907
    %v909 = vadd.f32 %v908, 1.0
    %v910 = vrcp.pop %v909
    %v911 = vmul.f32 1.0, %v910
    %v912 = vmul.f32 %v911, %v822
    %v913 = vtanh.pop %v903
    %915 = vrot.lane.b32.xlu0 %v913, 64
    %v916 = vpop.permute.xlu0 %915
    %v918 = vmul.f32 %v911, %v916
    %920 = vrot.lane.b32.xlu0 %v918, 32
    %v921 = vpop.permute.xlu0 %920
    %v923 = vadd.f32 %v912, %v921
    %v924 = vtanh.pop %v923
    %926 = vrot.lane.b32.xlu0 %v924, 64
    %v927 = vpop.permute.xlu0 %926
    %v929 = vmul.f32 %v911, %v927
    %931 = vrot.lane.b32.xlu0 %v929, 32
    %v932 = vpop.permute.xlu0 %931
    %v933 = vrot.slane %v136, 6
    %v935 = vsel %vm226, %v932, 0
    %937 = vmatprep.subr.mxu0 0.0
    %938 = vmatpush1.msra.mxu0 %v222
    %939 = vmatprep.subr.mxu0 0.0
    %940 = vmatpush1.msra.mxu0 %v223
    %941 = vmatprep.subr.mxu0 0.0
    %942 = vmatpush1.msra.mxu0 %v224
    %943 = vmatprep.subr.mxu0 0.0
    %944 = vmatpush1.msra.mxu0 %v225
    %945 = vmatprep.subr.mxu0 0.0
    %946 = vmatpush1.msra.mxu0 0.0
    %947 = vmatprep.subr.mxu0 0.0
    %948 = vmatpush1.msra.mxu0 0.0
    %949 = vmatprep.subr.mxu0 0.0
    %950 = vmatpush1.msra.mxu0 0.0
    %951 = vmatprep.subr.mxu0 0.0
    %952 = vmatpush1.msra.mxu0 0.0
    %953 = vmatprep.subr.mxu0 0.0
    %954 = vmatpush1.msra.mxu0 0.0
    %955 = vmatprep.subr.mxu0 0.0
    %956 = vmatpush1.msra.mxu0 0.0
    %957 = vmatprep.subr.mxu0 0.0
    %958 = vmatpush1.msra.mxu0 0.0
    %959 = vmatprep.subr.mxu0 0.0
    %960 = vmatpush1.msra.mxu0 0.0
    %961 = vmatprep.subr.mxu0 0.0
    %962 = vmatpush1.msra.mxu0 0.0
    %963 = vmatprep.subr.mxu0 0.0
    %964 = vmatpush1.msra.mxu0 0.0
    %965 = vmatprep.subr.mxu0 0.0
    %966 = vmatpush1.msra.mxu0 0.0
    %967 = vmatprep.subr.mxu0 0.0
    %968 = vmatpush1.msra.mxu0 0.0
    %969 = vmatprep.subr.mxu0 0.0
    %970 = vmatpush1.msra.mxu0 0.0
    %971 = vmatprep.subr.mxu0 0.0
    %972 = vmatpush1.msra.mxu0 0.0
    %973 = vmatprep.subr.mxu0 0.0
    %974 = vmatpush1.msra.mxu0 0.0
    %975 = vmatprep.subr.mxu0 0.0
    %976 = vmatpush1.msra.mxu0 0.0
    %977 = vmatprep.subr.mxu0 0.0
    %978 = vmatpush1.msra.mxu0 0.0
    %979 = vmatprep.subr.mxu0 0.0
    %980 = vmatpush1.msra.mxu0 0.0
    %981 = vmatprep.subr.mxu0 0.0
    %982 = vmatpush1.msra.mxu0 0.0
    %983 = vmatprep.subr.mxu0 0.0
    %984 = vmatpush1.msra.mxu0 0.0
    %985 = vmatprep.subr.mxu0 0.0
    %986 = vmatpush1.msra.mxu0 0.0
    %987 = vmatprep.subr.mxu0 0.0
    %988 = vmatpush1.msra.mxu0 0.0
    %989 = vmatprep.subr.mxu0 0.0
    %990 = vmatpush1.msra.mxu0 0.0
    %991 = vmatprep.subr.mxu0 0.0
    %992 = vmatpush1.msra.mxu0 0.0
    %993 = vmatprep.subr.mxu0 0.0
    %994 = vmatpush1.msra.mxu0 0.0
    %995 = vmatprep.subr.mxu0 0.0
    %996 = vmatpush1.msra.mxu0 0.0
    %997 = vmatprep.subr.mxu0 0.0
    %998 = vmatpush1.msra.mxu0 0.0
    %999 = vmatprep.subr.mxu0 0.0
    %1000 = vmatpush1.msra.mxu0 0.0
    %1001 = vmatprep.mubr.f32.mxu0 0.0
    %1002 = vmatmul.mubr.f32.gmra.mrb[0].mxu0 %v935
    %v1003 = vpop.f32.mrb[0].mxu0
    %v1004 = vadd.f32 %v933, %v1003
    %v1005 = vpop.f32.mrb[0].mxu0
    %1006 = vdwg.mxu0
    %v1007 = vxor.u32 %v1004, 2147483648
    %v1008 = vmul.f32 %v1007, 1.442695
    %v1009 = vpow.pop %v1008
    %v1010 = vadd.f32 %v1009, 1.0
    %v1011 = vrcp.pop %v1010
    %v1012 = vmul.f32 1.0, %v1011
    %v1013 = vmul.f32 %v1012, %v923
    %v1014 = vtanh.pop %v1004
    %1016 = vrot.lane.b32.xlu0 %v1014, 64
    %v1017 = vpop.permute.xlu0 %1016
    %v1019 = vmul.f32 %v1012, %v1017
    %1021 = vrot.lane.b32.xlu0 %v1019, 32
    %v1022 = vpop.permute.xlu0 %1021
    %v1024 = vadd.f32 %v1013, %v1022
    %v1025 = vtanh.pop %v1024
    %1027 = vrot.lane.b32.xlu0 %v1025, 64
    %v1028 = vpop.permute.xlu0 %1027
    %v1030 = vmul.f32 %v1012, %v1028
    %v1031 = vrot.slane %v425, 7
    %v1033 = vrot.slane %v526, 6
    %v1035 = vrot.slane %v627, 5
    %v1037 = vrot.slane %v726, 4
    %v1039 = vrot.slane %v828, 3
    %v1041 = vrot.slane %v929, 2
    %v1044 = vrot.slane %v1030, 1
    %vm1046 = vcmask 1040384
    %v1047 = vsel %vm1046, %v323, %v1031
    %vm1048 = vcmask 1041408
    %v1049 = vsel %vm1048, %v1047, %v1033
    %vm1050 = vcmask 1042432
    %v1051 = vsel %vm1050, %v1049, %v1035
    %vm1052 = vcmask 1043456
    %v1053 = vsel %vm1052, %v1051, %v1037
    %vm1054 = vcmask 1044480
    %v1055 = vsel %vm1054, %v1053, %v1039
    %vm1056 = vcmask 1045504
    %v1057 = vsel %vm1056, %v1055, %v1041
    %vm1058 = vcmask 1046528
    %v1059 = vsel %vm1058, %v1057, %v1044
    %v1060 = vmul.f32 %v1059, %v1059
    %1062 = vrot.lane.b32.xlu0 %v1060, 32
    %v1063 = vpop.permute.xlu0 %1062
    %v1065 = vsel %vm226, %v1063, 0.0
    %1066 = vadd.xlane.f32.xlu0 %v1065
    %v1067 = vpop.xlane.xlu0 %1066
    %v1068 = vmax.f32 %v1067, 1e-24
    %v1069 = vrsqrt.pop %v1068
    %v1070 = vmul.f32 %v1059, %v1069
    %vm1071 = vcmask 1048320
    %v1072 = vsel %vm1071, %v1070, 0.0
    %v1073 = vrot.slane %v1072, 4
    %v1074 = vadd.f32 %v1072, %v1073
    %v1075 = vrot.slane %v1074, 2
    %v1076 = vadd.f32 %v1074, %v1075
    %v1077 = vrot.slane %v1076, 1
    %v1078 = vadd.f32 %v1076, %v1077
    %v1079 = vrcp.pop 8.0
    %v1080 = vmul.f32 %v1078, %v1079
    %v1081 = vmul.f32 %v1080, %v1080
    %1083 = vrot.lane.b32.xlu0 %v1081, 32
    %v1084 = vpop.permute.xlu0 %1083
    %v1086 = vsel %vm226, %v1084, 0.0
    %1087 = vadd.xlane.f32.xlu0 %v1086
    %v1088 = vpop.xlane.xlu0 %1087
    %v1089 = vmax.f32 %v1088, 1e-24
    %v1090 = vrsqrt.pop %v1089
    %v1091 = vmul.f32 %v1080, %v1090
    %v1092 = vrot.slane %v323, 1
    %v1094 = vrot.slane %v526, 7
    %v1096 = vrot.slane %v627, 6
    %v1098 = vrot.slane %v726, 5
    %v1100 = vrot.slane %v828, 4
    %v1102 = vrot.slane %v929, 3
    %v1104 = vrot.slane %v1030, 2
    %v1106 = vsel %vm1046, %v1092, %v425
    %v1107 = vsel %vm1048, %v1106, %v1094
    %v1108 = vsel %vm1050, %v1107, %v1096
    %v1109 = vsel %vm1052, %v1108, %v1098
    %v1110 = vsel %vm1054, %v1109, %v1100
    %v1111 = vsel %vm1056, %v1110, %v1102
    %v1112 = vsel %vm1058, %v1111, %v1104
    %v1113 = vmul.f32 %v1112, %v1112
    %1115 = vrot.lane.b32.xlu0 %v1113, 32
    %v1116 = vpop.permute.xlu0 %1115
    %v1118 = vsel %vm226, %v1116, 0.0
    %1119 = vadd.xlane.f32.xlu0 %v1118
    %v1120 = vpop.xlane.xlu0 %1119
    %v1121 = vmax.f32 %v1120, 1e-24
    %v1122 = vrsqrt.pop %v1121
    %v1123 = vmul.f32 %v1112, %v1122
    %v1124 = vsel %vm1071, %v1123, 0.0
    %v1125 = vrot.slane %v1124, 4
    %v1126 = vadd.f32 %v1124, %v1125
    %v1127 = vrot.slane %v1126, 2
    %v1128 = vadd.f32 %v1126, %v1127
    %v1129 = vrot.slane %v1128, 1
    %v1130 = vadd.f32 %v1128, %v1129
    %v1131 = vmul.f32 %v1130, %v1079
    %v1132 = vmul.f32 %v1131, %v1131
    %1134 = vrot.lane.b32.xlu0 %v1132, 32
    %v1135 = vpop.permute.xlu0 %1134
    %v1137 = vsel %vm226, %v1135, 0.0
    %1138 = vadd.xlane.f32.xlu0 %v1137
    %v1139 = vpop.xlane.xlu0 %1138
    %v1140 = vmax.f32 %v1139, 1e-24
    %v1141 = vrsqrt.pop %v1140
    %v1142 = vmul.f32 %v1131, %v1141
    %v1143 = vsel %vm1046, %v1091, %v1142
    %v1144 = vld [vmem:[#allocation2 + $0x100] sm:$0x7]
    %v1145 = vld [vmem:[#allocation2 + $0x60] sm:$0xff]
    %v1146 = vld [vmem:[#allocation2 + $0x68] sm:$0xff]
    %v1147 = vld [vmem:[#allocation2 + $0x70] sm:$0xff]
    %v1148 = vld [vmem:[#allocation2 + $0x78] sm:$0xff]
    %1150 = vrot.lane.b32.xlu0 %v1143, 32
    %v1151 = vpop.permute.xlu0 %1150
    %v1152 = vsel %vm226, %v1151, 0
    %1154 = vmatprep.subr.mxu0 0.0
    %1155 = vmatpush1.msra.mxu0 %v1145
    %1156 = vmatprep.subr.mxu0 0.0
    %1157 = vmatpush1.msra.mxu0 %v1146
    %1158 = vmatprep.subr.mxu0 0.0
    %1159 = vmatpush1.msra.mxu0 %v1147
    %1160 = vmatprep.subr.mxu0 0.0
    %1161 = vmatpush1.msra.mxu0 %v1148
    %1162 = vmatprep.subr.mxu0 0.0
    %1163 = vmatpush1.msra.mxu0 0.0
    %1164 = vmatprep.subr.mxu0 0.0
    %1165 = vmatpush1.msra.mxu0 0.0
    %1166 = vmatprep.subr.mxu0 0.0
    %1167 = vmatpush1.msra.mxu0 0.0
    %1168 = vmatprep.subr.mxu0 0.0
    %1169 = vmatpush1.msra.mxu0 0.0
    %1170 = vmatprep.subr.mxu0 0.0
    %1171 = vmatpush1.msra.mxu0 0.0
    %1172 = vmatprep.subr.mxu0 0.0
    %1173 = vmatpush1.msra.mxu0 0.0
    %1174 = vmatprep.subr.mxu0 0.0
    %1175 = vmatpush1.msra.mxu0 0.0
    %1176 = vmatprep.subr.mxu0 0.0
    %1177 = vmatpush1.msra.mxu0 0.0
    %1178 = vmatprep.subr.mxu0 0.0
    %1179 = vmatpush1.msra.mxu0 0.0
    %1180 = vmatprep.subr.mxu0 0.0
    %1181 = vmatpush1.msra.mxu0 0.0
    %1182 = vmatprep.subr.mxu0 0.0
    %1183 = vmatpush1.msra.mxu0 0.0
    %1184 = vmatprep.subr.mxu0 0.0
    %1185 = vmatpush1.msra.mxu0 0.0
    %1186 = vmatprep.subr.mxu0 0.0
    %1187 = vmatpush1.msra.mxu0 0.0
    %1188 = vmatprep.subr.mxu0 0.0
    %1189 = vmatpush1.msra.mxu0 0.0
    %1190 = vmatprep.subr.mxu0 0.0
    %1191 = vmatpush1.msra.mxu0 0.0
    %1192 = vmatprep.subr.mxu0 0.0
    %1193 = vmatpush1.msra.mxu0 0.0
    %1194 = vmatprep.subr.mxu0 0.0
    %1195 = vmatpush1.msra.mxu0 0.0
    %1196 = vmatprep.subr.mxu0 0.0
    %1197 = vmatpush1.msra.mxu0 0.0
    %1198 = vmatprep.subr.mxu0 0.0
    %1199 = vmatpush1.msra.mxu0 0.0
    %1200 = vmatprep.subr.mxu0 0.0
    %1201 = vmatpush1.msra.mxu0 0.0
    %1202 = vmatprep.subr.mxu0 0.0
    %1203 = vmatpush1.msra.mxu0 0.0
    %1204 = vmatprep.subr.mxu0 0.0
    %1205 = vmatpush1.msra.mxu0 0.0
    %1206 = vmatprep.subr.mxu0 0.0
    %1207 = vmatpush1.msra.mxu0 0.0
    %1208 = vmatprep.subr.mxu0 0.0
    %1209 = vmatpush1.msra.mxu0 0.0
    %1210 = vmatprep.subr.mxu0 0.0
    %1211 = vmatpush1.msra.mxu0 0.0
    %1212 = vmatprep.subr.mxu0 0.0
    %1213 = vmatpush1.msra.mxu0 0.0
    %1214 = vmatprep.subr.mxu0 0.0
    %1215 = vmatpush1.msra.mxu0 0.0
    %1216 = vmatprep.subr.mxu0 0.0
    %1217 = vmatpush1.msra.mxu0 0.0
    %1218 = vmatprep.mubr.f32.mxu0 0.0
    %1219 = vmatmul.mubr.f32.gmra.mrb[0].mxu0 %v1152
    %v1220 = vpop.f32.mrb[0].mxu0
    %v1221 = vadd.f32 0.0, %v1220
    %v1222 = vpop.f32.mrb[0].mxu0
    %1223 = vdwg.mxu0
    %v1224 = vlaneseq
    %v1225 = vshrl.u32 %v1224, 7
    %v1226 = vsub.s32 0, %v1225
    %v1227 = vrot.slane %v1144, %v1226
    %v1228 = vadd.f32 %v1221, %v1227
    %v1229 = vmax.f32 %v1228, 0.0
    %v1230 = vld [vmem:[#allocation2 + $0x80] sm:$0xff]
    %v1231 = vld [vmem:[#allocation2 + $0x88] sm:$0xff]
    %v1232 = vld [vmem:[#allocation2 + $0x90] sm:$0xff]
    %v1233 = vld [vmem:[#allocation2 + $0x98] sm:$0xff]
    %v1235 = vsel %vm226, %v1229, 0
    %1237 = vmatprep.subr.mxu0 0.0
    %1238 = vmatpush1.msra.mxu0 %v1230
    %1239 = vmatprep.subr.mxu0 0.0
    %1240 = vmatpush1.msra.mxu0 %v1231
    %1241 = vmatprep.subr.mxu0 0.0
    %1242 = vmatpush1.msra.mxu0 %v1232
    %1243 = vmatprep.subr.mxu0 0.0
    %1244 = vmatpush1.msra.mxu0 %v1233
    %1245 = vmatprep.subr.mxu0 0.0
    %1246 = vmatpush1.msra.mxu0 0.0
    %1247 = vmatprep.subr.mxu0 0.0
    %1248 = vmatpush1.msra.mxu0 0.0
    %1249 = vmatprep.subr.mxu0 0.0
    %1250 = vmatpush1.msra.mxu0 0.0
    %1251 = vmatprep.subr.mxu0 0.0
    %1252 = vmatpush1.msra.mxu0 0.0
    %1253 = vmatprep.subr.mxu0 0.0
    %1254 = vmatpush1.msra.mxu0 0.0
    %1255 = vmatprep.subr.mxu0 0.0
    %1256 = vmatpush1.msra.mxu0 0.0
    %1257 = vmatprep.subr.mxu0 0.0
    %1258 = vmatpush1.msra.mxu0 0.0
    %1259 = vmatprep.subr.mxu0 0.0
    %1260 = vmatpush1.msra.mxu0 0.0
    %1261 = vmatprep.subr.mxu0 0.0
    %1262 = vmatpush1.msra.mxu0 0.0
    %1263 = vmatprep.subr.mxu0 0.0
    %1264 = vmatpush1.msra.mxu0 0.0
    %1265 = vmatprep.subr.mxu0 0.0
    %1266 = vmatpush1.msra.mxu0 0.0
    %1267 = vmatprep.subr.mxu0 0.0
    %1268 = vmatpush1.msra.mxu0 0.0
    %1269 = vmatprep.subr.mxu0 0.0
    %1270 = vmatpush1.msra.mxu0 0.0
    %1271 = vmatprep.subr.mxu0 0.0
    %1272 = vmatpush1.msra.mxu0 0.0
    %1273 = vmatprep.subr.mxu0 0.0
    %1274 = vmatpush1.msra.mxu0 0.0
    %1275 = vmatprep.subr.mxu0 0.0
    %1276 = vmatpush1.msra.mxu0 0.0
    %1277 = vmatprep.subr.mxu0 0.0
    %1278 = vmatpush1.msra.mxu0 0.0
    %1279 = vmatprep.subr.mxu0 0.0
    %1280 = vmatpush1.msra.mxu0 0.0
    %1281 = vmatprep.subr.mxu0 0.0
    %1282 = vmatpush1.msra.mxu0 0.0
    %1283 = vmatprep.subr.mxu0 0.0
    %1284 = vmatpush1.msra.mxu0 0.0
    %1285 = vmatprep.subr.mxu0 0.0
    %1286 = vmatpush1.msra.mxu0 0.0
    %1287 = vmatprep.subr.mxu0 0.0
    %1288 = vmatpush1.msra.mxu0 0.0
    %1289 = vmatprep.subr.mxu0 0.0
    %1290 = vmatpush1.msra.mxu0 0.0
    %1291 = vmatprep.subr.mxu0 0.0
    %1292 = vmatpush1.msra.mxu0 0.0
    %1293 = vmatprep.subr.mxu0 0.0
    %1294 = vmatpush1.msra.mxu0 0.0
    %1295 = vmatprep.subr.mxu0 0.0
    %1296 = vmatpush1.msra.mxu0 0.0
    %1297 = vmatprep.subr.mxu0 0.0
    %1298 = vmatpush1.msra.mxu0 0.0
    %1299 = vmatprep.subr.mxu0 0.0
    %1300 = vmatpush1.msra.mxu0 0.0
    %1301 = vmatprep.mubr.f32.mxu0 0.0
    %1302 = vmatmul.mubr.f32.gmra.mrb[0].mxu0 %v1235
    %v1303 = vpop.f32.mrb[0].mxu0
    %v1304 = vadd.f32 0.0, %v1303
    %v1305 = vpop.f32.mrb[0].mxu0
    %1306 = vdwg.mxu0
    %1308 = vrot.lane.b32.xlu0 %v1227, 96
    %v1309 = vpop.permute.xlu0 %1308
    %v1311 = vadd.f32 %v1304, %v1309
    %v1312 = vmax.f32 %v1311, 0.0
    %1313 = vrot.lane.b32.xlu0 %v1227, 32
    %v1314 = vpop.permute.xlu0 %1313
    %v1316 = vmul.f32 %v1312, %v1314
    %vm1317 = vcmask 254976
    %v1318 = vsel %vm1317, %v1316, 0.0
    %1319 = vadd.xlane.f32.xlu0 %v1318
    %v1320 = vpop.xlane.xlu0 %1319
    %v1321 = vlaneseq
    %v1322 = vshrl.u32 %v1321, 7
    %v1323 = vsub.s32 2, %v1322
    %v1324 = vrot.slane %v1144, %v1323
    %v1325 = vadd.f32 %v1320, %v1324
    %v1326 = vxor.u32 %v1325, 2147483648
    %v1327 = vmul.f32 %v1326, 1.442695
    %v1328 = vpow.pop %v1327
    %v1329 = vadd.f32 %v1328, 1.0
    %v1330 = vrcp.pop %v1329
    %v1331 = vmul.f32 1.0, %v1330
    %v1332 = vld [vmem:[#allocation2 + $0x40] sm:$0xff]
    %v1333 = vld [vmem:[#allocation2 + $0x48] sm:$0xff]
    %v1334 = vld [vmem:[#allocation2 + $0x50] sm:$0xff]
    %v1335 = vld [vmem:[#allocation2 + $0x58] sm:$0xff]
    %1336 = vmatprep.subr.mxu0 0.0
    %1337 = vmatpush1.msra.mxu0 %v1332
    %1338 = vmatprep.subr.mxu0 0.0
    %1339 = vmatpush1.msra.mxu0 %v1333
    %1340 = vmatprep.subr.mxu0 0.0
    %1341 = vmatpush1.msra.mxu0 %v1334
    %1342 = vmatprep.subr.mxu0 0.0
    %1343 = vmatpush1.msra.mxu0 %v1335
    %1344 = vmatprep.subr.mxu0 0.0
    %1345 = vmatpush1.msra.mxu0 0.0
    %1346 = vmatprep.subr.mxu0 0.0
    %1347 = vmatpush1.msra.mxu0 0.0
    %1348 = vmatprep.subr.mxu0 0.0
    %1349 = vmatpush1.msra.mxu0 0.0
    %1350 = vmatprep.subr.mxu0 0.0
    %1351 = vmatpush1.msra.mxu0 0.0
    %1352 = vmatprep.subr.mxu0 0.0
    %1353 = vmatpush1.msra.mxu0 0.0
    %1354 = vmatprep.subr.mxu0 0.0
    %1355 = vmatpush1.msra.mxu0 0.0
    %1356 = vmatprep.subr.mxu0 0.0
    %1357 = vmatpush1.msra.mxu0 0.0
    %1358 = vmatprep.subr.mxu0 0.0
    %1359 = vmatpush1.msra.mxu0 0.0
    %1360 = vmatprep.subr.mxu0 0.0
    %1361 = vmatpush1.msra.mxu0 0.0
    %1362 = vmatprep.subr.mxu0 0.0
    %1363 = vmatpush1.msra.mxu0 0.0
    %1364 = vmatprep.subr.mxu0 0.0
    %1365 = vmatpush1.msra.mxu0 0.0
    %1366 = vmatprep.subr.mxu0 0.0
    %1367 = vmatpush1.msra.mxu0 0.0
    %1368 = vmatprep.subr.mxu0 0.0
    %1369 = vmatpush1.msra.mxu0 0.0
    %1370 = vmatprep.subr.mxu0 0.0
    %1371 = vmatpush1.msra.mxu0 0.0
    %1372 = vmatprep.subr.mxu0 0.0
    %1373 = vmatpush1.msra.mxu0 0.0
    %1374 = vmatprep.subr.mxu0 0.0
    %1375 = vmatpush1.msra.mxu0 0.0
    %1376 = vmatprep.subr.mxu0 0.0
    %1377 = vmatpush1.msra.mxu0 0.0
    %1378 = vmatprep.subr.mxu0 0.0
    %1379 = vmatpush1.msra.mxu0 0.0
    %1380 = vmatprep.subr.mxu0 0.0
    %1381 = vmatpush1.msra.mxu0 0.0
    %1382 = vmatprep.subr.mxu0 0.0
    %1383 = vmatpush1.msra.mxu0 0.0
    %1384 = vmatprep.subr.mxu0 0.0
    %1385 = vmatpush1.msra.mxu0 0.0
    %1386 = vmatprep.subr.mxu0 0.0
    %1387 = vmatpush1.msra.mxu0 0.0
    %1388 = vmatprep.subr.mxu0 0.0
    %1389 = vmatpush1.msra.mxu0 0.0
    %1390 = vmatprep.subr.mxu0 0.0
    %1391 = vmatpush1.msra.mxu0 0.0
    %1392 = vmatprep.subr.mxu0 0.0
    %1393 = vmatpush1.msra.mxu0 0.0
    %1394 = vmatprep.subr.mxu0 0.0
    %1395 = vmatpush1.msra.mxu0 0.0
    %1396 = vmatprep.subr.mxu0 0.0
    %1397 = vmatpush1.msra.mxu0 0.0
    %1398 = vmatprep.subr.mxu0 0.0
    %1399 = vmatpush1.msra.mxu0 0.0
    %1400 = vmatprep.mubr.f32.mxu0 0.0
    %1401 = vmatmul.mubr.f32.gmra.mrb[0].mxu0 %v1152
    %v1402 = vpop.f32.mrb[0].mxu0
    %v1403 = vadd.f32 %v214, %v1402
    %v1404 = vpop.f32.mrb[0].mxu0
    %1405 = vdwg.mxu0
    %v1406 = vxor.u32 %v1403, 2147483648
    %v1407 = vmul.f32 %v1406, 1.442695
    %v1408 = vpow.pop %v1407
    %v1409 = vadd.f32 %v1408, 1.0
    %v1410 = vrcp.pop %v1409
    %v1411 = vmul.f32 1.0, %v1410
    %1412 = vrot.lane.b32.xlu0 %v1143, 64
    %v1413 = vpop.permute.xlu0 %1412
    %v1415 = vmul.f32 %v1411, %v1413
    %v1416 = vtanh.pop %v1403
    %1418 = vrot.lane.b32.xlu0 %v1416, 64
    %v1419 = vpop.permute.xlu0 %1418
    %v1421 = vmul.f32 %v1411, %v1419
    %1423 = vrot.lane.b32.xlu0 %v1421, 32
    %v1424 = vpop.permute.xlu0 %1423
    %v1426 = vadd.f32 %v1415, %v1424
    %v1427 = vtanh.pop %v1426
    %1429 = vrot.lane.b32.xlu0 %v1427, 64
    %v1430 = vpop.permute.xlu0 %1429
    %v1432 = vmul.f32 %v1411, %v1430
    %1434 = vrot.lane.b32.xlu0 %v1432, 32
    %v1435 = vpop.permute.xlu0 %1434
    %v1437 = vrot.slane %v214, 2
    %v1439 = vsel %vm226, %v1435, 0
    %1441 = vmatprep.subr.mxu0 0.0
    %1442 = vmatpush1.msra.mxu0 %v1332
    %1443 = vmatprep.subr.mxu0 0.0
    %1444 = vmatpush1.msra.mxu0 %v1333
    %1445 = vmatprep.subr.mxu0 0.0
    %1446 = vmatpush1.msra.mxu0 %v1334
    %1447 = vmatprep.subr.mxu0 0.0
    %1448 = vmatpush1.msra.mxu0 %v1335
    %1449 = vmatprep.subr.mxu0 0.0
    %1450 = vmatpush1.msra.mxu0 0.0
    %1451 = vmatprep.subr.mxu0 0.0
    %1452 = vmatpush1.msra.mxu0 0.0
    %1453 = vmatprep.subr.mxu0 0.0
    %1454 = vmatpush1.msra.mxu0 0.0
    %1455 = vmatprep.subr.mxu0 0.0
    %1456 = vmatpush1.msra.mxu0 0.0
    %1457 = vmatprep.subr.mxu0 0.0
    %1458 = vmatpush1.msra.mxu0 0.0
    %1459 = vmatprep.subr.mxu0 0.0
    %1460 = vmatpush1.msra.mxu0 0.0
    %1461 = vmatprep.subr.mxu0 0.0
    %1462 = vmatpush1.msra.mxu0 0.0
    %1463 = vmatprep.subr.mxu0 0.0
    %1464 = vmatpush1.msra.mxu0 0.0
    %1465 = vmatprep.subr.mxu0 0.0
    %1466 = vmatpush1.msra.mxu0 0.0
    %1467 = vmatprep.subr.mxu0 0.0
    %1468 = vmatpush1.msra.mxu0 0.0
    %1469 = vmatprep.subr.mxu0 0.0
    %1470 = vmatpush1.msra.mxu0 0.0
    %1471 = vmatprep.subr.mxu0 0.0
    %1472 = vmatpush1.msra.mxu0 0.0
    %1473 = vmatprep.subr.mxu0 0.0
    %1474 = vmatpush1.msra.mxu0 0.0
    %1475 = vmatprep.subr.mxu0 0.0
    %1476 = vmatpush1.msra.mxu0 0.0
    %1477 = vmatprep.subr.mxu0 0.0
    %1478 = vmatpush1.msra.mxu0 0.0
    %1479 = vmatprep.subr.mxu0 0.0
    %1480 = vmatpush1.msra.mxu0 0.0
    %1481 = vmatprep.subr.mxu0 0.0
    %1482 = vmatpush1.msra.mxu0 0.0
    %1483 = vmatprep.subr.mxu0 0.0
    %1484 = vmatpush1.msra.mxu0 0.0
    %1485 = vmatprep.subr.mxu0 0.0
    %1486 = vmatpush1.msra.mxu0 0.0
    %1487 = vmatprep.subr.mxu0 0.0
    %1488 = vmatpush1.msra.mxu0 0.0
    %1489 = vmatprep.subr.mxu0 0.0
    %1490 = vmatpush1.msra.mxu0 0.0
    %1491 = vmatprep.subr.mxu0 0.0
    %1492 = vmatpush1.msra.mxu0 0.0
    %1493 = vmatprep.subr.mxu0 0.0
    %1494 = vmatpush1.msra.mxu0 0.0
    %1495 = vmatprep.subr.mxu0 0.0
    %1496 = vmatpush1.msra.mxu0 0.0
    %1497 = vmatprep.subr.mxu0 0.0
    %1498 = vmatpush1.msra.mxu0 0.0
    %1499 = vmatprep.subr.mxu0 0.0
    %1500 = vmatpush1.msra.mxu0 0.0
    %1501 = vmatprep.subr.mxu0 0.0
    %1502 = vmatpush1.msra.mxu0 0.0
    %1503 = vmatprep.subr.mxu0 0.0
    %1504 = vmatpush1.msra.mxu0 0.0
    %1505 = vmatprep.mubr.f32.mxu0 0.0
    %1506 = vmatmul.mubr.f32.gmra.mrb[0].mxu0 %v1439
    %v1507 = vpop.f32.mrb[0].mxu0
    %v1508 = vadd.f32 %v1437, %v1507
    %v1509 = vpop.f32.mrb[0].mxu0
    %1510 = vdwg.mxu0
    %v1511 = vxor.u32 %v1508, 2147483648
    %v1512 = vmul.f32 %v1511, 1.442695
    %v1513 = vpow.pop %v1512
    %v1514 = vadd.f32 %v1513, 1.0
    %v1515 = vrcp.pop %v1514
    %v1516 = vmul.f32 1.0, %v1515
    %v1517 = vmul.f32 %v1516, %v1426
    %v1518 = vtanh.pop %v1508
    %1520 = vrot.lane.b32.xlu0 %v1518, 64
    %v1521 = vpop.permute.xlu0 %1520
    %v1523 = vmul.f32 %v1516, %v1521
    %1525 = vrot.lane.b32.xlu0 %v1523, 32
    %v1526 = vpop.permute.xlu0 %1525
    %v1528 = vadd.f32 %v1517, %v1526
    %v1529 = vtanh.pop %v1528
    %1531 = vrot.lane.b32.xlu0 %v1529, 64
    %v1532 = vpop.permute.xlu0 %1531
    %v1534 = vmul.f32 %v1516, %v1532
    %1536 = vrot.lane.b32.xlu0 %v1534, 32
    %v1537 = vpop.permute.xlu0 %1536
    %v1538 = vrot.slane %v214, 4
    %v1540 = vsel %vm226, %v1537, 0
    %1542 = vmatprep.subr.mxu0 0.0
    %1543 = vmatpush1.msra.mxu0 %v1332
    %1544 = vmatprep.subr.mxu0 0.0
    %1545 = vmatpush1.msra.mxu0 %v1333
    %1546 = vmatprep.subr.mxu0 0.0
    %1547 = vmatpush1.msra.mxu0 %v1334
    %1548 = vmatprep.subr.mxu0 0.0
    %1549 = vmatpush1.msra.mxu0 %v1335
    %1550 = vmatprep.subr.mxu0 0.0
    %1551 = vmatpush1.msra.mxu0 0.0
    %1552 = vmatprep.subr.mxu0 0.0
    %1553 = vmatpush1.msra.mxu0 0.0
    %1554 = vmatprep.subr.mxu0 0.0
    %1555 = vmatpush1.msra.mxu0 0.0
    %1556 = vmatprep.subr.mxu0 0.0
    %1557 = vmatpush1.msra.mxu0 0.0
    %1558 = vmatprep.subr.mxu0 0.0
    %1559 = vmatpush1.msra.mxu0 0.0
    %1560 = vmatprep.subr.mxu0 0.0
    %1561 = vmatpush1.msra.mxu0 0.0
    %1562 = vmatprep.subr.mxu0 0.0
    %1563 = vmatpush1.msra.mxu0 0.0
    %1564 = vmatprep.subr.mxu0 0.0
    %1565 = vmatpush1.msra.mxu0 0.0
    %1566 = vmatprep.subr.mxu0 0.0
    %1567 = vmatpush1.msra.mxu0 0.0
    %1568 = vmatprep.subr.mxu0 0.0
    %1569 = vmatpush1.msra.mxu0 0.0
    %1570 = vmatprep.subr.mxu0 0.0
    %1571 = vmatpush1.msra.mxu0 0.0
    %1572 = vmatprep.subr.mxu0 0.0
    %1573 = vmatpush1.msra.mxu0 0.0
    %1574 = vmatprep.subr.mxu0 0.0
    %1575 = vmatpush1.msra.mxu0 0.0
    %1576 = vmatprep.subr.mxu0 0.0
    %1577 = vmatpush1.msra.mxu0 0.0
    %1578 = vmatprep.subr.mxu0 0.0
    %1579 = vmatpush1.msra.mxu0 0.0
    %1580 = vmatprep.subr.mxu0 0.0
    %1581 = vmatpush1.msra.mxu0 0.0
    %1582 = vmatprep.subr.mxu0 0.0
    %1583 = vmatpush1.msra.mxu0 0.0
    %1584 = vmatprep.subr.mxu0 0.0
    %1585 = vmatpush1.msra.mxu0 0.0
    %1586 = vmatprep.subr.mxu0 0.0
    %1587 = vmatpush1.msra.mxu0 0.0
    %1588 = vmatprep.subr.mxu0 0.0
    %1589 = vmatpush1.msra.mxu0 0.0
    %1590 = vmatprep.subr.mxu0 0.0
    %1591 = vmatpush1.msra.mxu0 0.0
    %1592 = vmatprep.subr.mxu0 0.0
    %1593 = vmatpush1.msra.mxu0 0.0
    %1594 = vmatprep.subr.mxu0 0.0
    %1595 = vmatpush1.msra.mxu0 0.0
    %1596 = vmatprep.subr.mxu0 0.0
    %1597 = vmatpush1.msra.mxu0 0.0
    %1598 = vmatprep.subr.mxu0 0.0
    %1599 = vmatpush1.msra.mxu0 0.0
    %1600 = vmatprep.subr.mxu0 0.0
    %1601 = vmatpush1.msra.mxu0 0.0
    %1602 = vmatprep.subr.mxu0 0.0
    %1603 = vmatpush1.msra.mxu0 0.0
    %1604 = vmatprep.subr.mxu0 0.0
    %1605 = vmatpush1.msra.mxu0 0.0
    %1606 = vmatprep.mubr.f32.mxu0 0.0
    %1607 = vmatmul.mubr.f32.gmra.mrb[0].mxu0 %v1540
    %v1608 = vpop.f32.mrb[0].mxu0
    %v1609 = vadd.f32 %v1538, %v1608
    %v1610 = vpop.f32.mrb[0].mxu0
    %1611 = vdwg.mxu0
    %v1612 = vxor.u32 %v1609, 2147483648
    %v1613 = vmul.f32 %v1612, 1.442695
    %v1614 = vpow.pop %v1613
    %v1615 = vadd.f32 %v1614, 1.0
    %v1616 = vrcp.pop %v1615
    %v1617 = vmul.f32 1.0, %v1616
    %v1618 = vmul.f32 %v1617, %v1528
    %v1619 = vtanh.pop %v1609
    %1621 = vrot.lane.b32.xlu0 %v1619, 64
    %v1622 = vpop.permute.xlu0 %1621
    %v1624 = vmul.f32 %v1617, %v1622
    %1626 = vrot.lane.b32.xlu0 %v1624, 32
    %v1627 = vpop.permute.xlu0 %1626
    %v1629 = vadd.f32 %v1618, %v1627
    %v1630 = vtanh.pop %v1629
    %1632 = vrot.lane.b32.xlu0 %v1630, 64
    %v1633 = vpop.permute.xlu0 %1632
    %v1635 = vmul.f32 %v1617, %v1633
    %1637 = vrot.lane.b32.xlu0 %v1635, 32
    %v1638 = vpop.permute.xlu0 %1637
    %v1639 = vrot.slane %v214, 6
    %v1641 = vsel %vm226, %v1638, 0
    %1643 = vmatprep.subr.mxu0 0.0
    %1644 = vmatpush1.msra.mxu0 %v1332
    %1645 = vmatprep.subr.mxu0 0.0
    %1646 = vmatpush1.msra.mxu0 %v1333
    %1647 = vmatprep.subr.mxu0 0.0
    %1648 = vmatpush1.msra.mxu0 %v1334
    %1649 = vmatprep.subr.mxu0 0.0
    %1650 = vmatpush1.msra.mxu0 %v1335
    %1651 = vmatprep.subr.mxu0 0.0
    %1652 = vmatpush1.msra.mxu0 0.0
    %1653 = vmatprep.subr.mxu0 0.0
    %1654 = vmatpush1.msra.mxu0 0.0
    %1655 = vmatprep.subr.mxu0 0.0
    %1656 = vmatpush1.msra.mxu0 0.0
    %1657 = vmatprep.subr.mxu0 0.0
    %1658 = vmatpush1.msra.mxu0 0.0
    %1659 = vmatprep.subr.mxu0 0.0
    %1660 = vmatpush1.msra.mxu0 0.0
    %1661 = vmatprep.subr.mxu0 0.0
    %1662 = vmatpush1.msra.mxu0 0.0
    %1663 = vmatprep.subr.mxu0 0.0
    %1664 = vmatpush1.msra.mxu0 0.0
    %1665 = vmatprep.subr.mxu0 0.0
    %1666 = vmatpush1.msra.mxu0 0.0
    %1667 = vmatprep.subr.mxu0 0.0
    %1668 = vmatpush1.msra.mxu0 0.0
    %1669 = vmatprep.subr.mxu0 0.0
    %1670 = vmatpush1.msra.mxu0 0.0
    %1671 = vmatprep.subr.mxu0 0.0
    %1672 = vmatpush1.msra.mxu0 0.0
    %1673 = vmatprep.subr.mxu0 0.0
    %1674 = vmatpush1.msra.mxu0 0.0
    %1675 = vmatprep.subr.mxu0 0.0
    %1676 = vmatpush1.msra.mxu0 0.0
    %1677 = vmatprep.subr.mxu0 0.0
    %1678 = vmatpush1.msra.mxu0 0.0
    %1679 = vmatprep.subr.mxu0 0.0
    %1680 = vmatpush1.msra.mxu0 0.0
    %1681 = vmatprep.subr.mxu0 0.0
    %1682 = vmatpush1.msra.mxu0 0.0
    %1683 = vmatprep.subr.mxu0 0.0
    %1684 = vmatpush1.msra.mxu0 0.0
    %1685 = vmatprep.subr.mxu0 0.0
    %1686 = vmatpush1.msra.mxu0 0.0
    %1687 = vmatprep.subr.mxu0 0.0
    %1688 = vmatpush1.msra.mxu0 0.0
    %1689 = vmatprep.subr.mxu0 0.0
    %1690 = vmatpush1.msra.mxu0 0.0
    %1691 = vmatprep.subr.mxu0 0.0
    %1692 = vmatpush1.msra.mxu0 0.0
    %1693 = vmatprep.subr.mxu0 0.0
    %1694 = vmatpush1.msra.mxu0 0.0
    %1695 = vmatprep.subr.mxu0 0.0
    %1696 = vmatpush1.msra.mxu0 0.0
    %1697 = vmatprep.subr.mxu0 0.0
    %1698 = vmatpush1.msra.mxu0 0.0
    %1699 = vmatprep.subr.mxu0 0.0
    %1700 = vmatpush1.msra.mxu0 0.0
    %1701 = vmatprep.subr.mxu0 0.0
    %1702 = vmatpush1.msra.mxu0 0.0
    %1703 = vmatprep.subr.mxu0 0.0
    %1704 = vmatpush1.msra.mxu0 0.0
    %1705 = vmatprep.subr.mxu0 0.0
    %1706 = vmatpush1.msra.mxu0 0.0
    %1707 = vmatprep.mubr.f32.mxu0 0.0
    %1708 = vmatmul.mubr.f32.gmra.mrb[0].mxu0 %v1641
    %v1709 = vpop.f32.mrb[0].mxu0
    %v1710 = vadd.f32 %v1639, %v1709
    %v1711 = vpop.f32.mrb[0].mxu0
    %1712 = vdwg.mxu0
    %v1713 = vxor.u32 %v1710, 2147483648
    %v1714 = vmul.f32 %v1713, 1.442695
    %v1715 = vpow.pop %v1714
    %v1716 = vadd.f32 %v1715, 1.0
    %v1717 = vrcp.pop %v1716
    %v1718 = vmul.f32 1.0, %v1717
    %v1719 = vmul.f32 %v1718, %v1629
    %v1720 = vtanh.pop %v1710
    %1722 = vrot.lane.b32.xlu0 %v1720, 64
    %v1723 = vpop.permute.xlu0 %1722
    %v1725 = vmul.f32 %v1718, %v1723
    %1727 = vrot.lane.b32.xlu0 %v1725, 32
    %v1728 = vpop.permute.xlu0 %1727
    %v1730 = vadd.f32 %v1719, %v1728
    %v1731 = vtanh.pop %v1730
    %1733 = vrot.lane.b32.xlu0 %v1731, 64
    %v1734 = vpop.permute.xlu0 %1733
    %v1736 = vmul.f32 %v1718, %v1734
    %1738 = vrot.lane.b32.xlu0 %v1736, 32
    %v1739 = vpop.permute.xlu0 %1738
    %v1740 = vsel %vm226, %v1739, 0
    %1742 = vmatprep.subr.mxu0 0.0
    %1743 = vmatpush1.msra.mxu0 %v1332
    %1744 = vmatprep.subr.mxu0 0.0
    %1745 = vmatpush1.msra.mxu0 %v1333
    %1746 = vmatprep.subr.mxu0 0.0
    %1747 = vmatpush1.msra.mxu0 %v1334
    %1748 = vmatprep.subr.mxu0 0.0
    %1749 = vmatpush1.msra.mxu0 %v1335
    %1750 = vmatprep.subr.mxu0 0.0
    %1751 = vmatpush1.msra.mxu0 0.0
    %1752 = vmatprep.subr.mxu0 0.0
    %1753 = vmatpush1.msra.mxu0 0.0
    %1754 = vmatprep.subr.mxu0 0.0
    %1755 = vmatpush1.msra.mxu0 0.0
    %1756 = vmatprep.subr.mxu0 0.0
    %1757 = vmatpush1.msra.mxu0 0.0
    %1758 = vmatprep.subr.mxu0 0.0
    %1759 = vmatpush1.msra.mxu0 0.0
    %1760 = vmatprep.subr.mxu0 0.0
    %1761 = vmatpush1.msra.mxu0 0.0
    %1762 = vmatprep.subr.mxu0 0.0
    %1763 = vmatpush1.msra.mxu0 0.0
    %1764 = vmatprep.subr.mxu0 0.0
    %1765 = vmatpush1.msra.mxu0 0.0
    %1766 = vmatprep.subr.mxu0 0.0
    %1767 = vmatpush1.msra.mxu0 0.0
    %1768 = vmatprep.subr.mxu0 0.0
    %1769 = vmatpush1.msra.mxu0 0.0
    %1770 = vmatprep.subr.mxu0 0.0
    %1771 = vmatpush1.msra.mxu0 0.0
    %1772 = vmatprep.subr.mxu0 0.0
    %1773 = vmatpush1.msra.mxu0 0.0
    %1774 = vmatprep.subr.mxu0 0.0
    %1775 = vmatpush1.msra.mxu0 0.0
    %1776 = vmatprep.subr.mxu0 0.0
    %1777 = vmatpush1.msra.mxu0 0.0
    %1778 = vmatprep.subr.mxu0 0.0
    %1779 = vmatpush1.msra.mxu0 0.0
    %1780 = vmatprep.subr.mxu0 0.0
    %1781 = vmatpush1.msra.mxu0 0.0
    %1782 = vmatprep.subr.mxu0 0.0
    %1783 = vmatpush1.msra.mxu0 0.0
    %1784 = vmatprep.subr.mxu0 0.0
    %1785 = vmatpush1.msra.mxu0 0.0
    %1786 = vmatprep.subr.mxu0 0.0
    %1787 = vmatpush1.msra.mxu0 0.0
    %1788 = vmatprep.subr.mxu0 0.0
    %1789 = vmatpush1.msra.mxu0 0.0
    %1790 = vmatprep.subr.mxu0 0.0
    %1791 = vmatpush1.msra.mxu0 0.0
    %1792 = vmatprep.subr.mxu0 0.0
    %1793 = vmatpush1.msra.mxu0 0.0
    %1794 = vmatprep.subr.mxu0 0.0
    %1795 = vmatpush1.msra.mxu0 0.0
    %1796 = vmatprep.subr.mxu0 0.0
    %1797 = vmatpush1.msra.mxu0 0.0
    %1798 = vmatprep.subr.mxu0 0.0
    %1799 = vmatpush1.msra.mxu0 0.0
    %1800 = vmatprep.subr.mxu0 0.0
    %1801 = vmatpush1.msra.mxu0 0.0
    %1802 = vmatprep.subr.mxu0 0.0
    %1803 = vmatpush1.msra.mxu0 0.0
    %1804 = vmatprep.subr.mxu0 0.0
    %1805 = vmatpush1.msra.mxu0 0.0
    %1806 = vmatprep.mubr.f32.mxu0 0.0
    %1807 = vmatmul.mubr.f32.gmra.mrb[0].mxu0 %v1740
    %v1808 = vpop.f32.mrb[0].mxu0
    %v1809 = vadd.f32 %v219, %v1808
    %v1810 = vpop.f32.mrb[0].mxu0
    %1811 = vdwg.mxu0
    %v1812 = vxor.u32 %v1809, 2147483648
    %v1813 = vmul.f32 %v1812, 1.442695
    %v1814 = vpow.pop %v1813
    %v1815 = vadd.f32 %v1814, 1.0
    %v1816 = vrcp.pop %v1815
    %v1817 = vmul.f32 1.0, %v1816
    %v1818 = vmul.f32 %v1817, %v1730
    %v1819 = vtanh.pop %v1809
    %1821 = vrot.lane.b32.xlu0 %v1819, 64
    %v1822 = vpop.permute.xlu0 %1821
    %v1824 = vmul.f32 %v1817, %v1822
    %1826 = vrot.lane.b32.xlu0 %v1824, 32
    %v1827 = vpop.permute.xlu0 %1826
    %v1829 = vadd.f32 %v1818, %v1827
    %v1830 = vtanh.pop %v1829
    %1832 = vrot.lane.b32.xlu0 %v1830, 64
    %v1833 = vpop.permute.xlu0 %1832
    %v1835 = vmul.f32 %v1817, %v1833
    %1837 = vrot.lane.b32.xlu0 %v1835, 32
    %v1838 = vpop.permute.xlu0 %1837
    %v1840 = vrot.slane %v219, 2
    %v1842 = vsel %vm226, %v1838, 0
    %1844 = vmatprep.subr.mxu0 0.0
    %1845 = vmatpush1.msra.mxu0 %v1332
    %1846 = vmatprep.subr.mxu0 0.0
    %1847 = vmatpush1.msra.mxu0 %v1333
    %1848 = vmatprep.subr.mxu0 0.0
    %1849 = vmatpush1.msra.mxu0 %v1334
    %1850 = vmatprep.subr.mxu0 0.0
    %1851 = vmatpush1.msra.mxu0 %v1335
    %1852 = vmatprep.subr.mxu0 0.0
    %1853 = vmatpush1.msra.mxu0 0.0
    %1854 = vmatprep.subr.mxu0 0.0
    %1855 = vmatpush1.msra.mxu0 0.0
    %1856 = vmatprep.subr.mxu0 0.0
    %1857 = vmatpush1.msra.mxu0 0.0
    %1858 = vmatprep.subr.mxu0 0.0
    %1859 = vmatpush1.msra.mxu0 0.0
    %1860 = vmatprep.subr.mxu0 0.0
    %1861 = vmatpush1.msra.mxu0 0.0
    %1862 = vmatprep.subr.mxu0 0.0
    %1863 = vmatpush1.msra.mxu0 0.0
    %1864 = vmatprep.subr.mxu0 0.0
    %1865 = vmatpush1.msra.mxu0 0.0
    %1866 = vmatprep.subr.mxu0 0.0
    %1867 = vmatpush1.msra.mxu0 0.0
    %1868 = vmatprep.subr.mxu0 0.0
    %1869 = vmatpush1.msra.mxu0 0.0
    %1870 = vmatprep.subr.mxu0 0.0
    %1871 = vmatpush1.msra.mxu0 0.0
    %1872 = vmatprep.subr.mxu0 0.0
    %1873 = vmatpush1.msra.mxu0 0.0
    %1874 = vmatprep.subr.mxu0 0.0
    %1875 = vmatpush1.msra.mxu0 0.0
    %1876 = vmatprep.subr.mxu0 0.0
    %1877 = vmatpush1.msra.mxu0 0.0
    %1878 = vmatprep.subr.mxu0 0.0
    %1879 = vmatpush1.msra.mxu0 0.0
    %1880 = vmatprep.subr.mxu0 0.0
    %1881 = vmatpush1.msra.mxu0 0.0
    %1882 = vmatprep.subr.mxu0 0.0
    %1883 = vmatpush1.msra.mxu0 0.0
    %1884 = vmatprep.subr.mxu0 0.0
    %1885 = vmatpush1.msra.mxu0 0.0
    %1886 = vmatprep.subr.mxu0 0.0
    %1887 = vmatpush1.msra.mxu0 0.0
    %1888 = vmatprep.subr.mxu0 0.0
    %1889 = vmatpush1.msra.mxu0 0.0
    %1890 = vmatprep.subr.mxu0 0.0
    %1891 = vmatpush1.msra.mxu0 0.0
    %1892 = vmatprep.subr.mxu0 0.0
    %1893 = vmatpush1.msra.mxu0 0.0
    %1894 = vmatprep.subr.mxu0 0.0
    %1895 = vmatpush1.msra.mxu0 0.0
    %1896 = vmatprep.subr.mxu0 0.0
    %1897 = vmatpush1.msra.mxu0 0.0
    %1898 = vmatprep.subr.mxu0 0.0
    %1899 = vmatpush1.msra.mxu0 0.0
    %1900 = vmatprep.subr.mxu0 0.0
    %1901 = vmatpush1.msra.mxu0 0.0
    %1902 = vmatprep.subr.mxu0 0.0
    %1903 = vmatpush1.msra.mxu0 0.0
    %1904 = vmatprep.subr.mxu0 0.0
    %1905 = vmatpush1.msra.mxu0 0.0
    %1906 = vmatprep.subr.mxu0 0.0
    %1907 = vmatpush1.msra.mxu0 0.0
    %1908 = vmatprep.mubr.f32.mxu0 0.0
    %1909 = vmatmul.mubr.f32.gmra.mrb[0].mxu0 %v1842
    %v1910 = vpop.f32.mrb[0].mxu0
    %v1911 = vadd.f32 %v1840, %v1910
    %v1912 = vpop.f32.mrb[0].mxu0
    %1913 = vdwg.mxu0
    %v1914 = vxor.u32 %v1911, 2147483648
    %v1915 = vmul.f32 %v1914, 1.442695
    %v1916 = vpow.pop %v1915
    %v1917 = vadd.f32 %v1916, 1.0
    %v1918 = vrcp.pop %v1917
    %v1919 = vmul.f32 1.0, %v1918
    %v1920 = vmul.f32 %v1919, %v1829
    %v1921 = vtanh.pop %v1911
    %1923 = vrot.lane.b32.xlu0 %v1921, 64
    %v1924 = vpop.permute.xlu0 %1923
    %v1926 = vmul.f32 %v1919, %v1924
    %1928 = vrot.lane.b32.xlu0 %v1926, 32
    %v1929 = vpop.permute.xlu0 %1928
    %v1931 = vadd.f32 %v1920, %v1929
    %v1932 = vtanh.pop %v1931
    %1934 = vrot.lane.b32.xlu0 %v1932, 64
    %v1935 = vpop.permute.xlu0 %1934
    %v1937 = vmul.f32 %v1919, %v1935
    %1939 = vrot.lane.b32.xlu0 %v1937, 32
    %v1940 = vpop.permute.xlu0 %1939
    %v1941 = vrot.slane %v219, 4
    %v1943 = vsel %vm226, %v1940, 0
    %1945 = vmatprep.subr.mxu0 0.0
    %1946 = vmatpush1.msra.mxu0 %v1332
    %1947 = vmatprep.subr.mxu0 0.0
    %1948 = vmatpush1.msra.mxu0 %v1333
    %1949 = vmatprep.subr.mxu0 0.0
    %1950 = vmatpush1.msra.mxu0 %v1334
    %1951 = vmatprep.subr.mxu0 0.0
    %1952 = vmatpush1.msra.mxu0 %v1335
    %1953 = vmatprep.subr.mxu0 0.0
    %1954 = vmatpush1.msra.mxu0 0.0
    %1955 = vmatprep.subr.mxu0 0.0
    %1956 = vmatpush1.msra.mxu0 0.0
    %1957 = vmatprep.subr.mxu0 0.0
    %1958 = vmatpush1.msra.mxu0 0.0
    %1959 = vmatprep.subr.mxu0 0.0
    %1960 = vmatpush1.msra.mxu0 0.0
    %1961 = vmatprep.subr.mxu0 0.0
    %1962 = vmatpush1.msra.mxu0 0.0
    %1963 = vmatprep.subr.mxu0 0.0
    %1964 = vmatpush1.msra.mxu0 0.0
    %1965 = vmatprep.subr.mxu0 0.0
    %1966 = vmatpush1.msra.mxu0 0.0
    %1967 = vmatprep.subr.mxu0 0.0
    %1968 = vmatpush1.msra.mxu0 0.0
    %1969 = vmatprep.subr.mxu0 0.0
    %1970 = vmatpush1.msra.mxu0 0.0
    %1971 = vmatprep.subr.mxu0 0.0
    %1972 = vmatpush1.msra.mxu0 0.0
    %1973 = vmatprep.subr.mxu0 0.0
    %1974 = vmatpush1.msra.mxu0 0.0
    %1975 = vmatprep.subr.mxu0 0.0
    %1976 = vmatpush1.msra.mxu0 0.0
    %1977 = vmatprep.subr.mxu0 0.0
    %1978 = vmatpush1.msra.mxu0 0.0
    %1979 = vmatprep.subr.mxu0 0.0
    %1980 = vmatpush1.msra.mxu0 0.0
    %1981 = vmatprep.subr.mxu0 0.0
    %1982 = vmatpush1.msra.mxu0 0.0
    %1983 = vmatprep.subr.mxu0 0.0
    %1984 = vmatpush1.msra.mxu0 0.0
    %1985 = vmatprep.subr.mxu0 0.0
    %1986 = vmatpush1.msra.mxu0 0.0
    %1987 = vmatprep.subr.mxu0 0.0
    %1988 = vmatpush1.msra.mxu0 0.0
    %1989 = vmatprep.subr.mxu0 0.0
    %1990 = vmatpush1.msra.mxu0 0.0
    %1991 = vmatprep.subr.mxu0 0.0
    %1992 = vmatpush1.msra.mxu0 0.0
    %1993 = vmatprep.subr.mxu0 0.0
    %1994 = vmatpush1.msra.mxu0 0.0
    %1995 = vmatprep.subr.mxu0 0.0
    %1996 = vmatpush1.msra.mxu0 0.0
    %1997 = vmatprep.subr.mxu0 0.0
    %1998 = vmatpush1.msra.mxu0 0.0
    %1999 = vmatprep.subr.mxu0 0.0
    %2000 = vmatpush1.msra.mxu0 0.0
    %2001 = vmatprep.subr.mxu0 0.0
    %2002 = vmatpush1.msra.mxu0 0.0
    %2003 = vmatprep.subr.mxu0 0.0
    %2004 = vmatpush1.msra.mxu0 0.0
    %2005 = vmatprep.subr.mxu0 0.0
    %2006 = vmatpush1.msra.mxu0 0.0
    %2007 = vmatprep.subr.mxu0 0.0
    %2008 = vmatpush1.msra.mxu0 0.0
    %2009 = vmatprep.mubr.f32.mxu0 0.0
    %2010 = vmatmul.mubr.f32.gmra.mrb[0].mxu0 %v1943
    %v2011 = vpop.f32.mrb[0].mxu0
    %v2012 = vadd.f32 %v1941, %v2011
    %v2013 = vpop.f32.mrb[0].mxu0
    %2014 = vdwg.mxu0
    %v2015 = vxor.u32 %v2012, 2147483648
    %v2016 = vmul.f32 %v2015, 1.442695
    %v2017 = vpow.pop %v2016
    %v2018 = vadd.f32 %v2017, 1.0
    %v2019 = vrcp.pop %v2018
    %v2020 = vmul.f32 1.0, %v2019
    %v2021 = vmul.f32 %v2020, %v1931
    %v2022 = vtanh.pop %v2012
    %2024 = vrot.lane.b32.xlu0 %v2022, 64
    %v2025 = vpop.permute.xlu0 %2024
    %v2027 = vmul.f32 %v2020, %v2025
    %2029 = vrot.lane.b32.xlu0 %v2027, 32
    %v2030 = vpop.permute.xlu0 %2029
    %v2032 = vadd.f32 %v2021, %v2030
    %v2033 = vtanh.pop %v2032
    %2035 = vrot.lane.b32.xlu0 %v2033, 64
    %v2036 = vpop.permute.xlu0 %2035
    %v2038 = vmul.f32 %v2020, %v2036
    %2040 = vrot.lane.b32.xlu0 %v2038, 32
    %v2041 = vpop.permute.xlu0 %2040
    %v2042 = vrot.slane %v219, 6
    %v2044 = vsel %vm226, %v2041, 0
    %2046 = vmatprep.subr.mxu0 0.0
    %2047 = vmatpush1.msra.mxu0 %v1332
    %2048 = vmatprep.subr.mxu0 0.0
    %2049 = vmatpush1.msra.mxu0 %v1333
    %2050 = vmatprep.subr.mxu0 0.0
    %2051 = vmatpush1.msra.mxu0 %v1334
    %2052 = vmatprep.subr.mxu0 0.0
    %2053 = vmatpush1.msra.mxu0 %v1335
    %2054 = vmatprep.subr.mxu0 0.0
    %2055 = vmatpush1.msra.mxu0 0.0
    %2056 = vmatprep.subr.mxu0 0.0
    %2057 = vmatpush1.msra.mxu0 0.0
    %2058 = vmatprep.subr.mxu0 0.0
    %2059 = vmatpush1.msra.mxu0 0.0
    %2060 = vmatprep.subr.mxu0 0.0
    %2061 = vmatpush1.msra.mxu0 0.0
    %2062 = vmatprep.subr.mxu0 0.0
    %2063 = vmatpush1.msra.mxu0 0.0
    %2064 = vmatprep.subr.mxu0 0.0
    %2065 = vmatpush1.msra.mxu0 0.0
    %2066 = vmatprep.subr.mxu0 0.0
    %2067 = vmatpush1.msra.mxu0 0.0
    %2068 = vmatprep.subr.mxu0 0.0
    %2069 = vmatpush1.msra.mxu0 0.0
    %2070 = vmatprep.subr.mxu0 0.0
    %2071 = vmatpush1.msra.mxu0 0.0
    %2072 = vmatprep.subr.mxu0 0.0
    %2073 = vmatpush1.msra.mxu0 0.0
    %2074 = vmatprep.subr.mxu0 0.0
    %2075 = vmatpush1.msra.mxu0 0.0
    %2076 = vmatprep.subr.mxu0 0.0
    %2077 = vmatpush1.msra.mxu0 0.0
    %2078 = vmatprep.subr.mxu0 0.0
    %2079 = vmatpush1.msra.mxu0 0.0
    %2080 = vmatprep.subr.mxu0 0.0
    %2081 = vmatpush1.msra.mxu0 0.0
    %2082 = vmatprep.subr.mxu0 0.0
    %2083 = vmatpush1.msra.mxu0 0.0
    %2084 = vmatprep.subr.mxu0 0.0
    %2085 = vmatpush1.msra.mxu0 0.0
    %2086 = vmatprep.subr.mxu0 0.0
    %2087 = vmatpush1.msra.mxu0 0.0
    %2088 = vmatprep.subr.mxu0 0.0
    %2089 = vmatpush1.msra.mxu0 0.0
    %2090 = vmatprep.subr.mxu0 0.0
    %2091 = vmatpush1.msra.mxu0 0.0
    %2092 = vmatprep.subr.mxu0 0.0
    %2093 = vmatpush1.msra.mxu0 0.0
    %2094 = vmatprep.subr.mxu0 0.0
    %2095 = vmatpush1.msra.mxu0 0.0
    %2096 = vmatprep.subr.mxu0 0.0
    %2097 = vmatpush1.msra.mxu0 0.0
    %2098 = vmatprep.subr.mxu0 0.0
    %2099 = vmatpush1.msra.mxu0 0.0
    %2100 = vmatprep.subr.mxu0 0.0
    %2101 = vmatpush1.msra.mxu0 0.0
    %2102 = vmatprep.subr.mxu0 0.0
    %2103 = vmatpush1.msra.mxu0 0.0
    %2104 = vmatprep.subr.mxu0 0.0
    %2105 = vmatpush1.msra.mxu0 0.0
    %2106 = vmatprep.subr.mxu0 0.0
    %2107 = vmatpush1.msra.mxu0 0.0
    %2108 = vmatprep.subr.mxu0 0.0
    %2109 = vmatpush1.msra.mxu0 0.0
    %2110 = vmatprep.mubr.f32.mxu0 0.0
    %2111 = vmatmul.mubr.f32.gmra.mrb[0].mxu0 %v2044
    %v2112 = vpop.f32.mrb[0].mxu0
    %v2113 = vadd.f32 %v2042, %v2112
    %v2114 = vpop.f32.mrb[0].mxu0
    %2115 = vdwg.mxu0
    %v2116 = vxor.u32 %v2113, 2147483648
    %v2117 = vmul.f32 %v2116, 1.442695
    %v2118 = vpow.pop %v2117
    %v2119 = vadd.f32 %v2118, 1.0
    %v2120 = vrcp.pop %v2119
    %v2121 = vmul.f32 1.0, %v2120
    %v2122 = vmul.f32 %v2121, %v2032
    %v2123 = vtanh.pop %v2113
    %2125 = vrot.lane.b32.xlu0 %v2123, 64
    %v2126 = vpop.permute.xlu0 %2125
    %v2128 = vmul.f32 %v2121, %v2126
    %2130 = vrot.lane.b32.xlu0 %v2128, 32
    %v2131 = vpop.permute.xlu0 %2130
    %v2133 = vadd.f32 %v2122, %v2131
    %v2134 = vtanh.pop %v2133
    %2136 = vrot.lane.b32.xlu0 %v2134, 64
    %v2137 = vpop.permute.xlu0 %2136
    %v2139 = vmul.f32 %v2121, %v2137
    %v2140 = vrot.slane %v1534, 7
    %v2142 = vrot.slane %v1635, 6
    %v2144 = vrot.slane %v1736, 5
    %v2146 = vrot.slane %v1835, 4
    %v2148 = vrot.slane %v1937, 3
    %v2150 = vrot.slane %v2038, 2
    %v2153 = vrot.slane %v2139, 1
    %v2155 = vsel %vm1046, %v1432, %v2140
    %v2156 = vsel %vm1048, %v2155, %v2142
    %v2157 = vsel %vm1050, %v2156, %v2144
    %v2158 = vsel %vm1052, %v2157, %v2146
    %v2159 = vsel %vm1054, %v2158, %v2148
    %v2160 = vsel %vm1056, %v2159, %v2150
    %v2161 = vsel %vm1058, %v2160, %v2153
    %2163 = vrot.lane.b32.xlu0 %v2161, 32
    %v2164 = vpop.permute.xlu0 %2163
    %2166 = vrot.lane.b32.xlu0 %v1070, 32
    %v2167 = vpop.permute.xlu0 %2166
    %v2168 = vsel %vm226, %v2164, 0
    %v2170 = vsel %vm226, %v2167, 0
    %2172 = vmatprep.subr.mxu0 0.0
    %2173 = vmatpush1.xpose.msra.mxu0 %v2170
    %2174 = vmatprep.subr.mxu0 0.0
    %2175 = vmatpush1.xpose.msra.mxu0 0.0
    %2176 = vmatprep.subr.mxu0 0.0
    %2177 = vmatpush1.xpose.msra.mxu0 0.0
    %2178 = vmatprep.subr.mxu0 0.0
    %2179 = vmatpush1.xpose.msra.mxu0 0.0
    %2180 = vmatprep.subr.mxu0 0.0
    %2181 = vmatpush1.xpose.msra.mxu0 0.0
    %2182 = vmatprep.subr.mxu0 0.0
    %2183 = vmatpush1.xpose.msra.mxu0 0.0
    %2184 = vmatprep.subr.mxu0 0.0
    %2185 = vmatpush1.xpose.msra.mxu0 0.0
    %2186 = vmatprep.subr.mxu0 0.0
    %2187 = vmatpush1.xpose.msra.mxu0 0.0
    %2188 = vmatprep.subr.mxu0 0.0
    %2189 = vmatpush1.xpose.msra.mxu0 0.0
    %2190 = vmatprep.subr.mxu0 0.0
    %2191 = vmatpush1.xpose.msra.mxu0 0.0
    %2192 = vmatprep.subr.mxu0 0.0
    %2193 = vmatpush1.xpose.msra.mxu0 0.0
    %2194 = vmatprep.subr.mxu0 0.0
    %2195 = vmatpush1.xpose.msra.mxu0 0.0
    %2196 = vmatprep.subr.mxu0 0.0
    %2197 = vmatpush1.xpose.msra.mxu0 0.0
    %2198 = vmatprep.subr.mxu0 0.0
    %2199 = vmatpush1.xpose.msra.mxu0 0.0
    %2200 = vmatprep.subr.mxu0 0.0
    %2201 = vmatpush1.xpose.msra.mxu0 0.0
    %2202 = vmatprep.subr.mxu0 0.0
    %2203 = vmatpush1.xpose.msra.mxu0 0.0
    %2204 = vmatprep.subr.mxu0 0.0
    %2205 = vmatpush1.xpose.msra.mxu0 0.0
    %2206 = vmatprep.subr.mxu0 0.0
    %2207 = vmatpush1.xpose.msra.mxu0 0.0
    %2208 = vmatprep.subr.mxu0 0.0
    %2209 = vmatpush1.xpose.msra.mxu0 0.0
    %2210 = vmatprep.subr.mxu0 0.0
    %2211 = vmatpush1.xpose.msra.mxu0 0.0
    %2212 = vmatprep.subr.mxu0 0.0
    %2213 = vmatpush1.xpose.msra.mxu0 0.0
    %2214 = vmatprep.subr.mxu0 0.0
    %2215 = vmatpush1.xpose.msra.mxu0 0.0
    %2216 = vmatprep.subr.mxu0 0.0
    %2217 = vmatpush1.xpose.msra.mxu0 0.0
    %2218 = vmatprep.subr.mxu0 0.0
    %2219 = vmatpush1.xpose.msra.mxu0 0.0
    %2220 = vmatprep.subr.mxu0 0.0
    %2221 = vmatpush1.xpose.msra.mxu0 0.0
    %2222 = vmatprep.subr.mxu0 0.0
    %2223 = vmatpush1.xpose.msra.mxu0 0.0
    %2224 = vmatprep.subr.mxu0 0.0
    %2225 = vmatpush1.xpose.msra.mxu0 0.0
    %2226 = vmatprep.subr.mxu0 0.0
    %2227 = vmatpush1.xpose.msra.mxu0 0.0
    %2228 = vmatprep.subr.mxu0 0.0
    %2229 = vmatpush1.xpose.msra.mxu0 0.0
    %2230 = vmatprep.subr.mxu0 0.0
    %2231 = vmatpush1.xpose.msra.mxu0 0.0
    %2232 = vmatprep.subr.mxu0 0.0
    %2233 = vmatpush1.xpose.msra.mxu0 0.0
    %2234 = vmatprep.subr.mxu0 0.0
    %2235 = vmatpush1.xpose.msra.mxu0 0.0
    %2236 = vmatprep.mubr.f32.mxu0 0.0
    %2237 = vmatmul.mubr.f32.gmra.mrb[0].mxu0 %v2168
    %v2238 = vpop.f32.mrb[0].mxu0
    %v2239 = vadd.f32 0.0, %v2238
    %v2240 = vpop.f32.mrb[0].mxu0
    %2241 = vdwg.mxu0
    %vm2242 = vcmask 64512
    %v2243 = vsel %vm2242, %v2239, -inf
    %2244 = vmax.xlane.f32.xlu0 %v2243
    %v2245 = vpop.xlane.xlu0 %2244
    %v2246 = vsub.f32 %v2239, %v2245
    %v2247 = vmul.f32 %v2246, 1.442695
    %v2248 = vpow.pop %v2247
    %v2249 = vsel %vm2242, %v2248, 0.0
    %2250 = vadd.xlane.f32.xlu0 %v2249
    %v2251 = vpop.xlane.xlu0 %2250
    %v2252 = vrcp.pop %v2251
    %v2253 = vmul.f32 %v2248, %v2252
    %v2256 = vsel %vm2242, %v2253, 0
    %2258 = vmatprep.subr.mxu0 0.0
    %2259 = vmatpush1.msra.mxu0 %v2167
    %2260 = vmatprep.subr.mxu0 0.0
    %2261 = vmatpush1.msra.mxu0 0.0
    %2262 = vmatprep.subr.mxu0 0.0
    %2263 = vmatpush1.msra.mxu0 0.0
    %2264 = vmatprep.subr.mxu0 0.0
    %2265 = vmatpush1.msra.mxu0 0.0
    %2266 = vmatprep.subr.mxu0 0.0
    %2267 = vmatpush1.msra.mxu0 0.0
    %2268 = vmatprep.subr.mxu0 0.0
    %2269 = vmatpush1.msra.mxu0 0.0
    %2270 = vmatprep.subr.mxu0 0.0
    %2271 = vmatpush1.msra.mxu0 0.0
    %2272 = vmatprep.subr.mxu0 0.0
    %2273 = vmatpush1.msra.mxu0 0.0
    %2274 = vmatprep.subr.mxu0 0.0
    %2275 = vmatpush1.msra.mxu0 0.0
    %2276 = vmatprep.subr.mxu0 0.0
    %2277 = vmatpush1.msra.mxu0 0.0
    %2278 = vmatprep.subr.mxu0 0.0
    %2279 = vmatpush1.msra.mxu0 0.0
    %2280 = vmatprep.subr.mxu0 0.0
    %2281 = vmatpush1.msra.mxu0 0.0
    %2282 = vmatprep.subr.mxu0 0.0
    %2283 = vmatpush1.msra.mxu0 0.0
    %2284 = vmatprep.subr.mxu0 0.0
    %2285 = vmatpush1.msra.mxu0 0.0
    %2286 = vmatprep.subr.mxu0 0.0
    %2287 = vmatpush1.msra.mxu0 0.0
    %2288 = vmatprep.subr.mxu0 0.0
    %2289 = vmatpush1.msra.mxu0 0.0
    %2290 = vmatprep.subr.mxu0 0.0
    %2291 = vmatpush1.msra.mxu0 0.0
    %2292 = vmatprep.subr.mxu0 0.0
    %2293 = vmatpush1.msra.mxu0 0.0
    %2294 = vmatprep.subr.mxu0 0.0
    %2295 = vmatpush1.msra.mxu0 0.0
    %2296 = vmatprep.subr.mxu0 0.0
    %2297 = vmatpush1.msra.mxu0 0.0
    %2298 = vmatprep.subr.mxu0 0.0
    %2299 = vmatpush1.msra.mxu0 0.0
    %2300 = vmatprep.subr.mxu0 0.0
    %2301 = vmatpush1.msra.mxu0 0.0
    %2302 = vmatprep.subr.mxu0 0.0
    %2303 = vmatpush1.msra.mxu0 0.0
    %2304 = vmatprep.subr.mxu0 0.0
    %2305 = vmatpush1.msra.mxu0 0.0
    %2306 = vmatprep.subr.mxu0 0.0
    %2307 = vmatpush1.msra.mxu0 0.0
    %2308 = vmatprep.subr.mxu0 0.0
    %2309 = vmatpush1.msra.mxu0 0.0
    %2310 = vmatprep.subr.mxu0 0.0
    %2311 = vmatpush1.msra.mxu0 0.0
    %2312 = vmatprep.subr.mxu0 0.0
    %2313 = vmatpush1.msra.mxu0 0.0
    %2314 = vmatprep.subr.mxu0 0.0
    %2315 = vmatpush1.msra.mxu0 0.0
    %2316 = vmatprep.subr.mxu0 0.0
    %2317 = vmatpush1.msra.mxu0 0.0
    %2318 = vmatprep.subr.mxu0 0.0
    %2319 = vmatpush1.msra.mxu0 0.0
    %2320 = vmatprep.subr.mxu0 0.0
    %2321 = vmatpush1.msra.mxu0 0.0
    %2322 = vmatprep.mubr.f32.mxu0 0.0
    %2323 = vmatmul.mubr.f32.gmra.mrb[0].mxu0 %v2256
    %v2324 = vpop.f32.mrb[0].mxu0
    %v2325 = vadd.f32 0.0, %v2324
    %v2326 = vpop.f32.mrb[0].mxu0
    %2327 = vdwg.mxu0
    %v2328 = vrot.slane %v1432, 1
    %v2330 = vrot.slane %v1635, 7
    %v2332 = vrot.slane %v1736, 6
    %v2334 = vrot.slane %v1835, 5
    %v2336 = vrot.slane %v1937, 4
    %v2338 = vrot.slane %v2038, 3
    %v2340 = vrot.slane %v2139, 2
    %v2342 = vsel %vm1046, %v2328, %v1534
    %v2343 = vsel %vm1048, %v2342, %v2330
    %v2344 = vsel %vm1050, %v2343, %v2332
    %v2345 = vsel %vm1052, %v2344, %v2334
    %v2346 = vsel %vm1054, %v2345, %v2336
    %v2347 = vsel %vm1056, %v2346, %v2338
    %v2348 = vsel %vm1058, %v2347, %v2340
    %2350 = vrot.lane.b32.xlu0 %v2348, 32
    %v2351 = vpop.permute.xlu0 %2350
    %2353 = vrot.lane.b32.xlu0 %v1123, 32
    %v2354 = vpop.permute.xlu0 %2353
    %v2355 = vsel %vm226, %v2351, 0
    %v2357 = vsel %vm226, %v2354, 0
    %2359 = vmatprep.subr.mxu0 0.0
    %2360 = vmatpush1.xpose.msra.mxu0 %v2357
    %2361 = vmatprep.subr.mxu0 0.0
    %2362 = vmatpush1.xpose.msra.mxu0 0.0
    %2363 = vmatprep.subr.mxu0 0.0
    %2364 = vmatpush1.xpose.msra.mxu0 0.0
    %2365 = vmatprep.subr.mxu0 0.0
    %2366 = vmatpush1.xpose.msra.mxu0 0.0
    %2367 = vmatprep.subr.mxu0 0.0
    %2368 = vmatpush1.xpose.msra.mxu0 0.0
    %2369 = vmatprep.subr.mxu0 0.0
    %2370 = vmatpush1.xpose.msra.mxu0 0.0
    %2371 = vmatprep.subr.mxu0 0.0
    %2372 = vmatpush1.xpose.msra.mxu0 0.0
    %2373 = vmatprep.subr.mxu0 0.0
    %2374 = vmatpush1.xpose.msra.mxu0 0.0
    %2375 = vmatprep.subr.mxu0 0.0
    %2376 = vmatpush1.xpose.msra.mxu0 0.0
    %2377 = vmatprep.subr.mxu0 0.0
    %2378 = vmatpush1.xpose.msra.mxu0 0.0
    %2379 = vmatprep.subr.mxu0 0.0
    %2380 = vmatpush1.xpose.msra.mxu0 0.0
    %2381 = vmatprep.subr.mxu0 0.0
    %2382 = vmatpush1.xpose.msra.mxu0 0.0
    %2383 = vmatprep.subr.mxu0 0.0
    %2384 = vmatpush1.xpose.msra.mxu0 0.0
    %2385 = vmatprep.subr.mxu0 0.0
    %2386 = vmatpush1.xpose.msra.mxu0 0.0
    %2387 = vmatprep.subr.mxu0 0.0
    %2388 = vmatpush1.xpose.msra.mxu0 0.0
    %2389 = vmatprep.subr.mxu0 0.0
    %2390 = vmatpush1.xpose.msra.mxu0 0.0
    %2391 = vmatprep.subr.mxu0 0.0
    %2392 = vmatpush1.xpose.msra.mxu0 0.0
    %2393 = vmatprep.subr.mxu0 0.0
    %2394 = vmatpush1.xpose.msra.mxu0 0.0
    %2395 = vmatprep.subr.mxu0 0.0
    %2396 = vmatpush1.xpose.msra.mxu0 0.0
    %2397 = vmatprep.subr.mxu0 0.0
    %2398 = vmatpush1.xpose.msra.mxu0 0.0
    %2399 = vmatprep.subr.mxu0 0.0
    %2400 = vmatpush1.xpose.msra.mxu0 0.0
    %2401 = vmatprep.subr.mxu0 0.0
    %2402 = vmatpush1.xpose.msra.mxu0 0.0
    %2403 = vmatprep.subr.mxu0 0.0
    %2404 = vmatpush1.xpose.msra.mxu0 0.0
    %2405 = vmatprep.subr.mxu0 0.0
    %2406 = vmatpush1.xpose.msra.mxu0 0.0
    %2407 = vmatprep.subr.mxu0 0.0
    %2408 = vmatpush1.xpose.msra.mxu0 0.0
    %2409 = vmatprep.subr.mxu0 0.0
    %2410 = vmatpush1.xpose.msra.mxu0 0.0
    %2411 = vmatprep.subr.mxu0 0.0
    %2412 = vmatpush1.xpose.msra.mxu0 0.0
    %2413 = vmatprep.subr.mxu0 0.0
    %2414 = vmatpush1.xpose.msra.mxu0 0.0
    %2415 = vmatprep.subr.mxu0 0.0
    %2416 = vmatpush1.xpose.msra.mxu0 0.0
    %2417 = vmatprep.subr.mxu0 0.0
    %2418 = vmatpush1.xpose.msra.mxu0 0.0
    %2419 = vmatprep.subr.mxu0 0.0
    %2420 = vmatpush1.xpose.msra.mxu0 0.0
    %2421 = vmatprep.subr.mxu0 0.0
    %2422 = vmatpush1.xpose.msra.mxu0 0.0
    %2423 = vmatprep.mubr.f32.mxu0 0.0
    %2424 = vmatmul.mubr.f32.gmra.mrb[0].mxu0 %v2355
    %v2425 = vpop.f32.mrb[0].mxu0
    %v2426 = vadd.f32 0.0, %v2425
    %v2427 = vpop.f32.mrb[0].mxu0
    %2428 = vdwg.mxu0
    %v2429 = vsel %vm2242, %v2426, -inf
    %2430 = vmax.xlane.f32.xlu0 %v2429
    %v2431 = vpop.xlane.xlu0 %2430
    %v2432 = vsub.f32 %v2426, %v2431
    %v2433 = vmul.f32 %v2432, 1.442695
    %v2434 = vpow.pop %v2433
    %v2435 = vsel %vm2242, %v2434, 0.0
    %2436 = vadd.xlane.f32.xlu0 %v2435
    %v2437 = vpop.xlane.xlu0 %2436
    %v2438 = vrcp.pop %v2437
    %v2439 = vmul.f32 %v2434, %v2438
    %v2442 = vsel %vm2242, %v2439, 0
    %2444 = vmatprep.subr.mxu0 0.0
    %2445 = vmatpush1.msra.mxu0 %v2354
    %2446 = vmatprep.subr.mxu0 0.0
    %2447 = vmatpush1.msra.mxu0 0.0
    %2448 = vmatprep.subr.mxu0 0.0
    %2449 = vmatpush1.msra.mxu0 0.0
    %2450 = vmatprep.subr.mxu0 0.0
    %2451 = vmatpush1.msra.mxu0 0.0
    %2452 = vmatprep.subr.mxu0 0.0
    %2453 = vmatpush1.msra.mxu0 0.0
    %2454 = vmatprep.subr.mxu0 0.0
    %2455 = vmatpush1.msra.mxu0 0.0
    %2456 = vmatprep.subr.mxu0 0.0
    %2457 = vmatpush1.msra.mxu0 0.0
    %2458 = vmatprep.subr.mxu0 0.0
    %2459 = vmatpush1.msra.mxu0 0.0
    %2460 = vmatprep.subr.mxu0 0.0
    %2461 = vmatpush1.msra.mxu0 0.0
    %2462 = vmatprep.subr.mxu0 0.0
    %2463 = vmatpush1.msra.mxu0 0.0
    %2464 = vmatprep.subr.mxu0 0.0
    %2465 = vmatpush1.msra.mxu0 0.0
    %2466 = vmatprep.subr.mxu0 0.0
    %2467 = vmatpush1.msra.mxu0 0.0
    %2468 = vmatprep.subr.mxu0 0.0
    %2469 = vmatpush1.msra.mxu0 0.0
    %2470 = vmatprep.subr.mxu0 0.0
    %2471 = vmatpush1.msra.mxu0 0.0
    %2472 = vmatprep.subr.mxu0 0.0
    %2473 = vmatpush1.msra.mxu0 0.0
    %2474 = vmatprep.subr.mxu0 0.0
    %2475 = vmatpush1.msra.mxu0 0.0
    %2476 = vmatprep.subr.mxu0 0.0
    %2477 = vmatpush1.msra.mxu0 0.0
    %2478 = vmatprep.subr.mxu0 0.0
    %2479 = vmatpush1.msra.mxu0 0.0
    %2480 = vmatprep.subr.mxu0 0.0
    %2481 = vmatpush1.msra.mxu0 0.0
    %2482 = vmatprep.subr.mxu0 0.0
    %2483 = vmatpush1.msra.mxu0 0.0
    %2484 = vmatprep.subr.mxu0 0.0
    %2485 = vmatpush1.msra.mxu0 0.0
    %2486 = vmatprep.subr.mxu0 0.0
    %2487 = vmatpush1.msra.mxu0 0.0
    %2488 = vmatprep.subr.mxu0 0.0
    %2489 = vmatpush1.msra.mxu0 0.0
    %2490 = vmatprep.subr.mxu0 0.0
    %2491 = vmatpush1.msra.mxu0 0.0
    %2492 = vmatprep.subr.mxu0 0.0
    %2493 = vmatpush1.msra.mxu0 0.0
    %2494 = vmatprep.subr.mxu0 0.0
    %2495 = vmatpush1.msra.mxu0 0.0
    %2496 = vmatprep.subr.mxu0 0.0
    %2497 = vmatpush1.msra.mxu0 0.0
    %2498 = vmatprep.subr.mxu0 0.0
    %2499 = vmatpush1.msra.mxu0 0.0
    %2500 = vmatprep.subr.mxu0 0.0
    %2501 = vmatpush1.msra.mxu0 0.0
    %2502 = vmatprep.subr.mxu0 0.0
    %2503 = vmatpush1.msra.mxu0 0.0
    %2504 = vmatprep.subr.mxu0 0.0
    %2505 = vmatpush1.msra.mxu0 0.0
    %2506 = vmatprep.subr.mxu0 0.0
    %2507 = vmatpush1.msra.mxu0 0.0
    %2508 = vmatprep.mubr.f32.mxu0 0.0
    %2509 = vmatmul.mubr.f32.gmra.mrb[0].mxu0 %v2442
    %v2510 = vpop.f32.mrb[0].mxu0
    %v2511 = vadd.f32 0.0, %v2510
    %v2512 = vpop.f32.mrb[0].mxu0
    %2513 = vdwg.mxu0
    %2514 = vrot.lane.b32.xlu0 %v2161, 64
    %v2515 = vpop.permute.xlu0 %2514
    %2516 = vrot.lane.b32.xlu0 %v2348, 64
    %v2517 = vpop.permute.xlu0 %2516
    %v2520 = vsel %vm226, %v2325, %v2515
    %v2521 = vsel %vm226, %v2511, %v2517
    %v2522 = vld [vmem:[#allocation2 + $0xa0] sm:$0xff]
    %v2523 = vld [vmem:[#allocation2 + $0xa8] sm:$0xff]
    %v2524 = vld [vmem:[#allocation2 + $0xb0] sm:$0xff]
    %v2525 = vld [vmem:[#allocation2 + $0xb8] sm:$0xff]
    %v2526 = vld [vmem:[#allocation2 + $0xc0] sm:$0xff]
    %v2527 = vld [vmem:[#allocation2 + $0xc8] sm:$0xff]
    %v2528 = vld [vmem:[#allocation2 + $0xd0] sm:$0xff]
    %v2529 = vld [vmem:[#allocation2 + $0xd8] sm:$0xff]
    %vm2530 = vcmask 523264
    %v2532 = vsel %vm2530, %v2520, 0
    %v2535 = vsel %vm2530, %v2521, 0
    %2537 = vmatprep.subr.mxu0 0.0
    %2538 = vmatpush1.msra.mxu0 %v2522
    %2539 = vmatprep.subr.mxu0 0.0
    %2540 = vmatpush1.msra.mxu0 %v2523
    %2541 = vmatprep.subr.mxu0 0.0
    %2542 = vmatpush1.msra.mxu0 %v2524
    %2543 = vmatprep.subr.mxu0 0.0
    %2544 = vmatpush1.msra.mxu0 %v2525
    %2545 = vmatprep.subr.mxu0 0.0
    %2546 = vmatpush1.msra.mxu0 %v2526
    %2547 = vmatprep.subr.mxu0 0.0
    %2548 = vmatpush1.msra.mxu0 %v2527
    %2549 = vmatprep.subr.mxu0 0.0
    %2550 = vmatpush1.msra.mxu0 %v2528
    %2551 = vmatprep.subr.mxu0 0.0
    %2552 = vmatpush1.msra.mxu0 %v2529
    %2553 = vmatprep.subr.mxu0 0.0
    %2554 = vmatpush1.msra.mxu0 0.0
    %2555 = vmatprep.subr.mxu0 0.0
    %2556 = vmatpush1.msra.mxu0 0.0
    %2557 = vmatprep.subr.mxu0 0.0
    %2558 = vmatpush1.msra.mxu0 0.0
    %2559 = vmatprep.subr.mxu0 0.0
    %2560 = vmatpush1.msra.mxu0 0.0
    %2561 = vmatprep.subr.mxu0 0.0
    %2562 = vmatpush1.msra.mxu0 0.0
    %2563 = vmatprep.subr.mxu0 0.0
    %2564 = vmatpush1.msra.mxu0 0.0
    %2565 = vmatprep.subr.mxu0 0.0
    %2566 = vmatpush1.msra.mxu0 0.0
    %2567 = vmatprep.subr.mxu0 0.0
    %2568 = vmatpush1.msra.mxu0 0.0
    %2569 = vmatprep.subr.mxu0 0.0
    %2570 = vmatpush1.msra.mxu0 0.0
    %2571 = vmatprep.subr.mxu0 0.0
    %2572 = vmatpush1.msra.mxu0 0.0
    %2573 = vmatprep.subr.mxu0 0.0
    %2574 = vmatpush1.msra.mxu0 0.0
    %2575 = vmatprep.subr.mxu0 0.0
    %2576 = vmatpush1.msra.mxu0 0.0
    %2577 = vmatprep.subr.mxu0 0.0
    %2578 = vmatpush1.msra.mxu0 0.0
    %2579 = vmatprep.subr.mxu0 0.0
    %2580 = vmatpush1.msra.mxu0 0.0
    %2581 = vmatprep.subr.mxu0 0.0
    %2582 = vmatpush1.msra.mxu0 0.0
    %2583 = vmatprep.subr.mxu0 0.0
    %2584 = vmatpush1.msra.mxu0 0.0
    %2585 = vmatprep.subr.mxu0 0.0
    %2586 = vmatpush1.msra.mxu0 0.0
    %2587 = vmatprep.subr.mxu0 0.0
    %2588 = vmatpush1.msra.mxu0 0.0
    %2589 = vmatprep.subr.mxu0 0.0
    %2590 = vmatpush1.msra.mxu0 0.0
    %2591 = vmatprep.subr.mxu0 0.0
    %2592 = vmatpush1.msra.mxu0 0.0
    %2593 = vmatprep.subr.mxu0 0.0
    %2594 = vmatpush1.msra.mxu0 0.0
    %2595 = vmatprep.subr.mxu0 0.0
    %2596 = vmatpush1.msra.mxu0 0.0
    %2597 = vmatprep.subr.mxu0 0.0
    %2598 = vmatpush1.msra.mxu0 0.0
    %2599 = vmatprep.subr.mxu0 0.0
    %2600 = vmatpush1.msra.mxu0 0.0
    %2601 = vmatprep.mubr.f32.mxu0 0.0
    %2602 = vmatmul.mubr.f32.gmra.mrb[0].mxu0 %v2532
    %v2603 = vpop.f32.mrb[0].mxu0
    %v2604 = vadd.f32 0.0, %v2603
    %v2605 = vpop.f32.mrb[0].mxu0
    %2606 = vmatprep.mubr.f32.mxu0 0.0
    %2607 = vmatmul.mubr.f32.gmra.mrb[0].mxu0 %v2535
    %v2608 = vpop.f32.mrb[0].mxu0
    %v2609 = vadd.f32 0.0, %v2608
    %v2610 = vpop.f32.mrb[0].mxu0
    %2611 = vdwg.mxu0
    %2612 = vrot.lane.b32.xlu0 %v1227, 64
    %v2613 = vpop.permute.xlu0 %2612
    %v2615 = vadd.f32 %v2604, %v2613
    %v2616 = vadd.f32 %v2609, %v2613
    %v2617 = vtanh.pop %v2615
    %v2618 = vtanh.pop %v2616
    %v2619 = vld [vmem:[#allocation2 + $0xe0] sm:$0xff]
    %v2620 = vld [vmem:[#allocation2 + $0xe8] sm:$0xff]
    %v2621 = vld [vmem:[#allocation2 + $0xf0] sm:$0xff]
    %v2622 = vld [vmem:[#allocation2 + $0xf8] sm:$0xff]
    %v2623 = vlaneseq
    %v2624 = vshrl.u32 %v2623, 7
    %v2625 = vsub.s32 1, %v2624
    %v2626 = vrot.slane %v1144, %v2625
    %v2628 = vsel %vm226, %v2617, 0
    %v2631 = vsel %vm226, %v2618, 0
    %2633 = vmatprep.subr.mxu0 0.0
    %2634 = vmatpush1.msra.mxu0 %v2619
    %2635 = vmatprep.subr.mxu0 0.0
    %2636 = vmatpush1.msra.mxu0 %v2620
    %2637 = vmatprep.subr.mxu0 0.0
    %2638 = vmatpush1.msra.mxu0 %v2621
    %2639 = vmatprep.subr.mxu0 0.0
    %2640 = vmatpush1.msra.mxu0 %v2622
    %2641 = vmatprep.subr.mxu0 0.0
    %2642 = vmatpush1.msra.mxu0 0.0
    %2643 = vmatprep.subr.mxu0 0.0
    %2644 = vmatpush1.msra.mxu0 0.0
    %2645 = vmatprep.subr.mxu0 0.0
    %2646 = vmatpush1.msra.mxu0 0.0
    %2647 = vmatprep.subr.mxu0 0.0
    %2648 = vmatpush1.msra.mxu0 0.0
    %2649 = vmatprep.subr.mxu0 0.0
    %2650 = vmatpush1.msra.mxu0 0.0
    %2651 = vmatprep.subr.mxu0 0.0
    %2652 = vmatpush1.msra.mxu0 0.0
    %2653 = vmatprep.subr.mxu0 0.0
    %2654 = vmatpush1.msra.mxu0 0.0
    %2655 = vmatprep.subr.mxu0 0.0
    %2656 = vmatpush1.msra.mxu0 0.0
    %2657 = vmatprep.subr.mxu0 0.0
    %2658 = vmatpush1.msra.mxu0 0.0
    %2659 = vmatprep.subr.mxu0 0.0
    %2660 = vmatpush1.msra.mxu0 0.0
    %2661 = vmatprep.subr.mxu0 0.0
    %2662 = vmatpush1.msra.mxu0 0.0
    %2663 = vmatprep.subr.mxu0 0.0
    %2664 = vmatpush1.msra.mxu0 0.0
    %2665 = vmatprep.subr.mxu0 0.0
    %2666 = vmatpush1.msra.mxu0 0.0
    %2667 = vmatprep.subr.mxu0 0.0
    %2668 = vmatpush1.msra.mxu0 0.0
    %2669 = vmatprep.subr.mxu0 0.0
    %2670 = vmatpush1.msra.mxu0 0.0
    %2671 = vmatprep.subr.mxu0 0.0
    %2672 = vmatpush1.msra.mxu0 0.0
    %2673 = vmatprep.subr.mxu0 0.0
    %2674 = vmatpush1.msra.mxu0 0.0
    %2675 = vmatprep.subr.mxu0 0.0
    %2676 = vmatpush1.msra.mxu0 0.0
    %2677 = vmatprep.subr.mxu0 0.0
    %2678 = vmatpush1.msra.mxu0 0.0
    %2679 = vmatprep.subr.mxu0 0.0
    %2680 = vmatpush1.msra.mxu0 0.0
    %2681 = vmatprep.subr.mxu0 0.0
    %2682 = vmatpush1.msra.mxu0 0.0
    %2683 = vmatprep.subr.mxu0 0.0
    %2684 = vmatpush1.msra.mxu0 0.0
    %2685 = vmatprep.subr.mxu0 0.0
    %2686 = vmatpush1.msra.mxu0 0.0
    %2687 = vmatprep.subr.mxu0 0.0
    %2688 = vmatpush1.msra.mxu0 0.0
    %2689 = vmatprep.subr.mxu0 0.0
    %2690 = vmatpush1.msra.mxu0 0.0
    %2691 = vmatprep.subr.mxu0 0.0
    %2692 = vmatpush1.msra.mxu0 0.0
    %2693 = vmatprep.subr.mxu0 0.0
    %2694 = vmatpush1.msra.mxu0 0.0
    %2695 = vmatprep.subr.mxu0 0.0
    %2696 = vmatpush1.msra.mxu0 0.0
    %2697 = vmatprep.mubr.f32.mxu0 0.0
    %2698 = vmatmul.mubr.f32.gmra.mrb[0].mxu0 %v2628
    %v2699 = vpop.f32.mrb[0].mxu0
    %v2700 = vadd.f32 %v2626, %v2699
    %v2701 = vpop.f32.mrb[0].mxu0
    %2702 = vmatprep.mubr.f32.mxu0 0.0
    %2703 = vmatmul.mubr.f32.gmra.mrb[0].mxu0 %v2631
    %v2704 = vpop.f32.mrb[0].mxu0
    %v2705 = vadd.f32 %v2626, %v2704
    %v2706 = vpop.f32.mrb[0].mxu0
    %2707 = vdwg.mxu0
    %2708 = vmax.xlane.f32.xlu0 %v2700
    %v2709 = vpop.xlane.xlu0 %2708
    %2710 = vmax.xlane.f32.xlu0 %v2705
    %v2711 = vpop.xlane.xlu0 %2710
    %v2712 = vsub.f32 %v2700, %v2709
    %v2713 = vsub.f32 %v2705, %v2711
    %v2714 = vmul.f32 %v2712, 1.442695
    %v2715 = vpow.pop %v2714
    %v2716 = vmul.f32 %v2713, 1.442695
    %v2717 = vpow.pop %v2716
    %2718 = vadd.xlane.f32.xlu0 %v2715
    %v2719 = vpop.xlane.xlu0 %2718
    %2720 = vadd.xlane.f32.xlu0 %v2717
    %v2721 = vpop.xlane.xlu0 %2720
    %v2722 = vlog2.pop %v2719
    %v2723 = vmul.f32 %v2722, 0.6931472
    %v2724 = vlog2.pop %v2721
    %v2725 = vmul.f32 %v2724, 0.6931472
    %v2726 = vsub.f32 %v2712, %v2723
    %v2727 = vsub.f32 %v2713, %v2725
    %2728 = vmax.index.xlane.f32.xlu0 %v2726
    %v2729 = vpop.xlane.xlu0 %2728
    %2730 = vmax.index.xlane.f32.xlu0 %v2727
    %v2731 = vpop.xlane.xlu0 %2730
    %v2732 = vcvt.s32.f32 %v2729
    %v2733 = vcvt.s32.f32 %v2731
    %2735 = vset.pattern.permute.xlu0 0
    %2736 = vperm.xlu0 %2735, %v1331
    %v2737 = vpop.permute.xlu0 %2736
    %v2741 = vlaneseq
    %v2742 = vshrl.u32 %v2741, 7
    %v2743 = vsub.s32 %v30, %v2742
    %v2744 = vrot.slane %v2732, %v2743
    %v2745 = vlaneseq
    %v2746 = vshrl.u32 %v2745, 7
    %v2747 = vsub.s32 %v30, %v2746
    %v2748 = vrot.slane %v2733, %v2747
    %vm2749 = vcmask 1041409
    %v2750 = vsel %vm2749, %v2748, %v2744
    %v2752 = vsel %vm2242, %v2750, 0.0
    %v2754 = vrot.slane %v2752, 6
    %v2756 = vsel %vm1048, %v2737, %v2754
    %v2757 = vsel %vm1052, %v2756, 0.0
    %2758 = vst [vmem:[%s2] sm:$0xff] %v2726
    %2759 = vst [vmem:[%s2 + $0x8] sm:$0xff] %v2727
    %2760 = vst [vmem:[%s2 + $0x10] sm:$0xff] %v2757
    // Predicated region
    $region14: #{nao_forward.1} parent=1 // pred_check
      _
    $region15: #{nao_forward.1} parent=1 // pred_check_branch
      %2762 = sbr.rel (0) target = $region17
    $region16: #{nao_forward.1} parent=1 // pred_region
      _
    $region17: #{nao_forward.1} parent=1 // pred_fallthru
      _
    // Predicated region
    $region18: #{nao_forward.1} parent=1 // pred_check
      _
    $region19: #{nao_forward.1} parent=1 // pred_check_branch
      %2764 = sbr.rel (0) target = $region21
    $region20: #{nao_forward.1} parent=1 // pred_region
      _
    $region21: #{nao_forward.1} parent=1 // pred_fallthru
      _
    %2765 = vsyncpa [#allocation3], 1

</llo_original>
